<compile_context>
chip_gen: v7x
topology: tpu7x:2x2x1
jax: 0.10.0
libtpu: 0.0.40
codegen_flags: <defaults>
</compile_context>

<pallas_src>
import functools

import jax
import jax.numpy as jnp
from jax.experimental import pallas as pl
from jax.experimental.pallas import tpu as pltpu


# ----------------------------- Pallas kernel -------------------------------

def _fused_conv_layer_kernel(x_ref, w_ref, scale_ref, shift_ref, o_ref, acc_ref,
                             *, has_bn, eps):
    """Batched GEMM (R small) over K tiles + fused {BN(batch stats)+ReLU | bias}."""
    k = pl.program_id(0)

    @pl.when(k == 0)
    def _init():
        acc_ref[...] = jnp.zeros_like(acc_ref)

    R = acc_ref.shape[0]
    for r in range(R):                                  # static unroll, R in {1, 4}
        acc_ref[r, :, :] = acc_ref[r, :, :] + jnp.dot(
            x_ref[r, :, :], w_ref[r, :, :], preferred_element_type=jnp.float32)

    @pl.when(k == pl.num_programs(0) - 1)
    def _epilogue():
        Rr, M, N = acc_ref.shape
        acc = acc_ref[...].reshape(Rr * M, N)           # f32
        if has_bn:
            inv_cnt = 1.0 / float(Rr * M)
            s1 = jnp.sum(acc, axis=0, keepdims=True)
            s2 = jnp.sum(acc * acc, axis=0, keepdims=True)
            mean = s1 * inv_cnt
            var = s2 * inv_cnt - mean * mean            # biased variance (PyTorch BN)
            y = (acc - mean) * (jax.lax.rsqrt(var + eps) * scale_ref[...]) \
                + shift_ref[...]
            y = jnp.maximum(y, 0.0)
        else:
            y = acc + shift_ref[...]                    # shift == conv bias here
        o_ref[...] = y.reshape(Rr, M, N).astype(o_ref.dtype)


def fused_conv_layer(cols, wmat, scale, shift, *, has_bn, eps, out_dtype):
    """cols: (R, M, Kp) bf16, wmat: (R, Kp, Np) bf16, scale/shift: (1, Np) f32."""
    R, M, Kp = cols.shape
    Np = wmat.shape[2]
    KT = Kp if Kp <= 512 else 256
    nk = Kp // KT
    kernel = functools.partial(_fused_conv_layer_kernel, has_bn=has_bn, eps=eps)
    return pl.pallas_call(
        kernel,
        out_shape=jax.ShapeDtypeStruct((R, M, Np), out_dtype),
        grid=(nk,),
        in_specs=[
            pl.BlockSpec((R, M, KT), lambda k: (0, 0, k)),
            pl.BlockSpec((R, KT, Np), lambda k: (0, k, 0)),
            pl.BlockSpec((1, Np), lambda k: (0, 0)),
            pl.BlockSpec((1, Np), lambda k: (0, 0)),
        ],
        out_specs=pl.BlockSpec((R, M, Np), lambda k: (0, 0, 0)),
        scratch_shapes=[pltpu.VMEM((R, M, Np), jnp.float32)],
        compiler_params=pltpu.CompilerParams(
            dimension_semantics=("arbitrary",),          # K is a reduction axis
            vmem_limit_bytes=32 * 1024 * 1024),
    )(cols, wmat, scale, shift)


# ------------------------------ static layout ------------------------------

def _round_up(x, m):
    return ((x + m - 1) // m) * m


def _pad_k(K):
    Kp = _round_up(K, 128)
    if Kp > 512:
        Kp = _round_up(K, 256)      # tiled with KT=256
    return Kp


def _layer_descs(opt):
    nf, n_in, n_out = opt['nfeature'], opt['n_in'], opt['n_out']
    k0 = 3 if opt['task'] in ('breakout', 'seaquest') else 4
    return [
        dict(name='enc0', kind='conv',   k=7,  s=2, p=3, bn=True,  c_in=n_in, c_out=nf),
        dict(name='enc1', kind='conv',   k=5,  s=2, p=2, bn=True,  c_in=nf,   c_out=nf),
        dict(name='enc2', kind='conv',   k=5,  s=2, p=2, bn=True,  c_in=nf,   c_out=nf),
        dict(name='dec0', kind='deconv', k=k0, s=2, p=1, bn=True,  c_in=nf,   c_out=nf),
        dict(name='dec1', kind='deconv', k=4,  s=2, p=1, bn=True,  c_in=nf,   c_out=nf),
        dict(name='dec2', kind='deconv', k=4,  s=2, p=1, bn=False, c_in=nf,   c_out=n_out),
    ]


def _residue_taps(k, s, p):
    """Per output residue r: kernel taps (ki, dy) with input row = my + dy."""
    return [[(ki, (r + p - ki) // s) for ki in range(k) if (r + p - ki) % s == 0]
            for r in range(s)]


def _subpixel_ok(k, s, p):
    taps = _residue_taps(k, s, p)
    counts = {len(t) for t in taps}
    ok = (len(counts) == 1) and (0 not in counts) and ((k - 2 * p) % s == 0)
    return ok, taps


def _subpixel_wmat(w_iohw, k, s, p, taps):
    """ConvTranspose2d weight (C_in, C_out, k, k) -> per-residue (R, T*C_in, C_out)."""
    c_out = w_iohw.shape[1]
    mats = []
    for ry in range(s):
        for rx in range(s):
            rows = [w_iohw[:, :, ki, kj]
                    for (ki, _dy) in taps[ry] for (kj, _dx) in taps[rx]]
            mats.append(jnp.stack(rows, axis=0).reshape(-1, c_out))
    return jnp.stack(mats, axis=0)


def prepare_params(params, opt):
    """Hoisted weight prep: GEMM-ready (R, Kp, Np) bf16 weights + f32 scale/shift."""
    prep = {}
    for d in _layer_descs(opt):
        w, b, g, be = params[d['name']]
        c_out = d['c_out']
        if d['kind'] == 'conv':
            wm = jnp.transpose(w, (2, 3, 1, 0)).reshape(-1, c_out)[None]
        else:
            ok, taps = _subpixel_ok(d['k'], d['s'], d['p'])
            if ok:
                wm = _subpixel_wmat(w, d['k'], d['s'], d['p'], taps)
            else:
                # zero-dilation fallback: stride-1 conv with flipped, io-swapped kernel
                w_conv = jnp.transpose(w, (1, 0, 2, 3))[:, :, ::-1, ::-1]
                wm = jnp.transpose(w_conv, (2, 3, 1, 0)).reshape(-1, c_out)[None]
        K = wm.shape[1]
        Kp = _pad_k(K)
        Np = _round_up(c_out, 128)
        wm = jnp.pad(wm, ((0, 0), (0, Kp - K), (0, Np - c_out))).astype(jnp.bfloat16)
        if d['bn']:
            scale = jnp.pad(g.reshape(1, -1).astype(jnp.float32),
                            ((0, 0), (0, Np - c_out)))
            shift = jnp.pad(be.reshape(1, -1).astype(jnp.float32),
                            ((0, 0), (0, Np - c_out)))
        else:
            scale = jnp.ones((1, Np), jnp.float32)           # unused by kernel
            shift = jnp.pad(b.reshape(1, -1).astype(jnp.float32),
                            ((0, 0), (0, Np - c_out)))
        prep[d['name']] = (wm, scale, shift)
    return prep


# ------------------------------- activation glue ---------------------------

def _im2col(x, kh, kw, stride, pad):
    x = jnp.pad(x, ((0, 0), (pad, pad), (pad, pad), (0, 0)))
    B, H, W, C = x.shape
    Ho = (H - kh) // stride + 1
    Wo = (W - kw) // stride + 1
    patches = [x[:, i:i + stride * Ho:stride, j:j + stride * Wo:stride, :]
               for i in range(kh) for j in range(kw)]
    cols = jnp.stack(patches, axis=3).reshape(B * Ho * Wo, kh * kw * C)
    return cols, (B, Ho, Wo)


def _subpixel_cols(x, k, s, p, taps):
    """Per-residue im2col on the UNDILATED input (only non-zero taps)."""
    B, H, W, C = x.shape
    Ho = (H - 1) * s - 2 * p + k
    Wo = (W - 1) * s - 2 * p + k
    Mh, Mw = Ho // s, Wo // s
    dys = [d for t in taps for _, d in t]
    lo = max(0, -min(dys))
    hi_y = max(0, (Mh - 1) + max(dys) - (H - 1))
    hi_x = max(0, (Mw - 1) + max(dys) - (W - 1))
    xp = jnp.pad(x, ((0, 0), (lo, hi_y), (lo, hi_x), (0, 0)))
    groups = []
    for ry in range(s):
        for rx in range(s):
            patches = [xp[:, lo + dy:lo + dy + Mh, lo + dx:lo + dx + Mw, :]
                       for (_ki, dy) in taps[ry] for (_kj, dx) in taps[rx]]
            groups.append(jnp.stack(patches, axis=3).reshape(B * Mh * Mw, -1))
    return jnp.stack(groups, axis=0), (B, Mh, Mw)


# ------------------------------ full forward -------------------------------

def baseline_model_3layer_forward(x_nchw, prep, *, opt):
    B = opt['batch_size']
    x = x_nchw.reshape(B, opt['n_in'], opt['height'], opt['width'])
    x = jnp.transpose(x, (0, 2, 3, 1)).astype(jnp.bfloat16)      # NHWC, bf16 for MXU

    descs = _layer_descs(opt)
    for li, d in enumerate(descs):
        wm, scale, shift = prep[d['name']]
        Kp = wm.shape[1]
        c_out = d['c_out']
        out_dtype = jnp.float32 if li == len(descs) - 1 else jnp.bfloat16

        subpix = False
        if d['kind'] == 'conv':
            cols, (Bc, Ho, Wo) = _im2col(x, d['k'], d['k'], d['s'], d['p'])
            cols = cols[None]
        else:
            ok, taps = _subpixel_ok(d['k'], d['s'], d['p'])
            if ok:
                subpix = True
                cols, (Bc, Mh, Mw) = _subpixel_cols(x, d['k'], d['s'], d['p'], taps)
            else:
                # TODO(synk): odd-phase transposed conv (k-2p not divisible by s):
                # exact zero-dilation fallback, ~s^2 wasted MXU FLOPs.
                Bc, H, W, C = x.shape
                s = d['s']
                xd = jnp.zeros((Bc, (H - 1) * s + 1, (W - 1) * s + 1, C), x.dtype)
                xd = xd.at[:, ::s, ::s, :].set(x)
                cols, (Bc, Ho, Wo) = _im2col(xd, d['k'], d['k'], 1,
                                             d['k'] - 1 - d['p'])
                cols = cols[None]

        cols = jnp.pad(cols, ((0, 0), (0, 0), (0, Kp - cols.shape[-1])))
        flat = fused_conv_layer(cols, wm, scale, shift,
                                has_bn=d['bn'], eps=1e-5, out_dtype=out_dtype)

        if subpix:
            s = d['s']
            y = flat[:, :, :c_out].reshape(s, s, Bc, Mh, Mw, c_out)
            x = y.transpose(2, 3, 0, 4, 1, 5).reshape(Bc, s * Mh, s * Mw, c_out)
        else:
            x = flat[0, :, :c_out].reshape(Bc, Ho, Wo, c_out)

    return jnp.transpose(x, (0, 3, 1, 2)).astype(jnp.float32)    # back to NCHW


# --------------------------------- params ----------------------------------

def init_params(opt, key):
    params = {}
    for d in _layer_descs(opt):
        key, k1, k2, k3, k4 = jax.random.split(key, 5)
        if d['kind'] == 'conv':
            wshape = (d['c_out'], d['c_in'], d['k'], d['k'])       # Conv2d layout
        else:
            wshape = (d['c_in'], d['c_out'], d['k'], d['k'])       # ConvTranspose2d
        c_out = d['c_out']
        w = 0.05 * jax.random.normal(k1, wshape, jnp.float32)
        b = 0.05 * jax.random.normal(k2, (c_out,), jnp.float32)
        g = 1.0 + 0.1 * jax.random.normal(k3, (1, c_out), jnp.float32)   # BN gamma
        be = 0.1 * jax.random.normal(k4, (1, c_out), jnp.float32)        # BN beta
        params[d['name']] = (w, b, g, be)
    return params


if __name__ == "__main__":
    opt = dict(batch_size=2, n_in=4, n_out=4, nfeature=32,
               height=16, width=16, task='poke')

    key = jax.random.PRNGKey(0)
    key, xk = jax.random.split(key)
    x = jax.random.normal(
        xk, (opt['batch_size'], opt['n_in'], opt['height'], opt['width']),
        jnp.float32)
    params = init_params(opt, key)
    prep = prepare_params(params, opt)     # weight layout hoisted out of forward

    fwd = jax.jit(functools.partial(baseline_model_3layer_forward, opt=opt))
    pred = jax.block_until_ready(fwd(x, prep))

    assert pred.shape == (opt['batch_size'], opt['n_out'],
                          opt['height'], opt['width']), pred.shape
    assert jnp.all(jnp.isfinite(pred))
    print("KERNEL_OK")
</pallas_src>

<mosaic_0001>
module attributes {stable_mosaic.version = 11 : i64} {
  func.func @_fused_conv_layer_kernel(%arg0: i32, %arg1: memref<1x128x256xbf16, #tpu.memory_space<vmem>>, %arg2: memref<1x256x128xbf16, #tpu.memory_space<vmem>>, %arg3: memref<1x128xf32, #tpu.memory_space<vmem>>, %arg4: memref<1x128xf32, #tpu.memory_space<vmem>>, %arg5: memref<1x128x128xbf16, #tpu.memory_space<vmem>>, %arg6: memref<1x128x128xf32, #tpu.memory_space<vmem>>) attributes {dimension_semantics = [#tpu.dimension_semantics<arbitrary>], iteration_bounds = array<i64: 1>, scalar_prefetch = 0 : i64, scratch_operands = 1 : i64, tpu.core_type = #tpu.core_type<tc>, window_params = [{transform_indices = @transform_0, window_bounds = array<i64: 1, 128, 256>}, {transform_indices = @transform_1, window_bounds = array<i64: 1, 256, 128>}, {pipeline_mode = #tpu.pipeline_mode<synchronous>, transform_indices = @transform_2, window_bounds = array<i64: 1, 128>}, {pipeline_mode = #tpu.pipeline_mode<synchronous>, transform_indices = @transform_3, window_bounds = array<i64: 1, 128>}, {pipeline_mode = #tpu.pipeline_mode<synchronous>, transform_indices = @transform_4, window_bounds = array<i64: 1, 128, 128>}]} {
    %c0_i32 = arith.constant 0 : i32
    %0 = arith.cmpi eq, %arg0, %c0_i32 : i32
    %1 = arith.extui %0 : i1 to i32
    %c0_i32_0 = arith.constant 0 : i32
    %2 = arith.cmpi ne, %1, %c0_i32_0 : i32
    scf.if %2 {
      %cst_14 = arith.constant 0.000000e+00 : f32
      %17 = vector.broadcast %cst_14 : f32 to vector<1x128x128xf32>
      %c0_15 = arith.constant 0 : index
      %c0_16 = arith.constant 0 : index
      %c0_17 = arith.constant 0 : index
      %18 = vector.load %arg6[%c0_15, %c0_16, %c0_17] : memref<1x128x128xf32, #tpu.memory_space<vmem>>, vector<1x128x128xf32>
      tpu.vector_store %arg6[%c0_15, %c0_16, %c0_17], %17 {strides = array<i32>} : memref<1x128x128xf32, #tpu.memory_space<vmem>>, vector<1x128x128xf32>,
    } else {
    }
    %c0 = arith.constant 0 : index
    %c0_1 = arith.constant 0 : index
    %c0_2 = arith.constant 0 : index
    %3 = vector.load %arg6[%c0, %c0_1, %c0_2] : memref<1x128x128xf32, #tpu.memory_space<vmem>>, vector<1x128x128xf32>
    %4 = vector.shape_cast %3 : vector<1x128x128xf32> to vector<128x128xf32>
    %c0_3 = arith.constant 0 : index
    %c0_4 = arith.constant 0 : index
    %c0_5 = arith.constant 0 : index
    %5 = vector.load %arg1[%c0_3, %c0_4, %c0_5] : memref<1x128x256xbf16, #tpu.memory_space<vmem>>, vector<1x128x256xbf16>
    %6 = vector.shape_cast %5 : vector<1x128x256xbf16> to vector<128x256xbf16>
    %c0_6 = arith.constant 0 : index
    %c0_7 = arith.constant 0 : index
    %c0_8 = arith.constant 0 : index
    %7 = vector.load %arg2[%c0_6, %c0_7, %c0_8] : memref<1x256x128xbf16, #tpu.memory_space<vmem>>, vector<1x256x128xbf16>
    %8 = vector.shape_cast %7 : vector<1x256x128xbf16> to vector<256x128xbf16>
    %cst = arith.constant dense<0.000000e+00> : vector<128x128xf32>
    %9 = tpu.matmul %6, %8, %cst {dimension_numbers = #tpu.dot_dimension_numbers<[1], [0], [0], [1], [0, 0, 1, 1], [], []>} : vector<128x256xbf16>, vector<256x128xbf16>, vector<128x128xf32> -> vector<128x128xf32>
    %10 = arith.addf %4, %9 : vector<128x128xf32>
    %c0_9 = arith.constant 0 : index
    %c0_10 = arith.constant 0 : index
    %c0_11 = arith.constant 0 : index
    %11 = vector.load %arg6[%c0_9, %c0_10, %c0_11] : memref<1x128x128xf32, #tpu.memory_space<vmem>>, vector<1x128x128xf32>
    %12 = vector.shape_cast %11 : vector<1x128x128xf32> to vector<128x128xf32>
    %13 = vector.shape_cast %10 : vector<128x128xf32> to vector<1x128x128xf32>
    tpu.vector_store %arg6[%c0_9, %c0_10, %c0_11], %13 {strides = array<i32>} : memref<1x128x128xf32, #tpu.memory_space<vmem>>, vector<1x128x128xf32>,
    %c0_i32_12 = arith.constant 0 : i32
    %14 = arith.cmpi eq, %arg0, %c0_i32_12 : i32
    %15 = arith.extui %14 : i1 to i32
    %c0_i32_13 = arith.constant 0 : i32
    %16 = arith.cmpi ne, %15, %c0_i32_13 : i32
    scf.if %16 {
      %c0_14 = arith.constant 0 : index
      %c0_15 = arith.constant 0 : index
      %c0_16 = arith.constant 0 : index
      %17 = vector.load %arg6[%c0_14, %c0_15, %c0_16] : memref<1x128x128xf32, #tpu.memory_space<vmem>>, vector<1x128x128xf32>
      %18 = vector.shape_cast %17 : vector<1x128x128xf32> to vector<128x128xf32>
      %cst_17 = arith.constant dense<0.000000e+00> : vector<128xf32>
      %19 = vector.multi_reduction <add>, %18, %cst_17 [0] : vector<128x128xf32> to vector<128xf32>
      %20 = vector.shape_cast %19 : vector<128xf32> to vector<1x128xf32>
      %21 = arith.mulf %18, %18 : vector<128x128xf32>
      %cst_18 = arith.constant dense<0.000000e+00> : vector<128xf32>
      %22 = vector.multi_reduction <add>, %21, %cst_18 [0] : vector<128x128xf32> to vector<128xf32>
      %23 = vector.shape_cast %22 : vector<128xf32> to vector<1x128xf32>
      %cst_19 = arith.constant 7.812500e-03 : f32
      %24 = vector.broadcast %cst_19 : f32 to vector<1x128xf32>
      %25 = arith.mulf %20, %24 : vector<1x128xf32>
      %cst_20 = arith.constant 7.812500e-03 : f32
      %26 = vector.broadcast %cst_20 : f32 to vector<1x128xf32>
      %27 = arith.mulf %23, %26 : vector<1x128xf32>
      %28 = arith.mulf %25, %25 : vector<1x128xf32>
      %29 = arith.subf %27, %28 : vector<1x128xf32>
      %30 = vector.broadcast %25 : vector<1x128xf32> to vector<128x128xf32>
      %31 = arith.subf %18, %30 : vector<128x128xf32>
      %cst_21 = arith.constant 9.99999974E-6 : f32
      %32 = vector.broadcast %cst_21 : f32 to vector<1x128xf32>
      %33 = arith.addf %29, %32 : vector<1x128xf32>
      %34 = math.rsqrt %33 : vector<1x128xf32>
      %c0_22 = arith.constant 0 : index
      %c0_23 = arith.constant 0 : index
      %35 = vector.load %arg3[%c0_22, %c0_23] : memref<1x128xf32, #tpu.memory_space<vmem>>, vector<1x128xf32>
      %36 = arith.mulf %34, %35 : vector<1x128xf32>
      %37 = vector.broadcast %36 : vector<1x128xf32> to vector<128x128xf32>
      %38 = arith.mulf %31, %37 : vector<128x128xf32>
      %c0_24 = arith.constant 0 : index
      %c0_25 = arith.constant 0 : index
      %39 = vector.load %arg4[%c0_24, %c0_25] : memref<1x128xf32, #tpu.memory_space<vmem>>, vector<1x128xf32>
      %40 = vector.broadcast %39 : vector<1x128xf32> to vector<128x128xf32>
      %41 = arith.addf %38, %40 : vector<128x128xf32>
      %cst_26 = arith.constant 0.000000e+00 : f32
      %42 = vector.broadcast %cst_26 : f32 to vector<128x128xf32>
      %43 = arith.maximumf %41, %42 : vector<128x128xf32>
      %44 = vector.shape_cast %43 : vector<128x128xf32> to vector<1x128x128xf32>
      %45 = arith.truncf %44 : vector<1x128x128xf32> to vector<1x128x128xbf16>
      %c0_27 = arith.constant 0 : index
      %c0_28 = arith.constant 0 : index
      %c0_29 = arith.constant 0 : index
      %46 = vector.load %arg5[%c0_27, %c0_28, %c0_29] : memref<1x128x128xbf16, #tpu.memory_space<vmem>>, vector<1x128x128xbf16>
      tpu.vector_store %arg5[%c0_27, %c0_28, %c0_29], %45 {strides = array<i32>} : memref<1x128x128xbf16, #tpu.memory_space<vmem>>, vector<1x128x128xbf16>,
    } else {
    }
    return
  }
  func.func @transform_0(%arg0: i32) -> (i32, i32, i32) {
    %c0_i32 = arith.constant 0 : i32
    %c0_i32_0 = arith.constant 0 : i32
    %c0_i32_1 = arith.constant 0 : i32
    return %c0_i32, %c0_i32_0, %arg0 : i32, i32, i32
  }
  func.func @transform_1(%arg0: i32) -> (i32, i32, i32) {
    %c0_i32 = arith.constant 0 : i32
    %c0_i32_0 = arith.constant 0 : i32
    %c0_i32_1 = arith.constant 0 : i32
    return %c0_i32, %arg0, %c0_i32_0 : i32, i32, i32
  }
  func.func @transform_2(%arg0: i32) -> (i32, i32) {
    %c0_i32 = arith.constant 0 : i32
    %c0_i32_0 = arith.constant 0 : i32
    %c0_i32_1 = arith.constant 0 : i32
    return %c0_i32, %c0_i32_0 : i32, i32
  }
  func.func @transform_3(%arg0: i32) -> (i32, i32) {
    %c0_i32 = arith.constant 0 : i32
    %c0_i32_0 = arith.constant 0 : i32
    %c0_i32_1 = arith.constant 0 : i32
    return %c0_i32, %c0_i32_0 : i32, i32
  }
  func.func @transform_4(%arg0: i32) -> (i32, i32, i32) {
    %c0_i32 = arith.constant 0 : i32
    %c0_i32_0 = arith.constant 0 : i32
    %c0_i32_1 = arith.constant 0 : i32
    %c0_i32_2 = arith.constant 0 : i32
    return %c0_i32, %c0_i32_0, %c0_i32_1 : i32, i32, i32
  }
}

module attributes {stable_mosaic.version = 11 : i64} {
  func.func @_fused_conv_layer_kernel(%arg0: i32, %arg1: memref<1x32x256xbf16, #tpu.memory_space<vmem>>, %arg2: memref<1x256x128xbf16, #tpu.memory_space<vmem>>, %arg3: memref<1x128xf32, #tpu.memory_space<vmem>>, %arg4: memref<1x128xf32, #tpu.memory_space<vmem>>, %arg5: memref<1x32x128xbf16, #tpu.memory_space<vmem>>, %arg6: memref<1x32x128xf32, #tpu.memory_space<vmem>>) attributes {dimension_semantics = [#tpu.dimension_semantics<arbitrary>], iteration_bounds = array<i64: 4>, scalar_prefetch = 0 : i64, scratch_operands = 1 : i64, tpu.core_type = #tpu.core_type<tc>, window_params = [{transform_indices = @transform_0, window_bounds = array<i64: 1, 32, 256>}, {transform_indices = @transform_1, window_bounds = array<i64: 1, 256, 128>}, {pipeline_mode = #tpu.pipeline_mode<synchronous>, transform_indices = @transform_2, window_bounds = array<i64: 1, 128>}, {pipeline_mode = #tpu.pipeline_mode<synchronous>, transform_indices = @transform_3, window_bounds = array<i64: 1, 128>}, {pipeline_mode = #tpu.pipeline_mode<synchronous>, transform_indices = @transform_4, window_bounds = array<i64: 1, 32, 128>}]} {
    %c0_i32 = arith.constant 0 : i32
    %0 = arith.cmpi eq, %arg0, %c0_i32 : i32
    %1 = arith.extui %0 : i1 to i32
    %c0_i32_0 = arith.constant 0 : i32
    %2 = arith.cmpi ne, %1, %c0_i32_0 : i32
    scf.if %2 {
      %cst_13 = arith.constant 0.000000e+00 : f32
      %17 = vector.broadcast %cst_13 : f32 to vector<1x32x128xf32>
      %c0_14 = arith.constant 0 : index
      %c0_15 = arith.constant 0 : index
      %c0_16 = arith.constant 0 : index
      %18 = vector.load %arg6[%c0_14, %c0_15, %c0_16] : memref<1x32x128xf32, #tpu.memory_space<vmem>>, vector<1x32x128xf32>
      tpu.vector_store %arg6[%c0_14, %c0_15, %c0_16], %17 {strides = array<i32>} : memref<1x32x128xf32, #tpu.memory_space<vmem>>, vector<1x32x128xf32>,
    } else {
    }
    %c0 = arith.constant 0 : index
    %c0_1 = arith.constant 0 : index
    %c0_2 = arith.constant 0 : index
    %3 = vector.load %arg6[%c0, %c0_1, %c0_2] : memref<1x32x128xf32, #tpu.memory_space<vmem>>, vector<1x32x128xf32>
    %4 = vector.shape_cast %3 : vector<1x32x128xf32> to vector<32x128xf32>
    %c0_3 = arith.constant 0 : index
    %c0_4 = arith.constant 0 : index
    %c0_5 = arith.constant 0 : index
    %5 = vector.load %arg1[%c0_3, %c0_4, %c0_5] : memref<1x32x256xbf16, #tpu.memory_space<vmem>>, vector<1x32x256xbf16>
    %6 = vector.shape_cast %5 : vector<1x32x256xbf16> to vector<32x256xbf16>
    %c0_6 = arith.constant 0 : index
    %c0_7 = arith.constant 0 : index
    %c0_8 = arith.constant 0 : index
    %7 = vector.load %arg2[%c0_6, %c0_7, %c0_8] : memref<1x256x128xbf16, #tpu.memory_space<vmem>>, vector<1x256x128xbf16>
    %8 = vector.shape_cast %7 : vector<1x256x128xbf16> to vector<256x128xbf16>
    %cst = arith.constant dense<0.000000e+00> : vector<32x128xf32>
    %9 = tpu.matmul %6, %8, %cst {dimension_numbers = #tpu.dot_dimension_numbers<[1], [0], [0], [1], [0, 0, 1, 1], [], []>} : vector<32x256xbf16>, vector<256x128xbf16>, vector<32x128xf32> -> vector<32x128xf32>
    %10 = arith.addf %4, %9 : vector<32x128xf32>
    %c0_9 = arith.constant 0 : index
    %c0_10 = arith.constant 0 : index
    %c0_11 = arith.constant 0 : index
    %11 = vector.load %arg6[%c0_9, %c0_10, %c0_11] : memref<1x32x128xf32, #tpu.memory_space<vmem>>, vector<1x32x128xf32>
    %12 = vector.shape_cast %11 : vector<1x32x128xf32> to vector<32x128xf32>
    %13 = vector.shape_cast %10 : vector<32x128xf32> to vector<1x32x128xf32>
    tpu.vector_store %arg6[%c0_9, %c0_10, %c0_11], %13 {strides = array<i32>} : memref<1x32x128xf32, #tpu.memory_space<vmem>>, vector<1x32x128xf32>,
    %c3_i32 = arith.constant 3 : i32
    %14 = arith.cmpi eq, %arg0, %c3_i32 : i32
    %15 = arith.extui %14 : i1 to i32
    %c0_i32_12 = arith.constant 0 : i32
    %16 = arith.cmpi ne, %15, %c0_i32_12 : i32
    scf.if %16 {
      %c0_13 = arith.constant 0 : index
      %c0_14 = arith.constant 0 : index
      %c0_15 = arith.constant 0 : index
      %17 = vector.load %arg6[%c0_13, %c0_14, %c0_15] : memref<1x32x128xf32, #tpu.memory_space<vmem>>, vector<1x32x128xf32>
      %18 = vector.shape_cast %17 : vector<1x32x128xf32> to vector<32x128xf32>
      %cst_16 = arith.constant dense<0.000000e+00> : vector<128xf32>
      %19 = vector.multi_reduction <add>, %18, %cst_16 [0] : vector<32x128xf32> to vector<128xf32>
      %20 = vector.shape_cast %19 : vector<128xf32> to vector<1x128xf32>
      %21 = arith.mulf %18, %18 : vector<32x128xf32>
      %cst_17 = arith.constant dense<0.000000e+00> : vector<128xf32>
      %22 = vector.multi_reduction <add>, %21, %cst_17 [0] : vector<32x128xf32> to vector<128xf32>
      %23 = vector.shape_cast %22 : vector<128xf32> to vector<1x128xf32>
      %cst_18 = arith.constant 3.125000e-02 : f32
      %24 = vector.broadcast %cst_18 : f32 to vector<1x128xf32>
      %25 = arith.mulf %20, %24 : vector<1x128xf32>
      %cst_19 = arith.constant 3.125000e-02 : f32
      %26 = vector.broadcast %cst_19 : f32 to vector<1x128xf32>
      %27 = arith.mulf %23, %26 : vector<1x128xf32>
      %28 = arith.mulf %25, %25 : vector<1x128xf32>
      %29 = arith.subf %27, %28 : vector<1x128xf32>
      %30 = vector.broadcast %25 : vector<1x128xf32> to vector<32x128xf32>
      %31 = arith.subf %18, %30 : vector<32x128xf32>
      %cst_20 = arith.constant 9.99999974E-6 : f32
      %32 = vector.broadcast %cst_20 : f32 to vector<1x128xf32>
      %33 = arith.addf %29, %32 : vector<1x128xf32>
      %34 = math.rsqrt %33 : vector<1x128xf32>
      %c0_21 = arith.constant 0 : index
      %c0_22 = arith.constant 0 : index
      %35 = vector.load %arg3[%c0_21, %c0_22] : memref<1x128xf32, #tpu.memory_space<vmem>>, vector<1x128xf32>
      %36 = arith.mulf %34, %35 : vector<1x128xf32>
      %37 = vector.broadcast %36 : vector<1x128xf32> to vector<32x128xf32>
      %38 = arith.mulf %31, %37 : vector<32x128xf32>
      %c0_23 = arith.constant 0 : index
      %c0_24 = arith.constant 0 : index
      %39 = vector.load %arg4[%c0_23, %c0_24] : memref<1x128xf32, #tpu.memory_space<vmem>>, vector<1x128xf32>
      %40 = vector.broadcast %39 : vector<1x128xf32> to vector<32x128xf32>
      %41 = arith.addf %38, %40 : vector<32x128xf32>
      %cst_25 = arith.constant 0.000000e+00 : f32
      %42 = vector.broadcast %cst_25 : f32 to vector<32x128xf32>
      %43 = arith.maximumf %41, %42 : vector<32x128xf32>
      %44 = vector.shape_cast %43 : vector<32x128xf32> to vector<1x32x128xf32>
      %45 = arith.truncf %44 : vector<1x32x128xf32> to vector<1x32x128xbf16>
      %c0_26 = arith.constant 0 : index
      %c0_27 = arith.constant 0 : index
      %c0_28 = arith.constant 0 : index
      %46 = vector.load %arg5[%c0_26, %c0_27, %c0_28] : memref<1x32x128xbf16, #tpu.memory_space<vmem>>, vector<1x32x128xbf16>
      tpu.vector_store %arg5[%c0_26, %c0_27, %c0_28], %45 {strides = array<i32>} : memref<1x32x128xbf16, #tpu.memory_space<vmem>>, vector<1x32x128xbf16>,
    } else {
    }
    return
  }
  func.func @transform_0(%arg0: i32) -> (i32, i32, i32) {
    %c0_i32 = arith.constant 0 : i32
    %c0_i32_0 = arith.constant 0 : i32
    %c0_i32_1 = arith.constant 0 : i32
    return %c0_i32, %c0_i32_0, %arg0 : i32, i32, i32
  }
  func.func @transform_1(%arg0: i32) -> (i32, i32, i32) {
    %c0_i32 = arith.constant 0 : i32
    %c0_i32_0 = arith.constant 0 : i32
    %c0_i32_1 = arith.constant 0 : i32
    return %c0_i32, %arg0, %c0_i32_0 : i32, i32, i32
  }
  func.func @transform_2(%arg0: i32) -> (i32, i32) {
    %c0_i32 = arith.constant 0 : i32
    %c0_i32_0 = arith.constant 0 : i32
    %c0_i32_1 = arith.constant 0 : i32
    return %c0_i32, %c0_i32_0 : i32, i32
  }
  func.func @transform_3(%arg0: i32) -> (i32, i32) {
    %c0_i32 = arith.constant 0 : i32
    %c0_i32_0 = arith.constant 0 : i32
    %c0_i32_1 = arith.constant 0 : i32
    return %c0_i32, %c0_i32_0 : i32, i32
  }
  func.func @transform_4(%arg0: i32) -> (i32, i32, i32) {
    %c0_i32 = arith.constant 0 : i32
    %c0_i32_0 = arith.constant 0 : i32
    %c0_i32_1 = arith.constant 0 : i32
    %c0_i32_2 = arith.constant 0 : i32
    return %c0_i32, %c0_i32_0, %c0_i32_1 : i32, i32, i32
  }
}

module attributes {stable_mosaic.version = 11 : i64} {
  func.func @_fused_conv_layer_kernel(%arg0: i32, %arg1: memref<1x8x256xbf16, #tpu.memory_space<vmem>>, %arg2: memref<1x256x128xbf16, #tpu.memory_space<vmem>>, %arg3: memref<1x128xf32, #tpu.memory_space<vmem>>, %arg4: memref<1x128xf32, #tpu.memory_space<vmem>>, %arg5: memref<1x8x128xbf16, #tpu.memory_space<vmem>>, %arg6: memref<1x8x128xf32, #tpu.memory_space<vmem>>) attributes {dimension_semantics = [#tpu.dimension_semantics<arbitrary>], iteration_bounds = array<i64: 4>, scalar_prefetch = 0 : i64, scratch_operands = 1 : i64, tpu.core_type = #tpu.core_type<tc>, window_params = [{transform_indices = @transform_0, window_bounds = array<i64: 1, 8, 256>}, {transform_indices = @transform_1, window_bounds = array<i64: 1, 256, 128>}, {pipeline_mode = #tpu.pipeline_mode<synchronous>, transform_indices = @transform_2, window_bounds = array<i64: 1, 128>}, {pipeline_mode = #tpu.pipeline_mode<synchronous>, transform_indices = @transform_3, window_bounds = array<i64: 1, 128>}, {pipeline_mode = #tpu.pipeline_mode<synchronous>, transform_indices = @transform_4, window_bounds = array<i64: 1, 8, 128>}]} {
    %c0_i32 = arith.constant 0 : i32
    %0 = arith.cmpi eq, %arg0, %c0_i32 : i32
    %1 = arith.extui %0 : i1 to i32
    %c0_i32_0 = arith.constant 0 : i32
    %2 = arith.cmpi ne, %1, %c0_i32_0 : i32
    scf.if %2 {
      %cst_13 = arith.constant 0.000000e+00 : f32
      %17 = vector.broadcast %cst_13 : f32 to vector<1x8x128xf32>
      %c0_14 = arith.constant 0 : index
      %c0_15 = arith.constant 0 : index
      %c0_16 = arith.constant 0 : index
      %18 = vector.load %arg6[%c0_14, %c0_15, %c0_16] : memref<1x8x128xf32, #tpu.memory_space<vmem>>, vector<1x8x128xf32>
      tpu.vector_store %arg6[%c0_14, %c0_15, %c0_16], %17 {strides = array<i32>} : memref<1x8x128xf32, #tpu.memory_space<vmem>>, vector<1x8x128xf32>,
    } else {
    }
    %c0 = arith.constant 0 : index
    %c0_1 = arith.constant 0 : index
    %c0_2 = arith.constant 0 : index
    %3 = vector.load %arg6[%c0, %c0_1, %c0_2] : memref<1x8x128xf32, #tpu.memory_space<vmem>>, vector<1x8x128xf32>
    %4 = vector.shape_cast %3 : vector<1x8x128xf32> to vector<8x128xf32>
    %c0_3 = arith.constant 0 : index
    %c0_4 = arith.constant 0 : index
    %c0_5 = arith.constant 0 : index
    %5 = vector.load %arg1[%c0_3, %c0_4, %c0_5] : memref<1x8x256xbf16, #tpu.memory_space<vmem>>, vector<1x8x256xbf16>
    %6 = vector.shape_cast %5 : vector<1x8x256xbf16> to vector<8x256xbf16>
    %c0_6 = arith.constant 0 : index
    %c0_7 = arith.constant 0 : index
    %c0_8 = arith.constant 0 : index
    %7 = vector.load %arg2[%c0_6, %c0_7, %c0_8] : memref<1x256x128xbf16, #tpu.memory_space<vmem>>, vector<1x256x128xbf16>
    %8 = vector.shape_cast %7 : vector<1x256x128xbf16> to vector<256x128xbf16>
    %cst = arith.constant dense<0.000000e+00> : vector<8x128xf32>
    %9 = tpu.matmul %6, %8, %cst {dimension_numbers = #tpu.dot_dimension_numbers<[1], [0], [0], [1], [0, 0, 1, 1], [], []>} : vector<8x256xbf16>, vector<256x128xbf16>, vector<8x128xf32> -> vector<8x128xf32>
    %10 = arith.addf %4, %9 : vector<8x128xf32>
    %c0_9 = arith.constant 0 : index
    %c0_10 = arith.constant 0 : index
    %c0_11 = arith.constant 0 : index
    %11 = vector.load %arg6[%c0_9, %c0_10, %c0_11] : memref<1x8x128xf32, #tpu.memory_space<vmem>>, vector<1x8x128xf32>
    %12 = vector.shape_cast %11 : vector<1x8x128xf32> to vector<8x128xf32>
    %13 = vector.shape_cast %10 : vector<8x128xf32> to vector<1x8x128xf32>
    tpu.vector_store %arg6[%c0_9, %c0_10, %c0_11], %13 {strides = array<i32>} : memref<1x8x128xf32, #tpu.memory_space<vmem>>, vector<1x8x128xf32>,
    %c3_i32 = arith.constant 3 : i32
    %14 = arith.cmpi eq, %arg0, %c3_i32 : i32
    %15 = arith.extui %14 : i1 to i32
    %c0_i32_12 = arith.constant 0 : i32
    %16 = arith.cmpi ne, %15, %c0_i32_12 : i32
    scf.if %16 {
      %c0_13 = arith.constant 0 : index
      %c0_14 = arith.constant 0 : index
      %c0_15 = arith.constant 0 : index
      %17 = vector.load %arg6[%c0_13, %c0_14, %c0_15] : memref<1x8x128xf32, #tpu.memory_space<vmem>>, vector<1x8x128xf32>
      %18 = vector.shape_cast %17 : vector<1x8x128xf32> to vector<8x128xf32>
      %cst_16 = arith.constant dense<0.000000e+00> : vector<128xf32>
      %19 = vector.multi_reduction <add>, %18, %cst_16 [0] : vector<8x128xf32> to vector<128xf32>
      %20 = vector.shape_cast %19 : vector<128xf32> to vector<1x128xf32>
      %21 = arith.mulf %18, %18 : vector<8x128xf32>
      %cst_17 = arith.constant dense<0.000000e+00> : vector<128xf32>
      %22 = vector.multi_reduction <add>, %21, %cst_17 [0] : vector<8x128xf32> to vector<128xf32>
      %23 = vector.shape_cast %22 : vector<128xf32> to vector<1x128xf32>
      %cst_18 = arith.constant 1.250000e-01 : f32
      %24 = vector.broadcast %cst_18 : f32 to vector<1x128xf32>
      %25 = arith.mulf %20, %24 : vector<1x128xf32>
      %cst_19 = arith.constant 1.250000e-01 : f32
      %26 = vector.broadcast %cst_19 : f32 to vector<1x128xf32>
      %27 = arith.mulf %23, %26 : vector<1x128xf32>
      %28 = arith.mulf %25, %25 : vector<1x128xf32>
      %29 = arith.subf %27, %28 : vector<1x128xf32>
      %30 = vector.broadcast %25 : vector<1x128xf32> to vector<8x128xf32>
      %31 = arith.subf %18, %30 : vector<8x128xf32>
      %cst_20 = arith.constant 9.99999974E-6 : f32
      %32 = vector.broadcast %cst_20 : f32 to vector<1x128xf32>
      %33 = arith.addf %29, %32 : vector<1x128xf32>
      %34 = math.rsqrt %33 : vector<1x128xf32>
      %c0_21 = arith.constant 0 : index
      %c0_22 = arith.constant 0 : index
      %35 = vector.load %arg3[%c0_21, %c0_22] : memref<1x128xf32, #tpu.memory_space<vmem>>, vector<1x128xf32>
      %36 = arith.mulf %34, %35 : vector<1x128xf32>
      %37 = vector.broadcast %36 : vector<1x128xf32> to vector<8x128xf32>
      %38 = arith.mulf %31, %37 : vector<8x128xf32>
      %c0_23 = arith.constant 0 : index
      %c0_24 = arith.constant 0 : index
      %39 = vector.load %arg4[%c0_23, %c0_24] : memref<1x128xf32, #tpu.memory_space<vmem>>, vector<1x128xf32>
      %40 = vector.broadcast %39 : vector<1x128xf32> to vector<8x128xf32>
      %41 = arith.addf %38, %40 : vector<8x128xf32>
      %cst_25 = arith.constant 0.000000e+00 : f32
      %42 = vector.broadcast %cst_25 : f32 to vector<8x128xf32>
      %43 = arith.maximumf %41, %42 : vector<8x128xf32>
      %44 = vector.shape_cast %43 : vector<8x128xf32> to vector<1x8x128xf32>
      %45 = arith.truncf %44 : vector<1x8x128xf32> to vector<1x8x128xbf16>
      %c0_26 = arith.constant 0 : index
      %c0_27 = arith.constant 0 : index
      %c0_28 = arith.constant 0 : index
      %46 = vector.load %arg5[%c0_26, %c0_27, %c0_28] : memref<1x8x128xbf16, #tpu.memory_space<vmem>>, vector<1x8x128xbf16>
      tpu.vector_store %arg5[%c0_26, %c0_27, %c0_28], %45 {strides = array<i32>} : memref<1x8x128xbf16, #tpu.memory_space<vmem>>, vector<1x8x128xbf16>,
    } else {
    }
    return
  }
  func.func @transform_0(%arg0: i32) -> (i32, i32, i32) {
    %c0_i32 = arith.constant 0 : i32
    %c0_i32_0 = arith.constant 0 : i32
    %c0_i32_1 = arith.constant 0 : i32
    return %c0_i32, %c0_i32_0, %arg0 : i32, i32, i32
  }
  func.func @transform_1(%arg0: i32) -> (i32, i32, i32) {
    %c0_i32 = arith.constant 0 : i32
    %c0_i32_0 = arith.constant 0 : i32
    %c0_i32_1 = arith.constant 0 : i32
    return %c0_i32, %arg0, %c0_i32_0 : i32, i32, i32
  }
  func.func @transform_2(%arg0: i32) -> (i32, i32) {
    %c0_i32 = arith.constant 0 : i32
    %c0_i32_0 = arith.constant 0 : i32
    %c0_i32_1 = arith.constant 0 : i32
    return %c0_i32, %c0_i32_0 : i32, i32
  }
  func.func @transform_3(%arg0: i32) -> (i32, i32) {
    %c0_i32 = arith.constant 0 : i32
    %c0_i32_0 = arith.constant 0 : i32
    %c0_i32_1 = arith.constant 0 : i32
    return %c0_i32, %c0_i32_0 : i32, i32
  }
  func.func @transform_4(%arg0: i32) -> (i32, i32, i32) {
    %c0_i32 = arith.constant 0 : i32
    %c0_i32_0 = arith.constant 0 : i32
    %c0_i32_1 = arith.constant 0 : i32
    %c0_i32_2 = arith.constant 0 : i32
    return %c0_i32, %c0_i32_0, %c0_i32_1 : i32, i32, i32
  }
}

module attributes {stable_mosaic.version = 11 : i64} {
  func.func @_fused_conv_layer_kernel(%arg0: i32, %arg1: memref<4x8x128xbf16, #tpu.memory_space<vmem>>, %arg2: memref<4x128x128xbf16, #tpu.memory_space<vmem>>, %arg3: memref<1x128xf32, #tpu.memory_space<vmem>>, %arg4: memref<1x128xf32, #tpu.memory_space<vmem>>, %arg5: memref<4x8x128xbf16, #tpu.memory_space<vmem>>, %arg6: memref<4x8x128xf32, #tpu.memory_space<vmem>>) attributes {dimension_semantics = [#tpu.dimension_semantics<arbitrary>], iteration_bounds = array<i64: 1>, scalar_prefetch = 0 : i64, scratch_operands = 1 : i64, tpu.core_type = #tpu.core_type<tc>, window_params = [{transform_indices = @transform_0, window_bounds = array<i64: 4, 8, 128>}, {transform_indices = @transform_1, window_bounds = array<i64: 4, 128, 128>}, {pipeline_mode = #tpu.pipeline_mode<synchronous>, transform_indices = @transform_2, window_bounds = array<i64: 1, 128>}, {pipeline_mode = #tpu.pipeline_mode<synchronous>, transform_indices = @transform_3, window_bounds = array<i64: 1, 128>}, {pipeline_mode = #tpu.pipeline_mode<synchronous>, transform_indices = @transform_4, window_bounds = array<i64: 4, 8, 128>}]} {
    %c0_i32 = arith.constant 0 : i32
    %0 = arith.cmpi eq, %arg0, %c0_i32 : i32
    %1 = arith.extui %0 : i1 to i32
    %c0_i32_0 = arith.constant 0 : i32
    %2 = arith.cmpi ne, %1, %c0_i32_0 : i32
    scf.if %2 {
      %cst_50 = arith.constant 0.000000e+00 : f32
      %50 = vector.broadcast %cst_50 : f32 to vector<4x8x128xf32>
      %c0_51 = arith.constant 0 : index
      %c0_52 = arith.constant 0 : index
      %c0_53 = arith.constant 0 : index
      %51 = vector.load %arg6[%c0_51, %c0_52, %c0_53] : memref<4x8x128xf32, #tpu.memory_space<vmem>>, vector<4x8x128xf32>
      tpu.vector_store %arg6[%c0_51, %c0_52, %c0_53], %50 {strides = array<i32>} : memref<4x8x128xf32, #tpu.memory_space<vmem>>, vector<4x8x128xf32>,
    } else {
    }
    %c0 = arith.constant 0 : index
    %c0_1 = arith.constant 0 : index
    %c0_2 = arith.constant 0 : index
    %3 = vector.load %arg6[%c0, %c0_1, %c0_2] : memref<4x8x128xf32, #tpu.memory_space<vmem>>, vector<1x8x128xf32>
    %4 = vector.shape_cast %3 : vector<1x8x128xf32> to vector<8x128xf32>
    %c0_3 = arith.constant 0 : index
    %c0_4 = arith.constant 0 : index
    %c0_5 = arith.constant 0 : index
    %5 = vector.load %arg1[%c0_3, %c0_4, %c0_5] : memref<4x8x128xbf16, #tpu.memory_space<vmem>>, vector<1x8x128xbf16>
    %6 = vector.shape_cast %5 : vector<1x8x128xbf16> to vector<8x128xbf16>
    %c0_6 = arith.constant 0 : index
    %c0_7 = arith.constant 0 : index
    %c0_8 = arith.constant 0 : index
    %7 = vector.load %arg2[%c0_6, %c0_7, %c0_8] : memref<4x128x128xbf16, #tpu.memory_space<vmem>>, vector<1x128x128xbf16>
    %8 = vector.shape_cast %7 : vector<1x128x128xbf16> to vector<128x128xbf16>
    %cst = arith.constant dense<0.000000e+00> : vector<8x128xf32>
    %9 = tpu.matmul %6, %8, %cst {dimension_numbers = #tpu.dot_dimension_numbers<[1], [0], [0], [1], [0, 0, 1, 1], [], []>} : vector<8x128xbf16>, vector<128x128xbf16>, vector<8x128xf32> -> vector<8x128xf32>
    %10 = arith.addf %4, %9 : vector<8x128xf32>
    %c0_9 = arith.constant 0 : index
    %c0_10 = arith.constant 0 : index
    %c0_11 = arith.constant 0 : index
    %11 = vector.load %arg6[%c0_9, %c0_10, %c0_11] : memref<4x8x128xf32, #tpu.memory_space<vmem>>, vector<1x8x128xf32>
    %12 = vector.shape_cast %11 : vector<1x8x128xf32> to vector<8x128xf32>
    %13 = vector.shape_cast %10 : vector<8x128xf32> to vector<1x8x128xf32>
    tpu.vector_store %arg6[%c0_9, %c0_10, %c0_11], %13 {strides = array<i32>} : memref<4x8x128xf32, #tpu.memory_space<vmem>>, vector<1x8x128xf32>,
    %c1 = arith.constant 1 : index
    %c0_12 = arith.constant 0 : index
    %c0_13 = arith.constant 0 : index
    %14 = vector.load %arg6[%c1, %c0_12, %c0_13] : memref<4x8x128xf32, #tpu.memory_space<vmem>>, vector<1x8x128xf32>
    %15 = vector.shape_cast %14 : vector<1x8x128xf32> to vector<8x128xf32>
    %c1_14 = arith.constant 1 : index
    %c0_15 = arith.constant 0 : index
    %c0_16 = arith.constant 0 : index
    %16 = vector.load %arg1[%c1_14, %c0_15, %c0_16] : memref<4x8x128xbf16, #tpu.memory_space<vmem>>, vector<1x8x128xbf16>
    %17 = vector.shape_cast %16 : vector<1x8x128xbf16> to vector<8x128xbf16>
    %c1_17 = arith.constant 1 : index
    %c0_18 = arith.constant 0 : index
    %c0_19 = arith.constant 0 : index
    %18 = vector.load %arg2[%c1_17, %c0_18, %c0_19] : memref<4x128x128xbf16, #tpu.memory_space<vmem>>, vector<1x128x128xbf16>
    %19 = vector.shape_cast %18 : vector<1x128x128xbf16> to vector<128x128xbf16>
    %cst_20 = arith.constant dense<0.000000e+00> : vector<8x128xf32>
    %20 = tpu.matmul %17, %19, %cst_20 {dimension_numbers = #tpu.dot_dimension_numbers<[1], [0], [0], [1], [0, 0, 1, 1], [], []>} : vector<8x128xbf16>, vector<128x128xbf16>, vector<8x128xf32> -> vector<8x128xf32>
    %21 = arith.addf %15, %20 : vector<8x128xf32>
    %c1_21 = arith.constant 1 : index
    %c0_22 = arith.constant 0 : index
    %c0_23 = arith.constant 0 : index
    %22 = vector.load %arg6[%c1_21, %c0_22, %c0_23] : memref<4x8x128xf32, #tpu.memory_space<vmem>>, vector<1x8x128xf32>
    %23 = vector.shape_cast %22 : vector<1x8x128xf32> to vector<8x128xf32>
    %24 = vector.shape_cast %21 : vector<8x128xf32> to vector<1x8x128xf32>
    tpu.vector_store %arg6[%c1_21, %c0_22, %c0_23], %24 {strides = array<i32>} : memref<4x8x128xf32, #tpu.memory_space<vmem>>, vector<1x8x128xf32>,
    %c2 = arith.constant 2 : index
    %c0_24 = arith.constant 0 : index
    %c0_25 = arith.constant 0 : index
    %25 = vector.load %arg6[%c2, %c0_24, %c0_25] : memref<4x8x128xf32, #tpu.memory_space<vmem>>, vector<1x8x128xf32>
    %26 = vector.shape_cast %25 : vector<1x8x128xf32> to vector<8x128xf32>
    %c2_26 = arith.constant 2 : index
    %c0_27 = arith.constant 0 : index
    %c0_28 = arith.constant 0 : index
    %27 = vector.load %arg1[%c2_26, %c0_27, %c0_28] : memref<4x8x128xbf16, #tpu.memory_space<vmem>>, vector<1x8x128xbf16>
    %28 = vector.shape_cast %27 : vector<1x8x128xbf16> to vector<8x128xbf16>
    %c2_29 = arith.constant 2 : index
    %c0_30 = arith.constant 0 : index
    %c0_31 = arith.constant 0 : index
    %29 = vector.load %arg2[%c2_29, %c0_30, %c0_31] : memref<4x128x128xbf16, #tpu.memory_space<vmem>>, vector<1x128x128xbf16>
    %30 = vector.shape_cast %29 : vector<1x128x128xbf16> to vector<128x128xbf16>
    %cst_32 = arith.constant dense<0.000000e+00> : vector<8x128xf32>
    %31 = tpu.matmul %28, %30, %cst_32 {dimension_numbers = #tpu.dot_dimension_numbers<[1], [0], [0], [1], [0, 0, 1, 1], [], []>} : vector<8x128xbf16>, vector<128x128xbf16>, vector<8x128xf32> -> vector<8x128xf32>
    %32 = arith.addf %26, %31 : vector<8x128xf32>
    %c2_33 = arith.constant 2 : index
    %c0_34 = arith.constant 0 : index
    %c0_35 = arith.constant 0 : index
    %33 = vector.load %arg6[%c2_33, %c0_34, %c0_35] : memref<4x8x128xf32, #tpu.memory_space<vmem>>, vector<1x8x128xf32>
    %34 = vector.shape_cast %33 : vector<1x8x128xf32> to vector<8x128xf32>
    %35 = vector.shape_cast %32 : vector<8x128xf32> to vector<1x8x128xf32>
    tpu.vector_store %arg6[%c2_33, %c0_34, %c0_35], %35 {strides = array<i32>} : memref<4x8x128xf32, #tpu.memory_space<vmem>>, vector<1x8x128xf32>,
    %c3 = arith.constant 3 : index
    %c0_36 = arith.constant 0 : index
    %c0_37 = arith.constant 0 : index
    %36 = vector.load %arg6[%c3, %c0_36, %c0_37] : memref<4x8x128xf32, #tpu.memory_space<vmem>>, vector<1x8x128xf32>
    %37 = vector.shape_cast %36 : vector<1x8x128xf32> to vector<8x128xf32>
    %c3_38 = arith.constant 3 : index
    %c0_39 = arith.constant 0 : index
    %c0_40 = arith.constant 0 : index
    %38 = vector.load %arg1[%c3_38, %c0_39, %c0_40] : memref<4x8x128xbf16, #tpu.memory_space<vmem>>, vector<1x8x128xbf16>
    %39 = vector.shape_cast %38 : vector<1x8x128xbf16> to vector<8x128xbf16>
    %c3_41 = arith.constant 3 : index
    %c0_42 = arith.constant 0 : index
    %c0_43 = arith.constant 0 : index
    %40 = vector.load %arg2[%c3_41, %c0_42, %c0_43] : memref<4x128x128xbf16, #tpu.memory_space<vmem>>, vector<1x128x128xbf16>
    %41 = vector.shape_cast %40 : vector<1x128x128xbf16> to vector<128x128xbf16>
    %cst_44 = arith.constant dense<0.000000e+00> : vector<8x128xf32>
    %42 = tpu.matmul %39, %41, %cst_44 {dimension_numbers = #tpu.dot_dimension_numbers<[1], [0], [0], [1], [0, 0, 1, 1], [], []>} : vector<8x128xbf16>, vector<128x128xbf16>, vector<8x128xf32> -> vector<8x128xf32>
    %43 = arith.addf %37, %42 : vector<8x128xf32>
    %c3_45 = arith.constant 3 : index
    %c0_46 = arith.constant 0 : index
    %c0_47 = arith.constant 0 : index
    %44 = vector.load %arg6[%c3_45, %c0_46, %c0_47] : memref<4x8x128xf32, #tpu.memory_space<vmem>>, vector<1x8x128xf32>
    %45 = vector.shape_cast %44 : vector<1x8x128xf32> to vector<8x128xf32>
    %46 = vector.shape_cast %43 : vector<8x128xf32> to vector<1x8x128xf32>
    tpu.vector_store %arg6[%c3_45, %c0_46, %c0_47], %46 {strides = array<i32>} : memref<4x8x128xf32, #tpu.memory_space<vmem>>, vector<1x8x128xf32>,
    %c0_i32_48 = arith.constant 0 : i32
    %47 = arith.cmpi eq, %arg0, %c0_i32_48 : i32
    %48 = arith.extui %47 : i1 to i32
    %c0_i32_49 = arith.constant 0 : i32
    %49 = arith.cmpi ne, %48, %c0_i32_49 : i32
    scf.if %49 {
      %c0_50 = arith.constant 0 : index
      %c0_51 = arith.constant 0 : index
      %c0_52 = arith.constant 0 : index
      %50 = vector.load %arg6[%c0_50, %c0_51, %c0_52] : memref<4x8x128xf32, #tpu.memory_space<vmem>>, vector<4x8x128xf32>
      %51 = vector.shape_cast %50 : vector<4x8x128xf32> to vector<32x128xf32>
      %cst_53 = arith.constant dense<0.000000e+00> : vector<128xf32>
      %52 = vector.multi_reduction <add>, %51, %cst_53 [0] : vector<32x128xf32> to vector<128xf32>
      %53 = vector.shape_cast %52 : vector<128xf32> to vector<1x128xf32>
      %54 = arith.mulf %51, %51 : vector<32x128xf32>
      %cst_54 = arith.constant dense<0.000000e+00> : vector<128xf32>
      %55 = vector.multi_reduction <add>, %54, %cst_54 [0] : vector<32x128xf32> to vector<128xf32>
      %56 = vector.shape_cast %55 : vector<128xf32> to vector<1x128xf32>
      %cst_55 = arith.constant 3.125000e-02 : f32
      %57 = vector.broadcast %cst_55 : f32 to vector<1x128xf32>
      %58 = arith.mulf %53, %57 : vector<1x128xf32>
      %cst_56 = arith.constant 3.125000e-02 : f32
      %59 = vector.broadcast %cst_56 : f32 to vector<1x128xf32>
      %60 = arith.mulf %56, %59 : vector<1x128xf32>
      %61 = arith.mulf %58, %58 : vector<1x128xf32>
      %62 = arith.subf %60, %61 : vector<1x128xf32>
      %63 = vector.broadcast %58 : vector<1x128xf32> to vector<32x128xf32>
      %64 = arith.subf %51, %63 : vector<32x128xf32>
      %cst_57 = arith.constant 9.99999974E-6 : f32
      %65 = vector.broadcast %cst_57 : f32 to vector<1x128xf32>
      %66 = arith.addf %62, %65 : vector<1x128xf32>
      %67 = math.rsqrt %66 : vector<1x128xf32>
      %c0_58 = arith.constant 0 : index
      %c0_59 = arith.constant 0 : index
      %68 = vector.load %arg3[%c0_58, %c0_59] : memref<1x128xf32, #tpu.memory_space<vmem>>, vector<1x128xf32>
      %69 = arith.mulf %67, %68 : vector<1x128xf32>
      %70 = vector.broadcast %69 : vector<1x128xf32> to vector<32x128xf32>
      %71 = arith.mulf %64, %70 : vector<32x128xf32>
      %c0_60 = arith.constant 0 : index
      %c0_61 = arith.constant 0 : index
      %72 = vector.load %arg4[%c0_60, %c0_61] : memref<1x128xf32, #tpu.memory_space<vmem>>, vector<1x128xf32>
      %73 = vector.broadcast %72 : vector<1x128xf32> to vector<32x128xf32>
      %74 = arith.addf %71, %73 : vector<32x128xf32>
      %cst_62 = arith.constant 0.000000e+00 : f32
      %75 = vector.broadcast %cst_62 : f32 to vector<32x128xf32>
      %76 = arith.maximumf %74, %75 : vector<32x128xf32>
      %77 = vector.shape_cast %76 : vector<32x128xf32> to vector<4x8x128xf32>
      %78 = arith.truncf %77 : vector<4x8x128xf32> to vector<4x8x128xbf16>
      %c0_63 = arith.constant 0 : index
      %c0_64 = arith.constant 0 : index
      %c0_65 = arith.constant 0 : index
      %79 = vector.load %arg5[%c0_63, %c0_64, %c0_65] : memref<4x8x128xbf16, #tpu.memory_space<vmem>>, vector<4x8x128xbf16>
      tpu.vector_store %arg5[%c0_63, %c0_64, %c0_65], %78 {strides = array<i32>} : memref<4x8x128xbf16, #tpu.memory_space<vmem>>, vector<4x8x128xbf16>,
    } else {
    }
    return
  }
  func.func @transform_0(%arg0: i32) -> (i32, i32, i32) {
    %c0_i32 = arith.constant 0 : i32
    %c0_i32_0 = arith.constant 0 : i32
    %c0_i32_1 = arith.constant 0 : i32
    return %c0_i32, %c0_i32_0, %arg0 : i32, i32, i32
  }
  func.func @transform_1(%arg0: i32) -> (i32, i32, i32) {
    %c0_i32 = arith.constant 0 : i32
    %c0_i32_0 = arith.constant 0 : i32
    %c0_i32_1 = arith.constant 0 : i32
    return %c0_i32, %arg0, %c0_i32_0 : i32, i32, i32
  }
  func.func @transform_2(%arg0: i32) -> (i32, i32) {
    %c0_i32 = arith.constant 0 : i32
    %c0_i32_0 = arith.constant 0 : i32
    %c0_i32_1 = arith.constant 0 : i32
    return %c0_i32, %c0_i32_0 : i32, i32
  }
  func.func @transform_3(%arg0: i32) -> (i32, i32) {
    %c0_i32 = arith.constant 0 : i32
    %c0_i32_0 = arith.constant 0 : i32
    %c0_i32_1 = arith.constant 0 : i32
    return %c0_i32, %c0_i32_0 : i32, i32
  }
  func.func @transform_4(%arg0: i32) -> (i32, i32, i32) {
    %c0_i32 = arith.constant 0 : i32
    %c0_i32_0 = arith.constant 0 : i32
    %c0_i32_1 = arith.constant 0 : i32
    %c0_i32_2 = arith.constant 0 : i32
    return %c0_i32, %c0_i32_0, %c0_i32_1 : i32, i32, i32
  }
}

module attributes {stable_mosaic.version = 11 : i64} {
  func.func @_fused_conv_layer_kernel(%arg0: i32, %arg1: memref<4x32x128xbf16, #tpu.memory_space<vmem>>, %arg2: memref<4x128x128xbf16, #tpu.memory_space<vmem>>, %arg3: memref<1x128xf32, #tpu.memory_space<vmem>>, %arg4: memref<1x128xf32, #tpu.memory_space<vmem>>, %arg5: memref<4x32x128xbf16, #tpu.memory_space<vmem>>, %arg6: memref<4x32x128xf32, #tpu.memory_space<vmem>>) attributes {dimension_semantics = [#tpu.dimension_semantics<arbitrary>], iteration_bounds = array<i64: 1>, scalar_prefetch = 0 : i64, scratch_operands = 1 : i64, tpu.core_type = #tpu.core_type<tc>, window_params = [{transform_indices = @transform_0, window_bounds = array<i64: 4, 32, 128>}, {transform_indices = @transform_1, window_bounds = array<i64: 4, 128, 128>}, {pipeline_mode = #tpu.pipeline_mode<synchronous>, transform_indices = @transform_2, window_bounds = array<i64: 1, 128>}, {pipeline_mode = #tpu.pipeline_mode<synchronous>, transform_indices = @transform_3, window_bounds = array<i64: 1, 128>}, {pipeline_mode = #tpu.pipeline_mode<synchronous>, transform_indices = @transform_4, window_bounds = array<i64: 4, 32, 128>}]} {
    %c0_i32 = arith.constant 0 : i32
    %0 = arith.cmpi eq, %arg0, %c0_i32 : i32
    %1 = arith.extui %0 : i1 to i32
    %c0_i32_0 = arith.constant 0 : i32
    %2 = arith.cmpi ne, %1, %c0_i32_0 : i32
    scf.if %2 {
      %cst_50 = arith.constant 0.000000e+00 : f32
      %50 = vector.broadcast %cst_50 : f32 to vector<4x32x128xf32>
      %c0_51 = arith.constant 0 : index
      %c0_52 = arith.constant 0 : index
      %c0_53 = arith.constant 0 : index
      %51 = vector.load %arg6[%c0_51, %c0_52, %c0_53] : memref<4x32x128xf32, #tpu.memory_space<vmem>>, vector<4x32x128xf32>
      tpu.vector_store %arg6[%c0_51, %c0_52, %c0_53], %50 {strides = array<i32>} : memref<4x32x128xf32, #tpu.memory_space<vmem>>, vector<4x32x128xf32>,
    } else {
    }
    %c0 = arith.constant 0 : index
    %c0_1 = arith.constant 0 : index
    %c0_2 = arith.constant 0 : index
    %3 = vector.load %arg6[%c0, %c0_1, %c0_2] : memref<4x32x128xf32, #tpu.memory_space<vmem>>, vector<1x32x128xf32>
    %4 = vector.shape_cast %3 : vector<1x32x128xf32> to vector<32x128xf32>
    %c0_3 = arith.constant 0 : index
    %c0_4 = arith.constant 0 : index
    %c0_5 = arith.constant 0 : index
    %5 = vector.load %arg1[%c0_3, %c0_4, %c0_5] : memref<4x32x128xbf16, #tpu.memory_space<vmem>>, vector<1x32x128xbf16>
    %6 = vector.shape_cast %5 : vector<1x32x128xbf16> to vector<32x128xbf16>
    %c0_6 = arith.constant 0 : index
    %c0_7 = arith.constant 0 : index
    %c0_8 = arith.constant 0 : index
    %7 = vector.load %arg2[%c0_6, %c0_7, %c0_8] : memref<4x128x128xbf16, #tpu.memory_space<vmem>>, vector<1x128x128xbf16>
    %8 = vector.shape_cast %7 : vector<1x128x128xbf16> to vector<128x128xbf16>
    %cst = arith.constant dense<0.000000e+00> : vector<32x128xf32>
    %9 = tpu.matmul %6, %8, %cst {dimension_numbers = #tpu.dot_dimension_numbers<[1], [0], [0], [1], [0, 0, 1, 1], [], []>} : vector<32x128xbf16>, vector<128x128xbf16>, vector<32x128xf32> -> vector<32x128xf32>
    %10 = arith.addf %4, %9 : vector<32x128xf32>
    %c0_9 = arith.constant 0 : index
    %c0_10 = arith.constant 0 : index
    %c0_11 = arith.constant 0 : index
    %11 = vector.load %arg6[%c0_9, %c0_10, %c0_11] : memref<4x32x128xf32, #tpu.memory_space<vmem>>, vector<1x32x128xf32>
    %12 = vector.shape_cast %11 : vector<1x32x128xf32> to vector<32x128xf32>
    %13 = vector.shape_cast %10 : vector<32x128xf32> to vector<1x32x128xf32>
    tpu.vector_store %arg6[%c0_9, %c0_10, %c0_11], %13 {strides = array<i32>} : memref<4x32x128xf32, #tpu.memory_space<vmem>>, vector<1x32x128xf32>,
    %c1 = arith.constant 1 : index
    %c0_12 = arith.constant 0 : index
    %c0_13 = arith.constant 0 : index
    %14 = vector.load %arg6[%c1, %c0_12, %c0_13] : memref<4x32x128xf32, #tpu.memory_space<vmem>>, vector<1x32x128xf32>
    %15 = vector.shape_cast %14 : vector<1x32x128xf32> to vector<32x128xf32>
    %c1_14 = arith.constant 1 : index
    %c0_15 = arith.constant 0 : index
    %c0_16 = arith.constant 0 : index
    %16 = vector.load %arg1[%c1_14, %c0_15, %c0_16] : memref<4x32x128xbf16, #tpu.memory_space<vmem>>, vector<1x32x128xbf16>
    %17 = vector.shape_cast %16 : vector<1x32x128xbf16> to vector<32x128xbf16>
    %c1_17 = arith.constant 1 : index
    %c0_18 = arith.constant 0 : index
    %c0_19 = arith.constant 0 : index
    %18 = vector.load %arg2[%c1_17, %c0_18, %c0_19] : memref<4x128x128xbf16, #tpu.memory_space<vmem>>, vector<1x128x128xbf16>
    %19 = vector.shape_cast %18 : vector<1x128x128xbf16> to vector<128x128xbf16>
    %cst_20 = arith.constant dense<0.000000e+00> : vector<32x128xf32>
    %20 = tpu.matmul %17, %19, %cst_20 {dimension_numbers = #tpu.dot_dimension_numbers<[1], [0], [0], [1], [0, 0, 1, 1], [], []>} : vector<32x128xbf16>, vector<128x128xbf16>, vector<32x128xf32> -> vector<32x128xf32>
    %21 = arith.addf %15, %20 : vector<32x128xf32>
    %c1_21 = arith.constant 1 : index
    %c0_22 = arith.constant 0 : index
    %c0_23 = arith.constant 0 : index
    %22 = vector.load %arg6[%c1_21, %c0_22, %c0_23] : memref<4x32x128xf32, #tpu.memory_space<vmem>>, vector<1x32x128xf32>
    %23 = vector.shape_cast %22 : vector<1x32x128xf32> to vector<32x128xf32>
    %24 = vector.shape_cast %21 : vector<32x128xf32> to vector<1x32x128xf32>
    tpu.vector_store %arg6[%c1_21, %c0_22, %c0_23], %24 {strides = array<i32>} : memref<4x32x128xf32, #tpu.memory_space<vmem>>, vector<1x32x128xf32>,
    %c2 = arith.constant 2 : index
    %c0_24 = arith.constant 0 : index
    %c0_25 = arith.constant 0 : index
    %25 = vector.load %arg6[%c2, %c0_24, %c0_25] : memref<4x32x128xf32, #tpu.memory_space<vmem>>, vector<1x32x128xf32>
    %26 = vector.shape_cast %25 : vector<1x32x128xf32> to vector<32x128xf32>
    %c2_26 = arith.constant 2 : index
    %c0_27 = arith.constant 0 : index
    %c0_28 = arith.constant 0 : index
    %27 = vector.load %arg1[%c2_26, %c0_27, %c0_28] : memref<4x32x128xbf16, #tpu.memory_space<vmem>>, vector<1x32x128xbf16>
    %28 = vector.shape_cast %27 : vector<1x32x128xbf16> to vector<32x128xbf16>
    %c2_29 = arith.constant 2 : index
    %c0_30 = arith.constant 0 : index
    %c0_31 = arith.constant 0 : index
    %29 = vector.load %arg2[%c2_29, %c0_30, %c0_31] : memref<4x128x128xbf16, #tpu.memory_space<vmem>>, vector<1x128x128xbf16>
    %30 = vector.shape_cast %29 : vector<1x128x128xbf16> to vector<128x128xbf16>
    %cst_32 = arith.constant dense<0.000000e+00> : vector<32x128xf32>
    %31 = tpu.matmul %28, %30, %cst_32 {dimension_numbers = #tpu.dot_dimension_numbers<[1], [0], [0], [1], [0, 0, 1, 1], [], []>} : vector<32x128xbf16>, vector<128x128xbf16>, vector<32x128xf32> -> vector<32x128xf32>
    %32 = arith.addf %26, %31 : vector<32x128xf32>
    %c2_33 = arith.constant 2 : index
    %c0_34 = arith.constant 0 : index
    %c0_35 = arith.constant 0 : index
    %33 = vector.load %arg6[%c2_33, %c0_34, %c0_35] : memref<4x32x128xf32, #tpu.memory_space<vmem>>, vector<1x32x128xf32>
    %34 = vector.shape_cast %33 : vector<1x32x128xf32> to vector<32x128xf32>
    %35 = vector.shape_cast %32 : vector<32x128xf32> to vector<1x32x128xf32>
    tpu.vector_store %arg6[%c2_33, %c0_34, %c0_35], %35 {strides = array<i32>} : memref<4x32x128xf32, #tpu.memory_space<vmem>>, vector<1x32x128xf32>,
    %c3 = arith.constant 3 : index
    %c0_36 = arith.constant 0 : index
    %c0_37 = arith.constant 0 : index
    %36 = vector.load %arg6[%c3, %c0_36, %c0_37] : memref<4x32x128xf32, #tpu.memory_space<vmem>>, vector<1x32x128xf32>
    %37 = vector.shape_cast %36 : vector<1x32x128xf32> to vector<32x128xf32>
    %c3_38 = arith.constant 3 : index
    %c0_39 = arith.constant 0 : index
    %c0_40 = arith.constant 0 : index
    %38 = vector.load %arg1[%c3_38, %c0_39, %c0_40] : memref<4x32x128xbf16, #tpu.memory_space<vmem>>, vector<1x32x128xbf16>
    %39 = vector.shape_cast %38 : vector<1x32x128xbf16> to vector<32x128xbf16>
    %c3_41 = arith.constant 3 : index
    %c0_42 = arith.constant 0 : index
    %c0_43 = arith.constant 0 : index
    %40 = vector.load %arg2[%c3_41, %c0_42, %c0_43] : memref<4x128x128xbf16, #tpu.memory_space<vmem>>, vector<1x128x128xbf16>
    %41 = vector.shape_cast %40 : vector<1x128x128xbf16> to vector<128x128xbf16>
    %cst_44 = arith.constant dense<0.000000e+00> : vector<32x128xf32>
    %42 = tpu.matmul %39, %41, %cst_44 {dimension_numbers = #tpu.dot_dimension_numbers<[1], [0], [0], [1], [0, 0, 1, 1], [], []>} : vector<32x128xbf16>, vector<128x128xbf16>, vector<32x128xf32> -> vector<32x128xf32>
    %43 = arith.addf %37, %42 : vector<32x128xf32>
    %c3_45 = arith.constant 3 : index
    %c0_46 = arith.constant 0 : index
    %c0_47 = arith.constant 0 : index
    %44 = vector.load %arg6[%c3_45, %c0_46, %c0_47] : memref<4x32x128xf32, #tpu.memory_space<vmem>>, vector<1x32x128xf32>
    %45 = vector.shape_cast %44 : vector<1x32x128xf32> to vector<32x128xf32>
    %46 = vector.shape_cast %43 : vector<32x128xf32> to vector<1x32x128xf32>
    tpu.vector_store %arg6[%c3_45, %c0_46, %c0_47], %46 {strides = array<i32>} : memref<4x32x128xf32, #tpu.memory_space<vmem>>, vector<1x32x128xf32>,
    %c0_i32_48 = arith.constant 0 : i32
    %47 = arith.cmpi eq, %arg0, %c0_i32_48 : i32
    %48 = arith.extui %47 : i1 to i32
    %c0_i32_49 = arith.constant 0 : i32
    %49 = arith.cmpi ne, %48, %c0_i32_49 : i32
    scf.if %49 {
      %c0_50 = arith.constant 0 : index
      %c0_51 = arith.constant 0 : index
      %c0_52 = arith.constant 0 : index
      %50 = vector.load %arg6[%c0_50, %c0_51, %c0_52] : memref<4x32x128xf32, #tpu.memory_space<vmem>>, vector<4x32x128xf32>
      %51 = vector.shape_cast %50 : vector<4x32x128xf32> to vector<128x128xf32>
      %cst_53 = arith.constant dense<0.000000e+00> : vector<128xf32>
      %52 = vector.multi_reduction <add>, %51, %cst_53 [0] : vector<128x128xf32> to vector<128xf32>
      %53 = vector.shape_cast %52 : vector<128xf32> to vector<1x128xf32>
      %54 = arith.mulf %51, %51 : vector<128x128xf32>
      %cst_54 = arith.constant dense<0.000000e+00> : vector<128xf32>
      %55 = vector.multi_reduction <add>, %54, %cst_54 [0] : vector<128x128xf32> to vector<128xf32>
      %56 = vector.shape_cast %55 : vector<128xf32> to vector<1x128xf32>
      %cst_55 = arith.constant 7.812500e-03 : f32
      %57 = vector.broadcast %cst_55 : f32 to vector<1x128xf32>
      %58 = arith.mulf %53, %57 : vector<1x128xf32>
      %cst_56 = arith.constant 7.812500e-03 : f32
      %59 = vector.broadcast %cst_56 : f32 to vector<1x128xf32>
      %60 = arith.mulf %56, %59 : vector<1x128xf32>
      %61 = arith.mulf %58, %58 : vector<1x128xf32>
      %62 = arith.subf %60, %61 : vector<1x128xf32>
      %63 = vector.broadcast %58 : vector<1x128xf32> to vector<128x128xf32>
      %64 = arith.subf %51, %63 : vector<128x128xf32>
      %cst_57 = arith.constant 9.99999974E-6 : f32
      %65 = vector.broadcast %cst_57 : f32 to vector<1x128xf32>
      %66 = arith.addf %62, %65 : vector<1x128xf32>
      %67 = math.rsqrt %66 : vector<1x128xf32>
      %c0_58 = arith.constant 0 : index
      %c0_59 = arith.constant 0 : index
      %68 = vector.load %arg3[%c0_58, %c0_59] : memref<1x128xf32, #tpu.memory_space<vmem>>, vector<1x128xf32>
      %69 = arith.mulf %67, %68 : vector<1x128xf32>
      %70 = vector.broadcast %69 : vector<1x128xf32> to vector<128x128xf32>
      %71 = arith.mulf %64, %70 : vector<128x128xf32>
      %c0_60 = arith.constant 0 : index
      %c0_61 = arith.constant 0 : index
      %72 = vector.load %arg4[%c0_60, %c0_61] : memref<1x128xf32, #tpu.memory_space<vmem>>, vector<1x128xf32>
      %73 = vector.broadcast %72 : vector<1x128xf32> to vector<128x128xf32>
      %74 = arith.addf %71, %73 : vector<128x128xf32>
      %cst_62 = arith.constant 0.000000e+00 : f32
      %75 = vector.broadcast %cst_62 : f32 to vector<128x128xf32>
      %76 = arith.maximumf %74, %75 : vector<128x128xf32>
      %77 = vector.shape_cast %76 : vector<128x128xf32> to vector<4x32x128xf32>
      %78 = arith.truncf %77 : vector<4x32x128xf32> to vector<4x32x128xbf16>
      %c0_63 = arith.constant 0 : index
      %c0_64 = arith.constant 0 : index
      %c0_65 = arith.constant 0 : index
      %79 = vector.load %arg5[%c0_63, %c0_64, %c0_65] : memref<4x32x128xbf16, #tpu.memory_space<vmem>>, vector<4x32x128xbf16>
      tpu.vector_store %arg5[%c0_63, %c0_64, %c0_65], %78 {strides = array<i32>} : memref<4x32x128xbf16, #tpu.memory_space<vmem>>, vector<4x32x128xbf16>,
    } else {
    }
    return
  }
  func.func @transform_0(%arg0: i32) -> (i32, i32, i32) {
    %c0_i32 = arith.constant 0 : i32
    %c0_i32_0 = arith.constant 0 : i32
    %c0_i32_1 = arith.constant 0 : i32
    return %c0_i32, %c0_i32_0, %arg0 : i32, i32, i32
  }
  func.func @transform_1(%arg0: i32) -> (i32, i32, i32) {
    %c0_i32 = arith.constant 0 : i32
    %c0_i32_0 = arith.constant 0 : i32
    %c0_i32_1 = arith.constant 0 : i32
    return %c0_i32, %arg0, %c0_i32_0 : i32, i32, i32
  }
  func.func @transform_2(%arg0: i32) -> (i32, i32) {
    %c0_i32 = arith.constant 0 : i32
    %c0_i32_0 = arith.constant 0 : i32
    %c0_i32_1 = arith.constant 0 : i32
    return %c0_i32, %c0_i32_0 : i32, i32
  }
  func.func @transform_3(%arg0: i32) -> (i32, i32) {
    %c0_i32 = arith.constant 0 : i32
    %c0_i32_0 = arith.constant 0 : i32
    %c0_i32_1 = arith.constant 0 : i32
    return %c0_i32, %c0_i32_0 : i32, i32
  }
  func.func @transform_4(%arg0: i32) -> (i32, i32, i32) {
    %c0_i32 = arith.constant 0 : i32
    %c0_i32_0 = arith.constant 0 : i32
    %c0_i32_1 = arith.constant 0 : i32
    %c0_i32_2 = arith.constant 0 : i32
    return %c0_i32, %c0_i32_0, %c0_i32_1 : i32, i32, i32
  }
}

module attributes {stable_mosaic.version = 11 : i64} {
  func.func @_fused_conv_layer_kernel(%arg0: i32, %arg1: memref<4x128x128xbf16, #tpu.memory_space<vmem>>, %arg2: memref<4x128x128xbf16, #tpu.memory_space<vmem>>, %arg3: memref<1x128xf32, #tpu.memory_space<vmem>>, %arg4: memref<1x128xf32, #tpu.memory_space<vmem>>, %arg5: memref<4x128x128xf32, #tpu.memory_space<vmem>>, %arg6: memref<4x128x128xf32, #tpu.memory_space<vmem>>) attributes {dimension_semantics = [#tpu.dimension_semantics<arbitrary>], iteration_bounds = array<i64: 1>, scalar_prefetch = 0 : i64, scratch_operands = 1 : i64, tpu.core_type = #tpu.core_type<tc>, window_params = [{transform_indices = @transform_0, window_bounds = array<i64: 4, 128, 128>}, {transform_indices = @transform_1, window_bounds = array<i64: 4, 128, 128>}, {pipeline_mode = #tpu.pipeline_mode<synchronous>, transform_indices = @transform_2, window_bounds = array<i64: 1, 128>}, {pipeline_mode = #tpu.pipeline_mode<synchronous>, transform_indices = @transform_3, window_bounds = array<i64: 1, 128>}, {pipeline_mode = #tpu.pipeline_mode<synchronous>, transform_indices = @transform_4, window_bounds = array<i64: 4, 128, 128>}]} {
    %c0_i32 = arith.constant 0 : i32
    %0 = arith.cmpi eq, %arg0, %c0_i32 : i32
    %1 = arith.extui %0 : i1 to i32
    %c0_i32_0 = arith.constant 0 : i32
    %2 = arith.cmpi ne, %1, %c0_i32_0 : i32
    scf.if %2 {
      %cst_50 = arith.constant 0.000000e+00 : f32
      %50 = vector.broadcast %cst_50 : f32 to vector<4x128x128xf32>
      %c0_51 = arith.constant 0 : index
      %c0_52 = arith.constant 0 : index
      %c0_53 = arith.constant 0 : index
      %51 = vector.load %arg6[%c0_51, %c0_52, %c0_53] : memref<4x128x128xf32, #tpu.memory_space<vmem>>, vector<4x128x128xf32>
      tpu.vector_store %arg6[%c0_51, %c0_52, %c0_53], %50 {strides = array<i32>} : memref<4x128x128xf32, #tpu.memory_space<vmem>>, vector<4x128x128xf32>,
    } else {
    }
    %c0 = arith.constant 0 : index
    %c0_1 = arith.constant 0 : index
    %c0_2 = arith.constant 0 : index
    %3 = vector.load %arg6[%c0, %c0_1, %c0_2] : memref<4x128x128xf32, #tpu.memory_space<vmem>>, vector<1x128x128xf32>
    %4 = vector.shape_cast %3 : vector<1x128x128xf32> to vector<128x128xf32>
    %c0_3 = arith.constant 0 : index
    %c0_4 = arith.constant 0 : index
    %c0_5 = arith.constant 0 : index
    %5 = vector.load %arg1[%c0_3, %c0_4, %c0_5] : memref<4x128x128xbf16, #tpu.memory_space<vmem>>, vector<1x128x128xbf16>
    %6 = vector.shape_cast %5 : vector<1x128x128xbf16> to vector<128x128xbf16>
    %c0_6 = arith.constant 0 : index
    %c0_7 = arith.constant 0 : index
    %c0_8 = arith.constant 0 : index
    %7 = vector.load %arg2[%c0_6, %c0_7, %c0_8] : memref<4x128x128xbf16, #tpu.memory_space<vmem>>, vector<1x128x128xbf16>
    %8 = vector.shape_cast %7 : vector<1x128x128xbf16> to vector<128x128xbf16>
    %cst = arith.constant dense<0.000000e+00> : vector<128x128xf32>
    %9 = tpu.matmul %6, %8, %cst {dimension_numbers = #tpu.dot_dimension_numbers<[1], [0], [0], [1], [0, 0, 1, 1], [], []>} : vector<128x128xbf16>, vector<128x128xbf16>, vector<128x128xf32> -> vector<128x128xf32>
    %10 = arith.addf %4, %9 : vector<128x128xf32>
    %c0_9 = arith.constant 0 : index
    %c0_10 = arith.constant 0 : index
    %c0_11 = arith.constant 0 : index
    %11 = vector.load %arg6[%c0_9, %c0_10, %c0_11] : memref<4x128x128xf32, #tpu.memory_space<vmem>>, vector<1x128x128xf32>
    %12 = vector.shape_cast %11 : vector<1x128x128xf32> to vector<128x128xf32>
    %13 = vector.shape_cast %10 : vector<128x128xf32> to vector<1x128x128xf32>
    tpu.vector_store %arg6[%c0_9, %c0_10, %c0_11], %13 {strides = array<i32>} : memref<4x128x128xf32, #tpu.memory_space<vmem>>, vector<1x128x128xf32>,
    %c1 = arith.constant 1 : index
    %c0_12 = arith.constant 0 : index
    %c0_13 = arith.constant 0 : index
    %14 = vector.load %arg6[%c1, %c0_12, %c0_13] : memref<4x128x128xf32, #tpu.memory_space<vmem>>, vector<1x128x128xf32>
    %15 = vector.shape_cast %14 : vector<1x128x128xf32> to vector<128x128xf32>
    %c1_14 = arith.constant 1 : index
    %c0_15 = arith.constant 0 : index
    %c0_16 = arith.constant 0 : index
    %16 = vector.load %arg1[%c1_14, %c0_15, %c0_16] : memref<4x128x128xbf16, #tpu.memory_space<vmem>>, vector<1x128x128xbf16>
    %17 = vector.shape_cast %16 : vector<1x128x128xbf16> to vector<128x128xbf16>
    %c1_17 = arith.constant 1 : index
    %c0_18 = arith.constant 0 : index
    %c0_19 = arith.constant 0 : index
    %18 = vector.load %arg2[%c1_17, %c0_18, %c0_19] : memref<4x128x128xbf16, #tpu.memory_space<vmem>>, vector<1x128x128xbf16>
    %19 = vector.shape_cast %18 : vector<1x128x128xbf16> to vector<128x128xbf16>
    %cst_20 = arith.constant dense<0.000000e+00> : vector<128x128xf32>
    %20 = tpu.matmul %17, %19, %cst_20 {dimension_numbers = #tpu.dot_dimension_numbers<[1], [0], [0], [1], [0, 0, 1, 1], [], []>} : vector<128x128xbf16>, vector<128x128xbf16>, vector<128x128xf32> -> vector<128x128xf32>
    %21 = arith.addf %15, %20 : vector<128x128xf32>
    %c1_21 = arith.constant 1 : index
    %c0_22 = arith.constant 0 : index
    %c0_23 = arith.constant 0 : index
    %22 = vector.load %arg6[%c1_21, %c0_22, %c0_23] : memref<4x128x128xf32, #tpu.memory_space<vmem>>, vector<1x128x128xf32>
    %23 = vector.shape_cast %22 : vector<1x128x128xf32> to vector<128x128xf32>
    %24 = vector.shape_cast %21 : vector<128x128xf32> to vector<1x128x128xf32>
    tpu.vector_store %arg6[%c1_21, %c0_22, %c0_23], %24 {strides = array<i32>} : memref<4x128x128xf32, #tpu.memory_space<vmem>>, vector<1x128x128xf32>,
    %c2 = arith.constant 2 : index
    %c0_24 = arith.constant 0 : index
    %c0_25 = arith.constant 0 : index
    %25 = vector.load %arg6[%c2, %c0_24, %c0_25] : memref<4x128x128xf32, #tpu.memory_space<vmem>>, vector<1x128x128xf32>
    %26 = vector.shape_cast %25 : vector<1x128x128xf32> to vector<128x128xf32>
    %c2_26 = arith.constant 2 : index
    %c0_27 = arith.constant 0 : index
    %c0_28 = arith.constant 0 : index
    %27 = vector.load %arg1[%c2_26, %c0_27, %c0_28] : memref<4x128x128xbf16, #tpu.memory_space<vmem>>, vector<1x128x128xbf16>
    %28 = vector.shape_cast %27 : vector<1x128x128xbf16> to vector<128x128xbf16>
    %c2_29 = arith.constant 2 : index
    %c0_30 = arith.constant 0 : index
    %c0_31 = arith.constant 0 : index
    %29 = vector.load %arg2[%c2_29, %c0_30, %c0_31] : memref<4x128x128xbf16, #tpu.memory_space<vmem>>, vector<1x128x128xbf16>
    %30 = vector.shape_cast %29 : vector<1x128x128xbf16> to vector<128x128xbf16>
    %cst_32 = arith.constant dense<0.000000e+00> : vector<128x128xf32>
    %31 = tpu.matmul %28, %30, %cst_32 {dimension_numbers = #tpu.dot_dimension_numbers<[1], [0], [0], [1], [0, 0, 1, 1], [], []>} : vector<128x128xbf16>, vector<128x128xbf16>, vector<128x128xf32> -> vector<128x128xf32>
    %32 = arith.addf %26, %31 : vector<128x128xf32>
    %c2_33 = arith.constant 2 : index
    %c0_34 = arith.constant 0 : index
    %c0_35 = arith.constant 0 : index
    %33 = vector.load %arg6[%c2_33, %c0_34, %c0_35] : memref<4x128x128xf32, #tpu.memory_space<vmem>>, vector<1x128x128xf32>
    %34 = vector.shape_cast %33 : vector<1x128x128xf32> to vector<128x128xf32>
    %35 = vector.shape_cast %32 : vector<128x128xf32> to vector<1x128x128xf32>
    tpu.vector_store %arg6[%c2_33, %c0_34, %c0_35], %35 {strides = array<i32>} : memref<4x128x128xf32, #tpu.memory_space<vmem>>, vector<1x128x128xf32>,
    %c3 = arith.constant 3 : index
    %c0_36 = arith.constant 0 : index
    %c0_37 = arith.constant 0 : index
    %36 = vector.load %arg6[%c3, %c0_36, %c0_37] : memref<4x128x128xf32, #tpu.memory_space<vmem>>, vector<1x128x128xf32>
    %37 = vector.shape_cast %36 : vector<1x128x128xf32> to vector<128x128xf32>
    %c3_38 = arith.constant 3 : index
    %c0_39 = arith.constant 0 : index
    %c0_40 = arith.constant 0 : index
    %38 = vector.load %arg1[%c3_38, %c0_39, %c0_40] : memref<4x128x128xbf16, #tpu.memory_space<vmem>>, vector<1x128x128xbf16>
    %39 = vector.shape_cast %38 : vector<1x128x128xbf16> to vector<128x128xbf16>
    %c3_41 = arith.constant 3 : index
    %c0_42 = arith.constant 0 : index
    %c0_43 = arith.constant 0 : index
    %40 = vector.load %arg2[%c3_41, %c0_42, %c0_43] : memref<4x128x128xbf16, #tpu.memory_space<vmem>>, vector<1x128x128xbf16>
    %41 = vector.shape_cast %40 : vector<1x128x128xbf16> to vector<128x128xbf16>
    %cst_44 = arith.constant dense<0.000000e+00> : vector<128x128xf32>
    %42 = tpu.matmul %39, %41, %cst_44 {dimension_numbers = #tpu.dot_dimension_numbers<[1], [0], [0], [1], [0, 0, 1, 1], [], []>} : vector<128x128xbf16>, vector<128x128xbf16>, vector<128x128xf32> -> vector<128x128xf32>
    %43 = arith.addf %37, %42 : vector<128x128xf32>
    %c3_45 = arith.constant 3 : index
    %c0_46 = arith.constant 0 : index
    %c0_47 = arith.constant 0 : index
    %44 = vector.load %arg6[%c3_45, %c0_46, %c0_47] : memref<4x128x128xf32, #tpu.memory_space<vmem>>, vector<1x128x128xf32>
    %45 = vector.shape_cast %44 : vector<1x128x128xf32> to vector<128x128xf32>
    %46 = vector.shape_cast %43 : vector<128x128xf32> to vector<1x128x128xf32>
    tpu.vector_store %arg6[%c3_45, %c0_46, %c0_47], %46 {strides = array<i32>} : memref<4x128x128xf32, #tpu.memory_space<vmem>>, vector<1x128x128xf32>,
    %c0_i32_48 = arith.constant 0 : i32
    %47 = arith.cmpi eq, %arg0, %c0_i32_48 : i32
    %48 = arith.extui %47 : i1 to i32
    %c0_i32_49 = arith.constant 0 : i32
    %49 = arith.cmpi ne, %48, %c0_i32_49 : i32
    scf.if %49 {
      %c0_50 = arith.constant 0 : index
      %c0_51 = arith.constant 0 : index
      %c0_52 = arith.constant 0 : index
      %50 = vector.load %arg6[%c0_50, %c0_51, %c0_52] : memref<4x128x128xf32, #tpu.memory_space<vmem>>, vector<4x128x128xf32>
      %51 = vector.shape_cast %50 : vector<4x128x128xf32> to vector<512x128xf32>
      %c0_53 = arith.constant 0 : index
      %c0_54 = arith.constant 0 : index
      %52 = vector.load %arg4[%c0_53, %c0_54] : memref<1x128xf32, #tpu.memory_space<vmem>>, vector<1x128xf32>
      %53 = vector.broadcast %52 : vector<1x128xf32> to vector<512x128xf32>
      %54 = arith.addf %51, %53 : vector<512x128xf32>
      %55 = vector.shape_cast %54 : vector<512x128xf32> to vector<4x128x128xf32>
      %c0_55 = arith.constant 0 : index
      %c0_56 = arith.constant 0 : index
      %c0_57 = arith.constant 0 : index
      %56 = vector.load %arg5[%c0_55, %c0_56, %c0_57] : memref<4x128x128xf32, #tpu.memory_space<vmem>>, vector<4x128x128xf32>
      tpu.vector_store %arg5[%c0_55, %c0_56, %c0_57], %55 {strides = array<i32>} : memref<4x128x128xf32, #tpu.memory_space<vmem>>, vector<4x128x128xf32>,
    } else {
    }
    return
  }
  func.func @transform_0(%arg0: i32) -> (i32, i32, i32) {
    %c0_i32 = arith.constant 0 : i32
    %c0_i32_0 = arith.constant 0 : i32
    %c0_i32_1 = arith.constant 0 : i32
    return %c0_i32, %c0_i32_0, %arg0 : i32, i32, i32
  }
  func.func @transform_1(%arg0: i32) -> (i32, i32, i32) {
    %c0_i32 = arith.constant 0 : i32
    %c0_i32_0 = arith.constant 0 : i32
    %c0_i32_1 = arith.constant 0 : i32
    return %c0_i32, %arg0, %c0_i32_0 : i32, i32, i32
  }
  func.func @transform_2(%arg0: i32) -> (i32, i32) {
    %c0_i32 = arith.constant 0 : i32
    %c0_i32_0 = arith.constant 0 : i32
    %c0_i32_1 = arith.constant 0 : i32
    return %c0_i32, %c0_i32_0 : i32, i32
  }
  func.func @transform_3(%arg0: i32) -> (i32, i32) {
    %c0_i32 = arith.constant 0 : i32
    %c0_i32_0 = arith.constant 0 : i32
    %c0_i32_1 = arith.constant 0 : i32
    return %c0_i32, %c0_i32_0 : i32, i32
  }
  func.func @transform_4(%arg0: i32) -> (i32, i32, i32) {
    %c0_i32 = arith.constant 0 : i32
    %c0_i32_0 = arith.constant 0 : i32
    %c0_i32_1 = arith.constant 0 : i32
    %c0_i32_2 = arith.constant 0 : i32
    return %c0_i32, %c0_i32_0, %c0_i32_1 : i32, i32, i32
  }
}

</mosaic_0001>

<llo_original>
// kernel: baseline_model_3layer_forward.6
$region0: #{baseline_model_3layer_forward.6}
  #allocation0 [shape = 'u32[]', space=smem, size = 0x4, offset = 0x4, fixed_abs, tag = 'smem constant byte address 0x4 - core index']
  #allocation1 [shape = 'u32[144,128]{1,0:T(1,128)}', space=vmem, size = 0x12000, scoped, tag = 'internal scratch']
  #allocation2 [shape = 'f32[1,128,128]{2,1,0:T(8,128)}', space=vmem, size = 0x10000, scoped, tag = 'scratch operand']
  %s0 = inlined_call_operand.vmem [shape: bf16[1,128,256], index: 0, kind: input, shape index: {}]
  %s1 = inlined_call_operand.vmem [shape: bf16[1,256,128], index: 1, kind: input, shape index: {}]
  %s2 = inlined_call_operand.vmem [shape: f32[1,128], index: 2, kind: input, shape index: {}]
  %s3 = inlined_call_operand.vmem [shape: f32[1,128], index: 3, kind: input, shape index: {}]
  %s4 = inlined_call_operand.vmem [shape: bf16[1,128,128], index: 4, kind: output, shape index: {}]
  %s5 = sld [smem:[#allocation0]]
  $region34: #{baseline_model_3layer_forward.6} parent=0
    _
  %s7 = ssub.s32 1, %s5
  %s8 = scalar_select 0, %s7, %s5
  // Predicated region
  $region2: #{baseline_model_3layer_forward.6} parent=0 // pred_check
    _
  $region3: #{baseline_model_3layer_forward.6} parent=0 // pred_check_branch
    %10 = sbr.rel (0) target = $region5
  $region4: #{baseline_model_3layer_forward.6} parent=0 // pred_region
    _
  $region5: #{baseline_model_3layer_forward.6} parent=0 // pred_fallthru
    _
  // Predicated region
  $region6: #{baseline_model_3layer_forward.6} parent=0 // pred_check
    _
  $region7: #{baseline_model_3layer_forward.6} parent=0 // pred_check_branch
    %12 = sbr.rel (0) target = $region9
  $region8: #{baseline_model_3layer_forward.6} parent=0 // pred_region
    _
  $region9: #{baseline_model_3layer_forward.6} parent=0 // pred_fallthru
    _
  // Predicated region
  $region10: #{baseline_model_3layer_forward.6} parent=0 // pred_check
    _
  $region11: #{baseline_model_3layer_forward.6} parent=0 // pred_check_branch
    %14 = sbr.rel (0) target = $region13
  $region12: #{baseline_model_3layer_forward.6} parent=0 // pred_region
    _
  $region13: #{baseline_model_3layer_forward.6} parent=0 // pred_fallthru
    _
  // Predicated region
  $region14: #{baseline_model_3layer_forward.6} parent=0 // pred_check
    _
  $region15: #{baseline_model_3layer_forward.6} parent=0 // pred_check_branch
    %16 = sbr.rel (0) target = $region17
  $region16: #{baseline_model_3layer_forward.6} parent=0 // pred_region
    _
  $region17: #{baseline_model_3layer_forward.6} parent=0 // pred_fallthru
    _
  %p18 = scmp.eq.s32.totalorder 0, 0
  // Predicated region
  $region18: #{baseline_model_3layer_forward.6} parent=0 // pred_check
    %p19 = pneg %p18
  $region19: #{baseline_model_3layer_forward.6} parent=0 // pred_check_branch
    %21 = sbr.rel (%p19) target = $region21
  $region20: #{baseline_model_3layer_forward.6} parent=0 // pred_region
    %22 = vst [vmem:[#allocation2] sm:$0xff] 0.0
    %23 = vst [vmem:[#allocation2 + $0x8] sm:$0xff] 0.0
    %24 = vst [vmem:[#allocation2 + $0x10] sm:$0xff] 0.0
    %25 = vst [vmem:[#allocation2 + $0x18] sm:$0xff] 0.0
    %26 = vst [vmem:[#allocation2 + $0x20] sm:$0xff] 0.0
    %27 = vst [vmem:[#allocation2 + $0x28] sm:$0xff] 0.0
    %28 = vst [vmem:[#allocation2 + $0x30] sm:$0xff] 0.0
    %29 = vst [vmem:[#allocation2 + $0x38] sm:$0xff] 0.0
    %30 = vst [vmem:[#allocation2 + $0x40] sm:$0xff] 0.0
    %31 = vst [vmem:[#allocation2 + $0x48] sm:$0xff] 0.0
    %32 = vst [vmem:[#allocation2 + $0x50] sm:$0xff] 0.0
    %33 = vst [vmem:[#allocation2 + $0x58] sm:$0xff] 0.0
    %34 = vst [vmem:[#allocation2 + $0x60] sm:$0xff] 0.0
    %35 = vst [vmem:[#allocation2 + $0x68] sm:$0xff] 0.0
    %36 = vst [vmem:[#allocation2 + $0x70] sm:$0xff] 0.0
    %37 = vst [vmem:[#allocation2 + $0x78] sm:$0xff] 0.0
  $region21: #{baseline_model_3layer_forward.6} parent=0 // pred_fallthru
    _
  %v38 = vld [vmem:[#allocation2] sm:$0xff]
  %v39 = vld [vmem:[#allocation2 + $0x8] sm:$0xff]
  %v40 = vld [vmem:[#allocation2 + $0x10] sm:$0xff]
  %v41 = vld [vmem:[#allocation2 + $0x18] sm:$0xff]
  %v42 = vld [vmem:[#allocation2 + $0x20] sm:$0xff]
  %v43 = vld [vmem:[#allocation2 + $0x28] sm:$0xff]
  %v44 = vld [vmem:[#allocation2 + $0x30] sm:$0xff]
  %v45 = vld [vmem:[#allocation2 + $0x38] sm:$0xff]
  %v46 = vld [vmem:[#allocation2 + $0x40] sm:$0xff]
  %v47 = vld [vmem:[#allocation2 + $0x48] sm:$0xff]
  %v48 = vld [vmem:[#allocation2 + $0x50] sm:$0xff]
  %v49 = vld [vmem:[#allocation2 + $0x58] sm:$0xff]
  %v50 = vld [vmem:[#allocation2 + $0x60] sm:$0xff]
  %v51 = vld [vmem:[#allocation2 + $0x68] sm:$0xff]
  %v52 = vld [vmem:[#allocation2 + $0x70] sm:$0xff]
  %v53 = vld [vmem:[#allocation2 + $0x78] sm:$0xff]
  %v54 = vld [vmem:[%s0] sm:$0xff]
  %v55 = vld [vmem:[%s0 + $0x8] sm:$0xff]
  %v56 = vld [vmem:[%s0 + $0x10] sm:$0xff]
  %v57 = vld [vmem:[%s0 + $0x18] sm:$0xff]
  %v58 = vld [vmem:[%s0 + $0x20] sm:$0xff]
  %v59 = vld [vmem:[%s0 + $0x28] sm:$0xff]
  %v60 = vld [vmem:[%s0 + $0x30] sm:$0xff]
  %v61 = vld [vmem:[%s0 + $0x38] sm:$0xff]
  %v62 = vld [vmem:[%s0 + $0x40] sm:$0xff]
  %v63 = vld [vmem:[%s0 + $0x48] sm:$0xff]
  %v64 = vld [vmem:[%s0 + $0x50] sm:$0xff]
  %v65 = vld [vmem:[%s0 + $0x58] sm:$0xff]
  %v66 = vld [vmem:[%s0 + $0x60] sm:$0xff]
  %v67 = vld [vmem:[%s0 + $0x68] sm:$0xff]
  %v68 = vld [vmem:[%s0 + $0x70] sm:$0xff]
  %v69 = vld [vmem:[%s0 + $0x78] sm:$0xff]
  %v70 = vld [vmem:[%s1] sm:$0xf]
  %v71 = vld [vmem:[%s1 + $0x4] sm:$0xf]
  %v72 = vld [vmem:[%s1 + $0x8] sm:$0xf]
  %v73 = vld [vmem:[%s1 + $0xc] sm:$0xf]
  %v74 = vld [vmem:[%s1 + $0x10] sm:$0xf]
  %v75 = vld [vmem:[%s1 + $0x14] sm:$0xf]
  %v76 = vld [vmem:[%s1 + $0x18] sm:$0xf]
  %v77 = vld [vmem:[%s1 + $0x1c] sm:$0xf]
  %v78 = vld [vmem:[%s1 + $0x20] sm:$0xf]
  %v79 = vld [vmem:[%s1 + $0x24] sm:$0xf]
  %v80 = vld [vmem:[%s1 + $0x28] sm:$0xf]
  %v81 = vld [vmem:[%s1 + $0x2c] sm:$0xf]
  %v82 = vld [vmem:[%s1 + $0x30] sm:$0xf]
  %v83 = vld [vmem:[%s1 + $0x34] sm:$0xf]
  %v84 = vld [vmem:[%s1 + $0x38] sm:$0xf]
  %v85 = vld [vmem:[%s1 + $0x3c] sm:$0xf]
  %v86 = vld [vmem:[%s1 + $0x40] sm:$0xf]
  %v87 = vld [vmem:[%s1 + $0x44] sm:$0xf]
  %v88 = vld [vmem:[%s1 + $0x48] sm:$0xf]
  %v89 = vld [vmem:[%s1 + $0x4c] sm:$0xf]
  %v90 = vld [vmem:[%s1 + $0x50] sm:$0xf]
  %v91 = vld [vmem:[%s1 + $0x54] sm:$0xf]
  %v92 = vld [vmem:[%s1 + $0x58] sm:$0xf]
  %v93 = vld [vmem:[%s1 + $0x5c] sm:$0xf]
  %v94 = vld [vmem:[%s1 + $0x60] sm:$0xf]
  %v95 = vld [vmem:[%s1 + $0x64] sm:$0xf]
  %v96 = vld [vmem:[%s1 + $0x68] sm:$0xf]
  %v97 = vld [vmem:[%s1 + $0x6c] sm:$0xf]
  %v98 = vld [vmem:[%s1 + $0x70] sm:$0xf]
  %v99 = vld [vmem:[%s1 + $0x74] sm:$0xf]
  %v100 = vld [vmem:[%s1 + $0x78] sm:$0xf]
  %v101 = vld [vmem:[%s1 + $0x7c] sm:$0xf]
  %v118 = vunpack.c.l.b16 %v54
  %v119 = vunpack.c.h.b16 %v54
  %v120 = vunpack.c.l.b16 %v55
  %v121 = vunpack.c.h.b16 %v55
  %v122 = vunpack.c.l.b16 %v56
  %v123 = vunpack.c.h.b16 %v56
  %v124 = vunpack.c.l.b16 %v57
  %v125 = vunpack.c.h.b16 %v57
  %v126 = vunpack.c.l.b16 %v58
  %v127 = vunpack.c.h.b16 %v58
  %v128 = vunpack.c.l.b16 %v59
  %v129 = vunpack.c.h.b16 %v59
  %v130 = vunpack.c.l.b16 %v60
  %v131 = vunpack.c.h.b16 %v60
  %v132 = vunpack.c.l.b16 %v61
  %v133 = vunpack.c.h.b16 %v61
  %v134 = vunpack.c.l.b16 %v62
  %v135 = vunpack.c.h.b16 %v62
  %v136 = vunpack.c.l.b16 %v63
  %v137 = vunpack.c.h.b16 %v63
  %v138 = vunpack.c.l.b16 %v64
  %v139 = vunpack.c.h.b16 %v64
  %v140 = vunpack.c.l.b16 %v65
  %v141 = vunpack.c.h.b16 %v65
  %v142 = vunpack.c.l.b16 %v66
  %v143 = vunpack.c.h.b16 %v66
  %v144 = vunpack.c.l.b16 %v67
  %v145 = vunpack.c.h.b16 %v67
  %v146 = vunpack.c.l.b16 %v68
  %v147 = vunpack.c.h.b16 %v68
  %v148 = vunpack.c.l.b16 %v69
  %v149 = vunpack.c.h.b16 %v69
  %v150 = vpack.c.b16 %v120, %v118
  %v151 = vpack.c.b16 %v121, %v119
  %v152 = vpack.c.b16 %v124, %v122
  %v153 = vpack.c.b16 %v125, %v123
  %v154 = vpack.c.b16 %v128, %v126
  %v155 = vpack.c.b16 %v129, %v127
  %v156 = vpack.c.b16 %v132, %v130
  %v157 = vpack.c.b16 %v133, %v131
  %v158 = vpack.c.b16 %v136, %v134
  %v159 = vpack.c.b16 %v137, %v135
  %v160 = vpack.c.b16 %v140, %v138
  %v161 = vpack.c.b16 %v141, %v139
  %v162 = vpack.c.b16 %v144, %v142
  %v163 = vpack.c.b16 %v145, %v143
  %v164 = vpack.c.b16 %v148, %v146
  %v165 = vpack.c.b16 %v149, %v147
  %v214 = vunpack.c.l.b16 %v70
  %v215 = vunpack.c.l.b16 %v71
  %v216 = vunpack.c.l.b16 %v72
  %v217 = vunpack.c.l.b16 %v73
  %v218 = vunpack.c.l.b16 %v74
  %v219 = vunpack.c.l.b16 %v75
  %v220 = vunpack.c.l.b16 %v76
  %v221 = vunpack.c.l.b16 %v77
  %v222 = vunpack.c.l.b16 %v78
  %v223 = vunpack.c.l.b16 %v79
  %v224 = vunpack.c.l.b16 %v80
  %v225 = vunpack.c.l.b16 %v81
  %v226 = vunpack.c.l.b16 %v82
  %v227 = vunpack.c.l.b16 %v83
  %v228 = vunpack.c.l.b16 %v84
  %v229 = vunpack.c.l.b16 %v85
  %v230 = vunpack.c.l.b16 %v86
  %v231 = vunpack.c.l.b16 %v87
  %v232 = vunpack.c.l.b16 %v88
  %v233 = vunpack.c.l.b16 %v89
  %v234 = vunpack.c.l.b16 %v90
  %v235 = vunpack.c.l.b16 %v91
  %v236 = vunpack.c.l.b16 %v92
  %v237 = vunpack.c.l.b16 %v93
  %v238 = vunpack.c.l.b16 %v94
  %v239 = vunpack.c.l.b16 %v95
  %v240 = vunpack.c.l.b16 %v96
  %v241 = vunpack.c.l.b16 %v97
  %v242 = vunpack.c.l.b16 %v98
  %v243 = vunpack.c.l.b16 %v99
  %v244 = vunpack.c.l.b16 %v100
  %v245 = vunpack.c.l.b16 %v101
  %v246 = vpack.c.b16 %v215, %v214
  %v247 = vpack.c.b16 %v217, %v216
  %v248 = vpack.c.b16 %v219, %v218
  %v249 = vpack.c.b16 %v221, %v220
  %v250 = vpack.c.b16 %v223, %v222
  %v251 = vpack.c.b16 %v225, %v224
  %v252 = vpack.c.b16 %v227, %v226
  %v253 = vpack.c.b16 %v229, %v228
  %v254 = vpack.c.b16 %v231, %v230
  %v255 = vpack.c.b16 %v233, %v232
  %v256 = vpack.c.b16 %v235, %v234
  %v257 = vpack.c.b16 %v237, %v236
  %v258 = vpack.c.b16 %v239, %v238
  %v259 = vpack.c.b16 %v241, %v240
  %v260 = vpack.c.b16 %v243, %v242
  %v261 = vpack.c.b16 %v245, %v244
  %278 = vmatprep.subr.bf16.mxu0 0
  %279 = vmatpush1.bf16.msra.mxu0 %v246
  %280 = vmatprep.subr.bf16.mxu0 0
  %281 = vmatpush1.bf16.msra.mxu0 %v247
  %282 = vmatprep.subr.bf16.mxu0 0
  %283 = vmatpush1.bf16.msra.mxu0 %v248
  %284 = vmatprep.subr.bf16.mxu0 0
  %285 = vmatpush1.bf16.msra.mxu0 %v249
  %286 = vmatprep.subr.bf16.mxu0 0
  %287 = vmatpush1.bf16.msra.mxu0 %v250
  %288 = vmatprep.subr.bf16.mxu0 0
  %289 = vmatpush1.bf16.msra.mxu0 %v251
  %290 = vmatprep.subr.bf16.mxu0 0
  %291 = vmatpush1.bf16.msra.mxu0 %v252
  %292 = vmatprep.subr.bf16.mxu0 0
  %293 = vmatpush1.bf16.msra.mxu0 %v253
  %294 = vmatprep.subr.bf16.mxu0 0
  %295 = vmatpush1.bf16.msra.mxu0 %v254
  %296 = vmatprep.subr.bf16.mxu0 0
  %297 = vmatpush1.bf16.msra.mxu0 %v255
  %298 = vmatprep.subr.bf16.mxu0 0
  %299 = vmatpush1.bf16.msra.mxu0 %v256
  %300 = vmatprep.subr.bf16.mxu0 0
  %301 = vmatpush1.bf16.msra.mxu0 %v257
  %302 = vmatprep.subr.bf16.mxu0 0
  %303 = vmatpush1.bf16.msra.mxu0 %v258
  %304 = vmatprep.subr.bf16.mxu0 0
  %305 = vmatpush1.bf16.msra.mxu0 %v259
  %306 = vmatprep.subr.bf16.mxu0 0
  %307 = vmatpush1.bf16.msra.mxu0 %v260
  %308 = vmatprep.subr.bf16.mxu0 0
  %309 = vmatpush1.bf16.msra.mxu0 %v261
  %310 = vmatprep.mubr.bf16.mxu0 %v151
  %311 = vmatmul.mubr.bf16.gmra.mrb[0].mxu0 %v150
  %v312 = vpop.f32.mrb[0].mxu0
  %v313 = vadd.f32 0.0, %v312
  %v314 = vpop.f32.mrb[0].mxu0
  %v315 = vpop.f32.mrb[0].mxu0
  %v316 = vadd.f32 0.0, %v315
  %v317 = vpop.f32.mrb[0].mxu0
  %318 = vmatprep.mubr.bf16.mxu0 %v153
  %319 = vmatmul.mubr.bf16.gmra.mrb[0].mxu0 %v152
  %v320 = vpop.f32.mrb[0].mxu0
  %v321 = vadd.f32 0.0, %v320
  %v322 = vpop.f32.mrb[0].mxu0
  %v323 = vpop.f32.mrb[0].mxu0
  %v324 = vadd.f32 0.0, %v323
  %v325 = vpop.f32.mrb[0].mxu0
  %326 = vmatprep.mubr.bf16.mxu0 %v155
  %327 = vmatmul.mubr.bf16.gmra.mrb[0].mxu0 %v154
  %v328 = vpop.f32.mrb[0].mxu0
  %v329 = vadd.f32 0.0, %v328
  %v330 = vpop.f32.mrb[0].mxu0
  %v331 = vpop.f32.mrb[0].mxu0
  %v332 = vadd.f32 0.0, %v331
  %v333 = vpop.f32.mrb[0].mxu0
  %334 = vmatprep.mubr.bf16.mxu0 %v157
  %335 = vmatmul.mubr.bf16.gmra.mrb[0].mxu0 %v156
  %v336 = vpop.f32.mrb[0].mxu0
  %v337 = vadd.f32 0.0, %v336
  %v338 = vpop.f32.mrb[0].mxu0
  %v339 = vpop.f32.mrb[0].mxu0
  %v340 = vadd.f32 0.0, %v339
  %v341 = vpop.f32.mrb[0].mxu0
  %342 = vmatprep.mubr.bf16.mxu0 %v159
  %343 = vmatmul.mubr.bf16.gmra.mrb[0].mxu0 %v158
  %v344 = vpop.f32.mrb[0].mxu0
  %v345 = vadd.f32 0.0, %v344
  %v346 = vpop.f32.mrb[0].mxu0
  %v347 = vpop.f32.mrb[0].mxu0
  %v348 = vadd.f32 0.0, %v347
  %v349 = vpop.f32.mrb[0].mxu0
  %350 = vmatprep.mubr.bf16.mxu0 %v161
  %351 = vmatmul.mubr.bf16.gmra.mrb[0].mxu0 %v160
  %v352 = vpop.f32.mrb[0].mxu0
  %v353 = vadd.f32 0.0, %v352
  %v354 = vpop.f32.mrb[0].mxu0
  %v355 = vpop.f32.mrb[0].mxu0
  %v356 = vadd.f32 0.0, %v355
  %v357 = vpop.f32.mrb[0].mxu0
  %358 = vmatprep.mubr.bf16.mxu0 %v163
  %359 = vmatmul.mubr.bf16.gmra.mrb[0].mxu0 %v162
  %v360 = vpop.f32.mrb[0].mxu0
  %v361 = vadd.f32 0.0, %v360
  %v362 = vpop.f32.mrb[0].mxu0
  %v363 = vpop.f32.mrb[0].mxu0
  %v364 = vadd.f32 0.0, %v363
  %v365 = vpop.f32.mrb[0].mxu0
  %366 = vmatprep.mubr.bf16.mxu0 %v165
  %367 = vmatmul.mubr.bf16.gmra.mrb[0].mxu0 %v164
  %v368 = vpop.f32.mrb[0].mxu0
  %v369 = vadd.f32 0.0, %v368
  %v370 = vpop.f32.mrb[0].mxu0
  %v371 = vpop.f32.mrb[0].mxu0
  %v372 = vadd.f32 0.0, %v371
  %v373 = vpop.f32.mrb[0].mxu0
  %374 = vdwg.mxu0
  %v375 = vadd.f32 %v38, %v313
  %v376 = vadd.f32 %v39, %v316
  %v377 = vadd.f32 %v40, %v321
  %v378 = vadd.f32 %v41, %v324
  %v379 = vadd.f32 %v42, %v329
  %v380 = vadd.f32 %v43, %v332
  %v381 = vadd.f32 %v44, %v337
  %v382 = vadd.f32 %v45, %v340
  %v383 = vadd.f32 %v46, %v345
  %v384 = vadd.f32 %v47, %v348
  %v385 = vadd.f32 %v48, %v353
  %v386 = vadd.f32 %v49, %v356
  %v387 = vadd.f32 %v50, %v361
  %v388 = vadd.f32 %v51, %v364
  %v389 = vadd.f32 %v52, %v369
  %v390 = vadd.f32 %v53, %v372
  %391 = vst [vmem:[#allocation2] sm:$0xff] %v375
  %392 = vst [vmem:[#allocation2 + $0x8] sm:$0xff] %v376
  %393 = vst [vmem:[#allocation2 + $0x10] sm:$0xff] %v377
  %394 = vst [vmem:[#allocation2 + $0x18] sm:$0xff] %v378
  %395 = vst [vmem:[#allocation2 + $0x20] sm:$0xff] %v379
  %396 = vst [vmem:[#allocation2 + $0x28] sm:$0xff] %v380
  %397 = vst [vmem:[#allocation2 + $0x30] sm:$0xff] %v381
  %398 = vst [vmem:[#allocation2 + $0x38] sm:$0xff] %v382
  %399 = vst [vmem:[#allocation2 + $0x40] sm:$0xff] %v383
  %400 = vst [vmem:[#allocation2 + $0x48] sm:$0xff] %v384
  %401 = vst [vmem:[#allocation2 + $0x50] sm:$0xff] %v385
  %402 = vst [vmem:[#allocation2 + $0x58] sm:$0xff] %v386
  %403 = vst [vmem:[#allocation2 + $0x60] sm:$0xff] %v387
  %404 = vst [vmem:[#allocation2 + $0x68] sm:$0xff] %v388
  %405 = vst [vmem:[#allocation2 + $0x70] sm:$0xff] %v389
  %406 = vst [vmem:[#allocation2 + $0x78] sm:$0xff] %v390
  // Predicated region
  $region22: #{baseline_model_3layer_forward.6} parent=0 // pred_check
    %p407 = pneg %p18
  $region23: #{baseline_model_3layer_forward.6} parent=0 // pred_check_branch
    %409 = sbr.rel (%p407) target = $region25
  $region24: #{baseline_model_3layer_forward.6} parent=0 // pred_region
    %v410 = vld [vmem:[#allocation2] sm:$0xff]
    %v411 = vld [vmem:[#allocation2 + $0x8] sm:$0xff]
    %v412 = vld [vmem:[#allocation2 + $0x10] sm:$0xff]
    %v413 = vld [vmem:[#allocation2 + $0x18] sm:$0xff]
    %v414 = vld [vmem:[#allocation2 + $0x20] sm:$0xff]
    %v415 = vld [vmem:[#allocation2 + $0x28] sm:$0xff]
    %v416 = vld [vmem:[#allocation2 + $0x30] sm:$0xff]
    %v417 = vld [vmem:[#allocation2 + $0x38] sm:$0xff]
    %v418 = vld [vmem:[#allocation2 + $0x40] sm:$0xff]
    %v419 = vld [vmem:[#allocation2 + $0x48] sm:$0xff]
    %v420 = vld [vmem:[#allocation2 + $0x50] sm:$0xff]
    %v421 = vld [vmem:[#allocation2 + $0x58] sm:$0xff]
    %v422 = vld [vmem:[#allocation2 + $0x60] sm:$0xff]
    %v423 = vld [vmem:[#allocation2 + $0x68] sm:$0xff]
    %v424 = vld [vmem:[#allocation2 + $0x70] sm:$0xff]
    %v425 = vld [vmem:[#allocation2 + $0x78] sm:$0xff]
    %v426 = vadd.f32 %v410, %v411
    %v427 = vadd.f32 %v426, %v412
    %v428 = vadd.f32 %v427, %v413
    %v429 = vadd.f32 %v428, %v414
    %v430 = vadd.f32 %v429, %v415
    %v431 = vadd.f32 %v430, %v416
    %v432 = vadd.f32 %v431, %v417
    %v433 = vadd.f32 %v432, %v418
    %v434 = vadd.f32 %v433, %v419
    %v435 = vadd.f32 %v434, %v420
    %v436 = vadd.f32 %v435, %v421
    %v437 = vadd.f32 %v436, %v422
    %v438 = vadd.f32 %v437, %v423
    %v439 = vadd.f32 %v438, %v424
    %v440 = vadd.f32 %v439, %v425
    %v441 = vrot.slane %v440, 4
    %v442 = vadd.f32 %v440, %v441
    %v443 = vrot.slane %v442, 2
    %v444 = vadd.f32 %v442, %v443
    %v445 = vrot.slane %v444, 1
    %v446 = vadd.f32 %v444, %v445
    %v447 = vmul.f32 %v410, %v410
    %v448 = vmul.f32 %v411, %v411
    %v449 = vmul.f32 %v412, %v412
    %v450 = vmul.f32 %v413, %v413
    %v451 = vmul.f32 %v414, %v414
    %v452 = vmul.f32 %v415, %v415
    %v453 = vmul.f32 %v416, %v416
    %v454 = vmul.f32 %v417, %v417
    %v455 = vmul.f32 %v418, %v418
    %v456 = vmul.f32 %v419, %v419
    %v457 = vmul.f32 %v420, %v420
    %v458 = vmul.f32 %v421, %v421
    %v459 = vmul.f32 %v422, %v422
    %v460 = vmul.f32 %v423, %v423
    %v461 = vmul.f32 %v424, %v424
    %v462 = vmul.f32 %v425, %v425
    %v463 = vadd.f32 %v447, %v448
    %v464 = vadd.f32 %v463, %v449
    %v465 = vadd.f32 %v464, %v450
    %v466 = vadd.f32 %v465, %v451
    %v467 = vadd.f32 %v466, %v452
    %v468 = vadd.f32 %v467, %v453
    %v469 = vadd.f32 %v468, %v454
    %v470 = vadd.f32 %v469, %v455
    %v471 = vadd.f32 %v470, %v456
    %v472 = vadd.f32 %v471, %v457
    %v473 = vadd.f32 %v472, %v458
    %v474 = vadd.f32 %v473, %v459
    %v475 = vadd.f32 %v474, %v460
    %v476 = vadd.f32 %v475, %v461
    %v477 = vadd.f32 %v476, %v462
    %v478 = vrot.slane %v477, 4
    %v479 = vadd.f32 %v477, %v478
    %v480 = vrot.slane %v479, 2
    %v481 = vadd.f32 %v479, %v480
    %v482 = vrot.slane %v481, 1
    %v483 = vadd.f32 %v481, %v482
    %v484 = vmul.f32 %v446, 0.0078125
    %v485 = vmul.f32 %v483, 0.0078125
    %v486 = vmul.f32 %v484, %v484
    %v487 = vsub.f32 %v485, %v486
    %v488 = vsub.f32 %v410, %v484
    %v489 = vsub.f32 %v411, %v484
    %v490 = vsub.f32 %v412, %v484
    %v491 = vsub.f32 %v413, %v484
    %v492 = vsub.f32 %v414, %v484
    %v493 = vsub.f32 %v415, %v484
    %v494 = vsub.f32 %v416, %v484
    %v495 = vsub.f32 %v417, %v484
    %v496 = vsub.f32 %v418, %v484
    %v497 = vsub.f32 %v419, %v484
    %v498 = vsub.f32 %v420, %v484
    %v499 = vsub.f32 %v421, %v484
    %v500 = vsub.f32 %v422, %v484
    %v501 = vsub.f32 %v423, %v484
    %v502 = vsub.f32 %v424, %v484
    %v503 = vsub.f32 %v425, %v484
    %v504 = vadd.f32 %v487, 1e-05
    %v505 = vrsqrt.pop %v504
    %v506 = vld [vmem:[%s2] sm:$0x1]
    %v507 = vmul.f32 %v505, %v506
    %v508 = vlaneseq
    %v509 = vshrl.u32 %v508, 7
    %v510 = vsub.s32 0, %v509
    %v511 = vrot.slane %v507, %v510
    %v512 = vmul.f32 %v488, %v511
    %v513 = vmul.f32 %v489, %v511
    %v514 = vmul.f32 %v490, %v511
    %v515 = vmul.f32 %v491, %v511
    %v516 = vmul.f32 %v492, %v511
    %v517 = vmul.f32 %v493, %v511
    %v518 = vmul.f32 %v494, %v511
    %v519 = vmul.f32 %v495, %v511
    %v520 = vmul.f32 %v496, %v511
    %v521 = vmul.f32 %v497, %v511
    %v522 = vmul.f32 %v498, %v511
    %v523 = vmul.f32 %v499, %v511
    %v524 = vmul.f32 %v500, %v511
    %v525 = vmul.f32 %v501, %v511
    %v526 = vmul.f32 %v502, %v511
    %v527 = vmul.f32 %v503, %v511
    %v528 = vld [vmem:[%s3] sm:$0x1]
    %v530 = vlaneseq
    %v531 = vshrl.u32 %v530, 7
    %v532 = vsub.s32 0, %v531
    %v533 = vrot.slane %v528, %v532
    %v535 = vadd.f32 %v512, %v533
    %v536 = vadd.f32 %v513, %v533
    %v537 = vadd.f32 %v514, %v533
    %v538 = vadd.f32 %v515, %v533
    %v539 = vadd.f32 %v516, %v533
    %v540 = vadd.f32 %v517, %v533
    %v541 = vadd.f32 %v518, %v533
    %v542 = vadd.f32 %v519, %v533
    %v543 = vadd.f32 %v520, %v533
    %v544 = vadd.f32 %v521, %v533
    %v545 = vadd.f32 %v522, %v533
    %v546 = vadd.f32 %v523, %v533
    %v547 = vadd.f32 %v524, %v533
    %v548 = vadd.f32 %v525, %v533
    %v549 = vadd.f32 %v526, %v533
    %v550 = vadd.f32 %v527, %v533
    %v551 = vmax.f32 %v535, 0.0
    %v552 = vmax.f32 %v536, 0.0
    %v553 = vmax.f32 %v537, 0.0
    %v554 = vmax.f32 %v538, 0.0
    %v555 = vmax.f32 %v539, 0.0
    %v556 = vmax.f32 %v540, 0.0
    %v557 = vmax.f32 %v541, 0.0
    %v558 = vmax.f32 %v542, 0.0
    %v559 = vmax.f32 %v543, 0.0
    %v560 = vmax.f32 %v544, 0.0
    %v561 = vmax.f32 %v545, 0.0
    %v562 = vmax.f32 %v546, 0.0
    %v563 = vmax.f32 %v547, 0.0
    %v564 = vmax.f32 %v548, 0.0
    %v565 = vmax.f32 %v549, 0.0
    %v566 = vmax.f32 %v550, 0.0
    %v567 = vpack.c.bf16 %v552, %v551
    %v568 = vpack.c.bf16 %v554, %v553
    %v569 = vpack.c.bf16 %v556, %v555
    %v570 = vpack.c.bf16 %v558, %v557
    %v571 = vpack.c.bf16 %v560, %v559
    %v572 = vpack.c.bf16 %v562, %v561
    %v573 = vpack.c.bf16 %v564, %v563
    %v574 = vpack.c.bf16 %v566, %v565
    %v583 = vunpack.c.l.b16 %v567
    %v584 = vunpack.c.h.b16 %v567
    %v585 = vunpack.c.l.b16 %v568
    %v586 = vunpack.c.h.b16 %v568
    %v587 = vunpack.c.l.b16 %v569
    %v588 = vunpack.c.h.b16 %v569
    %v589 = vunpack.c.l.b16 %v570
    %v590 = vunpack.c.h.b16 %v570
    %v591 = vunpack.c.l.b16 %v571
    %v592 = vunpack.c.h.b16 %v571
    %v593 = vunpack.c.l.b16 %v572
    %v594 = vunpack.c.h.b16 %v572
    %v595 = vunpack.c.l.b16 %v573
    %v596 = vunpack.c.h.b16 %v573
    %v597 = vunpack.c.l.b16 %v574
    %v598 = vunpack.c.h.b16 %v574
    %v599 = vpack.c.b16 %v583, %v583
    %v600 = vpack.c.b16 %v584, %v584
    %v601 = vpack.c.b16 %v585, %v585
    %v602 = vpack.c.b16 %v586, %v586
    %v603 = vpack.c.b16 %v587, %v587
    %v604 = vpack.c.b16 %v588, %v588
    %v605 = vpack.c.b16 %v589, %v589
    %v606 = vpack.c.b16 %v590, %v590
    %v607 = vpack.c.b16 %v591, %v591
    %v608 = vpack.c.b16 %v592, %v592
    %v609 = vpack.c.b16 %v593, %v593
    %v610 = vpack.c.b16 %v594, %v594
    %v611 = vpack.c.b16 %v595, %v595
    %v612 = vpack.c.b16 %v596, %v596
    %v613 = vpack.c.b16 %v597, %v597
    %v614 = vpack.c.b16 %v598, %v598
    %631 = vst [vmem:[%s4] sm:$0xf] %v599
    %632 = vst [vmem:[%s4 + $0x4] sm:$0xf] %v600
    %633 = vst [vmem:[%s4 + $0x8] sm:$0xf] %v601
    %634 = vst [vmem:[%s4 + $0xc] sm:$0xf] %v602
    %635 = vst [vmem:[%s4 + $0x10] sm:$0xf] %v603
    %636 = vst [vmem:[%s4 + $0x14] sm:$0xf] %v604
    %637 = vst [vmem:[%s4 + $0x18] sm:$0xf] %v605
    %638 = vst [vmem:[%s4 + $0x1c] sm:$0xf] %v606
    %639 = vst [vmem:[%s4 + $0x20] sm:$0xf] %v607
    %640 = vst [vmem:[%s4 + $0x24] sm:$0xf] %v608
    %641 = vst [vmem:[%s4 + $0x28] sm:$0xf] %v609
    %642 = vst [vmem:[%s4 + $0x2c] sm:$0xf] %v610
    %643 = vst [vmem:[%s4 + $0x30] sm:$0xf] %v611
    %644 = vst [vmem:[%s4 + $0x34] sm:$0xf] %v612
    %645 = vst [vmem:[%s4 + $0x38] sm:$0xf] %v613
    %646 = vst [vmem:[%s4 + $0x3c] sm:$0xf] %v614
  $region25: #{baseline_model_3layer_forward.6} parent=0 // pred_fallthru
    _
  // Predicated region
  $region26: #{baseline_model_3layer_forward.6} parent=0 // pred_check
    _
  $region27: #{baseline_model_3layer_forward.6} parent=0 // pred_check_branch
    %648 = sbr.rel (0) target = $region29
  $region28: #{baseline_model_3layer_forward.6} parent=0 // pred_region
    _
  $region29: #{baseline_model_3layer_forward.6} parent=0 // pred_fallthru
    _
  // Predicated region
  $region30: #{baseline_model_3layer_forward.6} parent=0 // pred_check
    _
  $region31: #{baseline_model_3layer_forward.6} parent=0 // pred_check_branch
    %650 = sbr.rel (0) target = $region33
  $region32: #{baseline_model_3layer_forward.6} parent=0 // pred_region
    _
  $region33: #{baseline_model_3layer_forward.6} parent=0 // pred_fallthru
    _

// kernel: baseline_model_3layer_forward.7
$region0: #{baseline_model_3layer_forward.7}
  #allocation0 [shape = 'u32[]', space=smem, size = 0x4, offset = 0x4, fixed_abs, tag = 'smem constant byte address 0x4 - core index']
  #allocation1 [shape = 'u32[144,128]{1,0:T(1,128)}', space=vmem, size = 0x12000, scoped, tag = 'internal scratch']
  #allocation2 [shape = 'f32[1,32,128]{2,1,0:T(8,128)}', space=vmem, size = 0x4000, scoped, tag = 'scratch operand']
  %s0 = inlined_call_operand.vmem [shape: bf16[1,32,1024], index: 0, kind: input, shape index: {}]
  %s1 = inlined_call_operand.vmem [shape: bf16[1,1024,128], index: 1, kind: input, shape index: {}]
  %s2 = inlined_call_operand.vmem [shape: f32[1,128], index: 2, kind: input, shape index: {}]
  %s3 = inlined_call_operand.vmem [shape: f32[1,128], index: 3, kind: input, shape index: {}]
  %s4 = inlined_call_operand.vmem [shape: bf16[1,32,128], index: 4, kind: output, shape index: {}]
  %s5 = sld [smem:[#allocation0]]
  $region95: #{baseline_model_3layer_forward.7} parent=0
    _
  %s7 = ssub.s32 1, %s5
  %s8 = scalar_select 0, %s7, %s5
  $region1: #{baseline_model_3layer_forward.7} parent=0
    #allocation3 [shape = 'u8[32768]{0}', space=vmem, size = 0x8000, scoped, tag = 'input window, operand 0']
    loop: start=0, step=1, limit=6
    $region2: #{baseline_model_3layer_forward.7} parent=1 // loop_pre_header
      _
    $region3: #{baseline_model_3layer_forward.7} parent=1 // loop_header
      %s10 = sphi 0, %s14
      %p11 = scmp.ge.s32.totalorder %s10, 6
      %s20 = sphi 0, %s22
      %s23 = sphi 0, %s20
      %s24 = sphi 0, %s23
      %s40 = sphi 0, %s24
      %s46 = sphi 0, %s48
      %s49 = sphi 0, %s46
      %s50 = sphi 0, %s49
      %s66 = sphi 0, %s50
      %s70 = sphi 0, %s70
      %s72 = sphi 0, %s70
      %s73 = sphi 0, %s72
      %s87 = sphi 0, %s73
      %s91 = sphi 0, %s91
      %s93 = sphi 0, %s91
      %s94 = sphi 0, %s93
      %s108 = sphi 0, %s94
      %s112 = sphi 0, %s112
      %s114 = sphi 0, %s112
      %s115 = sphi 0, %s114
      %s129 = sphi 0, %s115
    $region4: #{baseline_model_3layer_forward.7} parent=1 // loop_header_branch
      %13 = sbr.rel (%p11) target = $region8
    $region5: #{baseline_model_3layer_forward.7} parent=1 // loop_body
      %s15 = ssub.s32 %s10, 1
      %s16 = ssub.s32 %s10, 2
      %s17 = sadd.s32 %s10, 1
      %s18 = ssub.s32 %s10, %s17
      %p19 = scmp.eq.s32.totalorder %s18, 0
      %s21 = sadd.s32 %s20, 1
      %s22 = scalar_select %p19, %s20, %s21
      %p25 = pneg %p19
      %p26 = scmp.eq.s32.totalorder %s10, 3
      %p27 = por %p25, %p26
      %p28 = scmp.ne.s32.totalorder %s20, %s23
      %p29 = scmp.eq.s32.totalorder %s10, 0
      %p30 = por %p28, %p29
      %p31 = scmp.ne.s32.totalorder %s20, %s23
      %p32 = scmp.eq.s32.totalorder %s15, 3
      %p33 = por %p31, %p32
      %p34 = scmp.ne.s32.totalorder %s23, %s24
      %p35 = scmp.eq.s32.totalorder %s15, 0
      %p36 = por %p34, %p35
      %p37 = scmp.ne.s32.totalorder %s23, %s24
      %p38 = scmp.eq.s32.totalorder %s16, 3
      %p39 = por %p37, %p38
      %p41 = scmp.ne.s32.totalorder %s24, %s40
      %p42 = scmp.eq.s32.totalorder %s16, 0
      %p43 = por %p41, %p42
      %s44 = ssub.s32 %s10, %s17
      %p45 = scmp.eq.s32.totalorder %s44, 0
      %s47 = sadd.s32 %s46, 1
      %s48 = scalar_select %p45, %s46, %s47
      %p51 = pneg %p45
      %p52 = scmp.eq.s32.totalorder %s10, 3
      %p53 = por %p51, %p52
      %p54 = scmp.ne.s32.totalorder %s46, %s49
      %p55 = scmp.eq.s32.totalorder %s10, 0
      %p56 = por %p54, %p55
      %p57 = scmp.ne.s32.totalorder %s46, %s49
      %p58 = scmp.eq.s32.totalorder %s15, 3
      %p59 = por %p57, %p58
      %p60 = scmp.ne.s32.totalorder %s49, %s50
      %p61 = scmp.eq.s32.totalorder %s15, 0
      %p62 = por %p60, %p61
      %p63 = scmp.ne.s32.totalorder %s49, %s50
      %p64 = scmp.eq.s32.totalorder %s16, 3
      %p65 = por %p63, %p64
      %p67 = scmp.ne.s32.totalorder %s50, %s66
      %p68 = scmp.eq.s32.totalorder %s16, 0
      %p69 = por %p67, %p68
      %s71 = sadd.s32 %s70, 1
      %p74 = scmp.eq.s32.totalorder %s10, 3
      %p75 = scmp.ne.s32.totalorder %s70, %s72
      %p76 = scmp.eq.s32.totalorder %s10, 0
      %p77 = por %p75, %p76
      %p78 = scmp.ne.s32.totalorder %s70, %s72
      %p79 = scmp.eq.s32.totalorder %s15, 3
      %p80 = por %p78, %p79
      %p81 = scmp.ne.s32.totalorder %s72, %s73
      %p82 = scmp.eq.s32.totalorder %s15, 0
      %p83 = por %p81, %p82
      %p84 = scmp.ne.s32.totalorder %s72, %s73
      %p85 = scmp.eq.s32.totalorder %s16, 3
      %p86 = por %p84, %p85
      %p88 = scmp.ne.s32.totalorder %s73, %s87
      %p89 = scmp.eq.s32.totalorder %s16, 0
      %p90 = por %p88, %p89
      %s92 = sadd.s32 %s91, 1
      %p95 = scmp.eq.s32.totalorder %s10, 3
      %p96 = scmp.ne.s32.totalorder %s91, %s93
      %p97 = scmp.eq.s32.totalorder %s10, 0
      %p98 = por %p96, %p97
      %p99 = scmp.ne.s32.totalorder %s91, %s93
      %p100 = scmp.eq.s32.totalorder %s15, 3
      %p101 = por %p99, %p100
      %p102 = scmp.ne.s32.totalorder %s93, %s94
      %p103 = scmp.eq.s32.totalorder %s15, 0
      %p104 = por %p102, %p103
      %p105 = scmp.ne.s32.totalorder %s93, %s94
      %p106 = scmp.eq.s32.totalorder %s16, 3
      %p107 = por %p105, %p106
      %p109 = scmp.ne.s32.totalorder %s94, %s108
      %p110 = scmp.eq.s32.totalorder %s16, 0
      %p111 = por %p109, %p110
      %s113 = sadd.s32 %s112, 1
      %p116 = scmp.eq.s32.totalorder %s10, 3
      %p117 = scmp.ne.s32.totalorder %s112, %s114
      %p118 = scmp.eq.s32.totalorder %s10, 0
      %p119 = por %p117, %p118
      %p120 = scmp.ne.s32.totalorder %s112, %s114
      %p121 = scmp.eq.s32.totalorder %s15, 3
      %p122 = por %p120, %p121
      %p123 = scmp.ne.s32.totalorder %s114, %s115
      %p124 = scmp.eq.s32.totalorder %s15, 0
      %p125 = por %p123, %p124
      %p126 = scmp.ne.s32.totalorder %s114, %s115
      %p127 = scmp.eq.s32.totalorder %s16, 3
      %p128 = por %p126, %p127
      %p130 = scmp.ne.s32.totalorder %s115, %s129
      %p131 = scmp.eq.s32.totalorder %s16, 0
      %p132 = por %p130, %p131
      %p133 = scmp.le.s32.totalorder 1, %s10
      %p134 = scmp.lt.s32.totalorder %s10, 5
      %p135 = pnand %p133, %p134
      %p136 = pneg %p135
      // Predicated region
      $region9: #{baseline_model_3layer_forward.7} parent=5 // pred_check
        _
      $region10: #{baseline_model_3layer_forward.7} parent=5 // pred_check_branch
        %138 = sbr.rel (%p135) target = $region12
      $region11: #{baseline_model_3layer_forward.7} parent=5 // pred_region
        %s139 = ssub.s32 %s10, 1
        // Predicated region
        $region13: #{baseline_model_3layer_forward.7} parent=11 // pred_check
          %p140 = pneg %p83
        $region14: #{baseline_model_3layer_forward.7} parent=11 // pred_check_branch
          %142 = sbr.rel (%p140) target = $region16
        $region15: #{baseline_model_3layer_forward.7} parent=11 // pred_region
          _
        $region16: #{baseline_model_3layer_forward.7} parent=11 // pred_fallthru
          _
        // Predicated region
        $region17: #{baseline_model_3layer_forward.7} parent=11 // pred_check
          %p143 = pneg %p104
        $region18: #{baseline_model_3layer_forward.7} parent=11 // pred_check_branch
          %145 = sbr.rel (%p143) target = $region20
        $region19: #{baseline_model_3layer_forward.7} parent=11 // pred_region
          _
        $region20: #{baseline_model_3layer_forward.7} parent=11 // pred_fallthru
          _
      $region12: #{baseline_model_3layer_forward.7} parent=5 // pred_fallthru
        _
      %p146 = scmp.lt.s32.totalorder %s10, 4
      // Predicated region
      $region21: #{baseline_model_3layer_forward.7} parent=5 // pred_check
        %p147 = pneg %p146
      $region22: #{baseline_model_3layer_forward.7} parent=5 // pred_check_branch
        %149 = sbr.rel (%p147) target = $region24
      $region23: #{baseline_model_3layer_forward.7} parent=5 // pred_region
        // Predicated region
        $region25: #{baseline_model_3layer_forward.7} parent=23 // pred_check
          %p150 = pneg %p30
        $region26: #{baseline_model_3layer_forward.7} parent=23 // pred_check_branch
          %152 = sbr.rel (%p150) target = $region28
        $region27: #{baseline_model_3layer_forward.7} parent=23 // pred_region
          %s153 = sand.u32 %s20, 1
          %s154 = sand.u32 %s20, 1
          %s155 = smul.addr %s154, 32
          %s156 = scalar_lea.vmem [#allocation3], %s155
          %s157 = smul.u32 2, %s10
          %s158 = smul.addr %s157, 4
          %s159 = scalar_lea.vmem %s0, %s158
          // Predicated region
          $region29: #{baseline_model_3layer_forward.7} parent=27 // pred_check
            _
          $region30: #{baseline_model_3layer_forward.7} parent=27 // pred_check_branch
            %161 = sbr.rel (0) target = $region32
          $region31: #{baseline_model_3layer_forward.7} parent=27 // pred_region
            // Predicated region
            $region33: #{baseline_model_3layer_forward.7} parent=31 // pred_check
              _
            $region34: #{baseline_model_3layer_forward.7} parent=31 // pred_check_branch
              %163 = sbr.rel (0) target = $region36
            $region35: #{baseline_model_3layer_forward.7} parent=31 // pred_region
              // Predicated region
              $region48: #{baseline_model_3layer_forward.7} parent=35 // pred_check
                _
              $region49: #{baseline_model_3layer_forward.7} parent=35 // pred_check_branch
                %184 = sbr.rel (0) target = $region51
              $region50: #{baseline_model_3layer_forward.7} parent=35 // pred_region
                loop: start=0, step=1, limit=1
                $region52: #{baseline_model_3layer_forward.7} parent=50 // loop_pre_header
                  _
                $region53: #{baseline_model_3layer_forward.7} parent=50 // loop_header
                  %s186 = sphi 0, %s190
                  %p187 = scmp.ge.s32.totalorder %s186, 1
                  %s191 = sphi %s159, %s159
                  %s192 = sphi %s156, %s156
                $region54: #{baseline_model_3layer_forward.7} parent=50 // loop_header_branch
                  %189 = sbr.rel (%p187) target = $region58
                $region55: #{baseline_model_3layer_forward.7} parent=50 // loop_body
                  %v193 = vld [vmem:[%s191] sm:$0xff]
                  %194 = vst [vmem:[%s192] sm:$0xff] %v193
                  %v195 = vld [vmem:[%s191 + $0x20] sm:$0xff]
                  %196 = vst [vmem:[%s192 + $0x8] sm:$0xff] %v195
                  %v197 = vld [vmem:[%s191 + $0x40] sm:$0xff]
                  %198 = vst [vmem:[%s192 + $0x10] sm:$0xff] %v197
                  %v199 = vld [vmem:[%s191 + $0x60] sm:$0xff]
                  %200 = vst [vmem:[%s192 + $0x18] sm:$0xff] %v199
                $region56: #{baseline_model_3layer_forward.7} parent=50 // loop_footer
                  %s190 = sadd.s32 1, %s186
                $region57: #{baseline_model_3layer_forward.7} parent=50 // loop_footer_branch
                  %185 = sbr.rel target = $region53
                $region58: #{baseline_model_3layer_forward.7} parent=50 // loop_exit
                  _
              $region51: #{baseline_model_3layer_forward.7} parent=35 // pred_fallthru
                _
              // Predicated region
              $region59: #{baseline_model_3layer_forward.7} parent=35 // pred_check
                _
              $region60: #{baseline_model_3layer_forward.7} parent=35 // pred_check_branch
                %202 = sbr.rel target = $region62
              $region61: #{baseline_model_3layer_forward.7} parent=35 // pred_region
                _
              $region62: #{baseline_model_3layer_forward.7} parent=35 // pred_fallthru
                _
            $region36: #{baseline_model_3layer_forward.7} parent=31 // pred_fallthru
              _
            // Predicated region
            $region37: #{baseline_model_3layer_forward.7} parent=31 // pred_check
              _
            $region38: #{baseline_model_3layer_forward.7} parent=31 // pred_check_branch
              %165 = sbr.rel target = $region40
            $region39: #{baseline_model_3layer_forward.7} parent=31 // pred_region
              loop: start=0, step=1, limit=1
              $region41: #{baseline_model_3layer_forward.7} parent=39 // loop_pre_header
                _
              $region42: #{baseline_model_3layer_forward.7} parent=39 // loop_header
                %s168 = sphi 0, %s172
                %p169 = scmp.ge.s32.totalorder %s168, 1
                %s173 = sphi %s159, %s159
                %s174 = sphi %s156, %s156
              $region43: #{baseline_model_3layer_forward.7} parent=39 // loop_header_branch
                %171 = sbr.rel (%p169) target = $region47
              $region44: #{baseline_model_3layer_forward.7} parent=39 // loop_body
                %v175 = vld [vmem:[%s173] sm:$0xff]
                %176 = vst [vmem:[%s174] sm:$0xff] %v175
                %v177 = vld [vmem:[%s173 + $0x20] sm:$0xff]
                %178 = vst [vmem:[%s174 + $0x8] sm:$0xff] %v177
                %v179 = vld [vmem:[%s173 + $0x40] sm:$0xff]
                %180 = vst [vmem:[%s174 + $0x10] sm:$0xff] %v179
                %v181 = vld [vmem:[%s173 + $0x60] sm:$0xff]
                %182 = vst [vmem:[%s174 + $0x18] sm:$0xff] %v181
              $region45: #{baseline_model_3layer_forward.7} parent=39 // loop_footer
                %s172 = sadd.s32 1, %s168
              $region46: #{baseline_model_3layer_forward.7} parent=39 // loop_footer_branch
                %167 = sbr.rel target = $region42
              $region47: #{baseline_model_3layer_forward.7} parent=39 // loop_exit
                _
            $region40: #{baseline_model_3layer_forward.7} parent=31 // pred_fallthru
              _
          $region32: #{baseline_model_3layer_forward.7} parent=27 // pred_fallthru
            _
          %203 = vnop
        $region28: #{baseline_model_3layer_forward.7} parent=23 // pred_fallthru
          _
        // Predicated region
        $region63: #{baseline_model_3layer_forward.7} parent=23 // pred_check
          %p204 = pneg %p56
        $region64: #{baseline_model_3layer_forward.7} parent=23 // pred_check_branch
          %206 = sbr.rel (%p204) target = $region66
        $region65: #{baseline_model_3layer_forward.7} parent=23 // pred_region
          %s207 = smul.u32 32, %s10
          %p208 = scmp.lt.s32.totalorder %s207, 127
          %s209 = scalar_select %p208, %s207, 127
          %s210 = smul.addr %s209, 4
          %s211 = scalar_lea.vmem %s1, %s210
          %s212 = smul.u32 32, %s10
        $region66: #{baseline_model_3layer_forward.7} parent=23 // pred_fallthru
          _
      $region24: #{baseline_model_3layer_forward.7} parent=5 // pred_fallthru
        _
      %p213 = scmp.le.s32.totalorder 1, %s10
      %p214 = scmp.lt.s32.totalorder %s10, 5
      %p215 = pnand %p213, %p214
      %p216 = pneg %p215
      // Predicated region
      $region67: #{baseline_model_3layer_forward.7} parent=5 // pred_check
        _
      $region68: #{baseline_model_3layer_forward.7} parent=5 // pred_check_branch
        %218 = sbr.rel (%p215) target = $region70
      $region69: #{baseline_model_3layer_forward.7} parent=5 // pred_region
        %s219 = ssub.s32 %s10, 1
        %s220 = sand.u32 %s23, 1
        %s221 = sand.u32 %s23, 1
        %s222 = smul.addr %s221, 32
        %s223 = scalar_lea.vmem [#allocation3], %s222
        // Predicated region
        $region71: #{baseline_model_3layer_forward.7} parent=69 // pred_check
          %p224 = pneg %p36
        $region72: #{baseline_model_3layer_forward.7} parent=69 // pred_check_branch
          %226 = sbr.rel (%p224) target = $region74
        $region73: #{baseline_model_3layer_forward.7} parent=69 // pred_region
          _
        $region74: #{baseline_model_3layer_forward.7} parent=69 // pred_fallthru
          _
        %s227 = sand.u32 %s23, 1
        %s228 = sand.u32 %s23, 1
        %s229 = smul.addr %s228, 32
        %s230 = scalar_lea.vmem [#allocation3], %s229
        %p231 = pneg %p36
        %p232 = pneg %p33
        %s233 = smul.u32 32, %s15
        %p234 = scmp.lt.s32.totalorder %s233, 127
        %s235 = scalar_select %p234, %s233, 127
        %s236 = smul.addr %s235, 4
        %s237 = scalar_lea.vmem %s1, %s236
        %p238 = pneg %p62
        %p239 = pneg %p59
        %p240 = pneg %p83
        %p241 = pneg %p80
        %p242 = pneg %p104
        %p243 = pneg %p101
        %p244 = pneg %p125
        %p245 = pneg %p122
        %s246 = smul.u32 2, %s15
        %s247 = smul.u32 32, %s15
        %p248 = scmp.lt.s32.totalorder %s247, 127
        %s249 = scalar_select %p248, %s247, 127
        %s250 = smul.addr %s249, 4
        %s251 = scalar_lea.vmem %s1, %s250
        %s252 = smul.u32 32, %s15
        %p254 = scmp.eq.s32.totalorder %s15, 0
        // Predicated region
        $region75: #{baseline_model_3layer_forward.7} parent=69 // pred_check
          %p255 = pneg %p254
        $region76: #{baseline_model_3layer_forward.7} parent=69 // pred_check_branch
          %257 = sbr.rel (%p255) target = $region78
        $region77: #{baseline_model_3layer_forward.7} parent=69 // pred_region
          %258 = vst [vmem:[#allocation2] sm:$0xff] 0.0
          %259 = vst [vmem:[#allocation2 + $0x8] sm:$0xff] 0.0
          %260 = vst [vmem:[#allocation2 + $0x10] sm:$0xff] 0.0
          %261 = vst [vmem:[#allocation2 + $0x18] sm:$0xff] 0.0
        $region78: #{baseline_model_3layer_forward.7} parent=69 // pred_fallthru
          _
        %v262 = vld [vmem:[#allocation2] sm:$0xff]
        %v263 = vld [vmem:[#allocation2 + $0x8] sm:$0xff]
        %v264 = vld [vmem:[#allocation2 + $0x10] sm:$0xff]
        %v265 = vld [vmem:[#allocation2 + $0x18] sm:$0xff]
        %v266 = vld [vmem:[%s223] sm:$0xff]
        %v267 = vld [vmem:[%s223 + $0x8] sm:$0xff]
        %v268 = vld [vmem:[%s223 + $0x10] sm:$0xff]
        %v269 = vld [vmem:[%s223 + $0x18] sm:$0xff]
        %v270 = vld [vmem:[%s251] sm:$0xf]
        %v271 = vld [vmem:[%s251 + $0x4] sm:$0xf]
        %v272 = vld [vmem:[%s251 + $0x8] sm:$0xf]
        %v273 = vld [vmem:[%s251 + $0xc] sm:$0xf]
        %v274 = vld [vmem:[%s251 + $0x10] sm:$0xf]
        %v275 = vld [vmem:[%s251 + $0x14] sm:$0xf]
        %v276 = vld [vmem:[%s251 + $0x18] sm:$0xf]
        %v277 = vld [vmem:[%s251 + $0x1c] sm:$0xf]
        %v278 = vld [vmem:[%s251 + $0x20] sm:$0xf]
        %v279 = vld [vmem:[%s251 + $0x24] sm:$0xf]
        %v280 = vld [vmem:[%s251 + $0x28] sm:$0xf]
        %v281 = vld [vmem:[%s251 + $0x2c] sm:$0xf]
        %v282 = vld [vmem:[%s251 + $0x30] sm:$0xf]
        %v283 = vld [vmem:[%s251 + $0x34] sm:$0xf]
        %v284 = vld [vmem:[%s251 + $0x38] sm:$0xf]
        %v285 = vld [vmem:[%s251 + $0x3c] sm:$0xf]
        %v286 = vld [vmem:[%s251 + $0x40] sm:$0xf]
        %v287 = vld [vmem:[%s251 + $0x44] sm:$0xf]
        %v288 = vld [vmem:[%s251 + $0x48] sm:$0xf]
        %v289 = vld [vmem:[%s251 + $0x4c] sm:$0xf]
        %v290 = vld [vmem:[%s251 + $0x50] sm:$0xf]
        %v291 = vld [vmem:[%s251 + $0x54] sm:$0xf]
        %v292 = vld [vmem:[%s251 + $0x58] sm:$0xf]
        %v293 = vld [vmem:[%s251 + $0x5c] sm:$0xf]
        %v294 = vld [vmem:[%s251 + $0x60] sm:$0xf]
        %v295 = vld [vmem:[%s251 + $0x64] sm:$0xf]
        %v296 = vld [vmem:[%s251 + $0x68] sm:$0xf]
        %v297 = vld [vmem:[%s251 + $0x6c] sm:$0xf]
        %v298 = vld [vmem:[%s251 + $0x70] sm:$0xf]
        %v299 = vld [vmem:[%s251 + $0x74] sm:$0xf]
        %v300 = vld [vmem:[%s251 + $0x78] sm:$0xf]
        %v301 = vld [vmem:[%s251 + $0x7c] sm:$0xf]
        %v306 = vunpack.c.l.b16 %v266
        %v307 = vunpack.c.h.b16 %v266
        %v308 = vunpack.c.l.b16 %v267
        %v309 = vunpack.c.h.b16 %v267
        %v310 = vunpack.c.l.b16 %v268
        %v311 = vunpack.c.h.b16 %v268
        %v312 = vunpack.c.l.b16 %v269
        %v313 = vunpack.c.h.b16 %v269
        %v314 = vpack.c.b16 %v308, %v306
        %v315 = vpack.c.b16 %v309, %v307
        %v316 = vpack.c.b16 %v312, %v310
        %v317 = vpack.c.b16 %v313, %v311
        %v354 = vunpack.c.l.b16 %v270
        %v355 = vunpack.c.l.b16 %v271
        %v356 = vunpack.c.l.b16 %v272
        %v357 = vunpack.c.l.b16 %v273
        %v358 = vunpack.c.l.b16 %v274
        %v359 = vunpack.c.l.b16 %v275
        %v360 = vunpack.c.l.b16 %v276
        %v361 = vunpack.c.l.b16 %v277
        %v362 = vunpack.c.l.b16 %v278
        %v363 = vunpack.c.l.b16 %v279
        %v364 = vunpack.c.l.b16 %v280
        %v365 = vunpack.c.l.b16 %v281
        %v366 = vunpack.c.l.b16 %v282
        %v367 = vunpack.c.l.b16 %v283
        %v368 = vunpack.c.l.b16 %v284
        %v369 = vunpack.c.l.b16 %v285
        %v370 = vunpack.c.l.b16 %v286
        %v371 = vunpack.c.l.b16 %v287
        %v372 = vunpack.c.l.b16 %v288
        %v373 = vunpack.c.l.b16 %v289
        %v374 = vunpack.c.l.b16 %v290
        %v375 = vunpack.c.l.b16 %v291
        %v376 = vunpack.c.l.b16 %v292
        %v377 = vunpack.c.l.b16 %v293
        %v378 = vunpack.c.l.b16 %v294
        %v379 = vunpack.c.l.b16 %v295
        %v380 = vunpack.c.l.b16 %v296
        %v381 = vunpack.c.l.b16 %v297
        %v382 = vunpack.c.l.b16 %v298
        %v383 = vunpack.c.l.b16 %v299
        %v384 = vunpack.c.l.b16 %v300
        %v385 = vunpack.c.l.b16 %v301
        %v386 = vpack.c.b16 %v355, %v354
        %v387 = vpack.c.b16 %v357, %v356
        %v388 = vpack.c.b16 %v359, %v358
        %v389 = vpack.c.b16 %v361, %v360
        %v390 = vpack.c.b16 %v363, %v362
        %v391 = vpack.c.b16 %v365, %v364
        %v392 = vpack.c.b16 %v367, %v366
        %v393 = vpack.c.b16 %v369, %v368
        %v394 = vpack.c.b16 %v371, %v370
        %v395 = vpack.c.b16 %v373, %v372
        %v396 = vpack.c.b16 %v375, %v374
        %v397 = vpack.c.b16 %v377, %v376
        %v398 = vpack.c.b16 %v379, %v378
        %v399 = vpack.c.b16 %v381, %v380
        %v400 = vpack.c.b16 %v383, %v382
        %v401 = vpack.c.b16 %v385, %v384
        %418 = vmatprep.subr.bf16.mxu0 0
        %419 = vmatpush1.bf16.msra.mxu0 %v386
        %420 = vmatprep.subr.bf16.mxu0 0
        %421 = vmatpush1.bf16.msra.mxu0 %v387
        %422 = vmatprep.subr.bf16.mxu0 0
        %423 = vmatpush1.bf16.msra.mxu0 %v388
        %424 = vmatprep.subr.bf16.mxu0 0
        %425 = vmatpush1.bf16.msra.mxu0 %v389
        %426 = vmatprep.subr.bf16.mxu0 0
        %427 = vmatpush1.bf16.msra.mxu0 %v390
        %428 = vmatprep.subr.bf16.mxu0 0
        %429 = vmatpush1.bf16.msra.mxu0 %v391
        %430 = vmatprep.subr.bf16.mxu0 0
        %431 = vmatpush1.bf16.msra.mxu0 %v392
        %432 = vmatprep.subr.bf16.mxu0 0
        %433 = vmatpush1.bf16.msra.mxu0 %v393
        %434 = vmatprep.subr.bf16.mxu0 0
        %435 = vmatpush1.bf16.msra.mxu0 %v394
        %436 = vmatprep.subr.bf16.mxu0 0
        %437 = vmatpush1.bf16.msra.mxu0 %v395
        %438 = vmatprep.subr.bf16.mxu0 0
        %439 = vmatpush1.bf16.msra.mxu0 %v396
        %440 = vmatprep.subr.bf16.mxu0 0
        %441 = vmatpush1.bf16.msra.mxu0 %v397
        %442 = vmatprep.subr.bf16.mxu0 0
        %443 = vmatpush1.bf16.msra.mxu0 %v398
        %444 = vmatprep.subr.bf16.mxu0 0
        %445 = vmatpush1.bf16.msra.mxu0 %v399
        %446 = vmatprep.subr.bf16.mxu0 0
        %447 = vmatpush1.bf16.msra.mxu0 %v400
        %448 = vmatprep.subr.bf16.mxu0 0
        %449 = vmatpush1.bf16.msra.mxu0 %v401
        %450 = vmatprep.mubr.bf16.mxu0 %v315
        %451 = vmatmul.mubr.bf16.gmra.mrb[0].mxu0 %v314
        %v452 = vpop.f32.mrb[0].mxu0
        %v453 = vadd.f32 0.0, %v452
        %v454 = vpop.f32.mrb[0].mxu0
        %v455 = vpop.f32.mrb[0].mxu0
        %v456 = vadd.f32 0.0, %v455
        %v457 = vpop.f32.mrb[0].mxu0
        %458 = vmatprep.mubr.bf16.mxu0 %v317
        %459 = vmatmul.mubr.bf16.gmra.mrb[0].mxu0 %v316
        %v460 = vpop.f32.mrb[0].mxu0
        %v461 = vadd.f32 0.0, %v460
        %v462 = vpop.f32.mrb[0].mxu0
        %v463 = vpop.f32.mrb[0].mxu0
        %v464 = vadd.f32 0.0, %v463
        %v465 = vpop.f32.mrb[0].mxu0
        %466 = vdwg.mxu0
        %v467 = vadd.f32 %v262, %v453
        %v468 = vadd.f32 %v263, %v456
        %v469 = vadd.f32 %v264, %v461
        %v470 = vadd.f32 %v265, %v464
        %471 = vst [vmem:[#allocation2] sm:$0xff] %v467
        %472 = vst [vmem:[#allocation2 + $0x8] sm:$0xff] %v468
        %473 = vst [vmem:[#allocation2 + $0x10] sm:$0xff] %v469
        %474 = vst [vmem:[#allocation2 + $0x18] sm:$0xff] %v470
        %p475 = scmp.eq.s32.totalorder %s15, 3
        // Predicated region
        $region79: #{baseline_model_3layer_forward.7} parent=69 // pred_check
          %p476 = pneg %p475
        $region80: #{baseline_model_3layer_forward.7} parent=69 // pred_check_branch
          %478 = sbr.rel (%p476) target = $region82
        $region81: #{baseline_model_3layer_forward.7} parent=69 // pred_region
          %v479 = vld [vmem:[#allocation2] sm:$0xff]
          %v480 = vld [vmem:[#allocation2 + $0x8] sm:$0xff]
          %v481 = vld [vmem:[#allocation2 + $0x10] sm:$0xff]
          %v482 = vld [vmem:[#allocation2 + $0x18] sm:$0xff]
          %v483 = vadd.f32 %v479, %v480
          %v484 = vadd.f32 %v483, %v481
          %v485 = vadd.f32 %v484, %v482
          %v486 = vrot.slane %v485, 4
          %v487 = vadd.f32 %v485, %v486
          %v488 = vrot.slane %v487, 2
          %v489 = vadd.f32 %v487, %v488
          %v490 = vrot.slane %v489, 1
          %v491 = vadd.f32 %v489, %v490
          %v492 = vmul.f32 %v479, %v479
          %v493 = vmul.f32 %v480, %v480
          %v494 = vmul.f32 %v481, %v481
          %v495 = vmul.f32 %v482, %v482
          %v496 = vadd.f32 %v492, %v493
          %v497 = vadd.f32 %v496, %v494
          %v498 = vadd.f32 %v497, %v495
          %v499 = vrot.slane %v498, 4
          %v500 = vadd.f32 %v498, %v499
          %v501 = vrot.slane %v500, 2
          %v502 = vadd.f32 %v500, %v501
          %v503 = vrot.slane %v502, 1
          %v504 = vadd.f32 %v502, %v503
          %v505 = vmul.f32 %v491, 0.03125
          %v506 = vmul.f32 %v504, 0.03125
          %v507 = vmul.f32 %v505, %v505
          %v508 = vsub.f32 %v506, %v507
          %v509 = vsub.f32 %v479, %v505
          %v510 = vsub.f32 %v480, %v505
          %v511 = vsub.f32 %v481, %v505
          %v512 = vsub.f32 %v482, %v505
          %v513 = vadd.f32 %v508, 1e-05
          %v514 = vrsqrt.pop %v513
          %v515 = vld [vmem:[%s2] sm:$0x1]
          %v516 = vmul.f32 %v514, %v515
          %v517 = vlaneseq
          %v518 = vshrl.u32 %v517, 7
          %v519 = vsub.s32 0, %v518
          %v520 = vrot.slane %v516, %v519
          %v521 = vmul.f32 %v509, %v520
          %v522 = vmul.f32 %v510, %v520
          %v523 = vmul.f32 %v511, %v520
          %v524 = vmul.f32 %v512, %v520
          %v525 = vld [vmem:[%s3] sm:$0x1]
          %v527 = vlaneseq
          %v528 = vshrl.u32 %v527, 7
          %v529 = vsub.s32 0, %v528
          %v530 = vrot.slane %v525, %v529
          %v532 = vadd.f32 %v521, %v530
          %v533 = vadd.f32 %v522, %v530
          %v534 = vadd.f32 %v523, %v530
          %v535 = vadd.f32 %v524, %v530
          %v536 = vmax.f32 %v532, 0.0
          %v537 = vmax.f32 %v533, 0.0
          %v538 = vmax.f32 %v534, 0.0
          %v539 = vmax.f32 %v535, 0.0
          %v540 = vpack.c.bf16 %v537, %v536
          %v541 = vpack.c.bf16 %v539, %v538
          %v544 = vunpack.c.l.b16 %v540
          %v545 = vunpack.c.h.b16 %v540
          %v546 = vunpack.c.l.b16 %v541
          %v547 = vunpack.c.h.b16 %v541
          %v548 = vpack.c.b16 %v544, %v544
          %v549 = vpack.c.b16 %v545, %v545
          %v550 = vpack.c.b16 %v546, %v546
          %v551 = vpack.c.b16 %v547, %v547
          %556 = vst [vmem:[%s4] sm:$0xf] %v548
          %557 = vst [vmem:[%s4 + $0x4] sm:$0xf] %v549
          %558 = vst [vmem:[%s4 + $0x8] sm:$0xf] %v550
          %559 = vst [vmem:[%s4 + $0xc] sm:$0xf] %v551
        $region82: #{baseline_model_3layer_forward.7} parent=69 // pred_fallthru
          _
        // Predicated region
        $region83: #{baseline_model_3layer_forward.7} parent=69 // pred_check
          %p560 = pneg %p122
        $region84: #{baseline_model_3layer_forward.7} parent=69 // pred_check_branch
          %562 = sbr.rel (%p560) target = $region86
        $region85: #{baseline_model_3layer_forward.7} parent=69 // pred_region
          _
        $region86: #{baseline_model_3layer_forward.7} parent=69 // pred_fallthru
          _
        // Predicated region
        $region87: #{baseline_model_3layer_forward.7} parent=69 // pred_check
          %p563 = pneg %p122
        $region88: #{baseline_model_3layer_forward.7} parent=69 // pred_check_branch
          %565 = sbr.rel (%p563) target = $region90
        $region89: #{baseline_model_3layer_forward.7} parent=69 // pred_region
          _
        $region90: #{baseline_model_3layer_forward.7} parent=69 // pred_fallthru
          _
      $region70: #{baseline_model_3layer_forward.7} parent=5 // pred_fallthru
        _
      %p566 = scmp.le.s32.totalorder 2, %s10
      // Predicated region
      $region91: #{baseline_model_3layer_forward.7} parent=5 // pred_check
        %p567 = pneg %p566
      $region92: #{baseline_model_3layer_forward.7} parent=5 // pred_check_branch
        %569 = sbr.rel (%p567) target = $region94
      $region93: #{baseline_model_3layer_forward.7} parent=5 // pred_region
        %s570 = ssub.s32 %s10, 2
      $region94: #{baseline_model_3layer_forward.7} parent=5 // pred_fallthru
        _
    $region6: #{baseline_model_3layer_forward.7} parent=1 // loop_footer
      %s14 = sadd.s32 1, %s10
    $region7: #{baseline_model_3layer_forward.7} parent=1 // loop_footer_branch
      %9 = sbr.rel target = $region3
    $region8: #{baseline_model_3layer_forward.7} parent=1 // loop_exit
      _

// kernel: baseline_model_3layer_forward.8
$region0: #{baseline_model_3layer_forward.8}
  #allocation0 [shape = 'u32[]', space=smem, size = 0x4, offset = 0x4, fixed_abs, tag = 'smem constant byte address 0x4 - core index']
  #allocation1 [shape = 'u32[144,128]{1,0:T(1,128)}', space=vmem, size = 0x12000, scoped, tag = 'internal scratch']
  #allocation2 [shape = 'f32[1,8,128]{2,1,0:T(8,128)}', space=vmem, size = 0x1000, scoped, tag = 'scratch operand']
  %s0 = inlined_call_operand.vmem [shape: bf16[1,8,1024], index: 0, kind: input, shape index: {}]
  %s1 = inlined_call_operand.vmem [shape: bf16[1,1024,128], index: 1, kind: input, shape index: {}]
  %s2 = inlined_call_operand.vmem [shape: f32[1,128], index: 2, kind: input, shape index: {}]
  %s3 = inlined_call_operand.vmem [shape: f32[1,128], index: 3, kind: input, shape index: {}]
  %s4 = inlined_call_operand.vmem [shape: bf16[1,8,128], index: 4, kind: output, shape index: {}]
  %s5 = sld [smem:[#allocation0]]
  $region57: #{baseline_model_3layer_forward.8} parent=0
    _
  %s7 = ssub.s32 1, %s5
  %s8 = scalar_select 0, %s7, %s5
  loop: start=0, step=1, limit=6
  $region2: #{baseline_model_3layer_forward.8} parent=0 // loop_pre_header
    _
  $region3: #{baseline_model_3layer_forward.8} parent=0 // loop_header
    %s10 = sphi 0, %s14
    %p11 = scmp.ge.s32.totalorder %s10, 6
    %s20 = sphi 0, %s22
    %s23 = sphi 0, %s20
    %s24 = sphi 0, %s23
    %s40 = sphi 0, %s24
    %s46 = sphi 0, %s48
    %s49 = sphi 0, %s46
    %s50 = sphi 0, %s49
    %s66 = sphi 0, %s50
    %s70 = sphi 0, %s70
    %s72 = sphi 0, %s70
    %s73 = sphi 0, %s72
    %s87 = sphi 0, %s73
    %s91 = sphi 0, %s91
    %s93 = sphi 0, %s91
    %s94 = sphi 0, %s93
    %s108 = sphi 0, %s94
    %s112 = sphi 0, %s112
    %s114 = sphi 0, %s112
    %s115 = sphi 0, %s114
    %s129 = sphi 0, %s115
  $region4: #{baseline_model_3layer_forward.8} parent=0 // loop_header_branch
    %13 = sbr.rel (%p11) target = $region8
  $region5: #{baseline_model_3layer_forward.8} parent=0 // loop_body
    %s15 = ssub.s32 %s10, 1
    %s16 = ssub.s32 %s10, 2
    %s17 = sadd.s32 %s10, 1
    %s18 = ssub.s32 %s10, %s17
    %p19 = scmp.eq.s32.totalorder %s18, 0
    %s21 = sadd.s32 %s20, 1
    %s22 = scalar_select %p19, %s20, %s21
    %p25 = pneg %p19
    %p26 = scmp.eq.s32.totalorder %s10, 3
    %p27 = por %p25, %p26
    %p28 = scmp.ne.s32.totalorder %s20, %s23
    %p29 = scmp.eq.s32.totalorder %s10, 0
    %p30 = por %p28, %p29
    %p31 = scmp.ne.s32.totalorder %s20, %s23
    %p32 = scmp.eq.s32.totalorder %s15, 3
    %p33 = por %p31, %p32
    %p34 = scmp.ne.s32.totalorder %s23, %s24
    %p35 = scmp.eq.s32.totalorder %s15, 0
    %p36 = por %p34, %p35
    %p37 = scmp.ne.s32.totalorder %s23, %s24
    %p38 = scmp.eq.s32.totalorder %s16, 3
    %p39 = por %p37, %p38
    %p41 = scmp.ne.s32.totalorder %s24, %s40
    %p42 = scmp.eq.s32.totalorder %s16, 0
    %p43 = por %p41, %p42
    %s44 = ssub.s32 %s10, %s17
    %p45 = scmp.eq.s32.totalorder %s44, 0
    %s47 = sadd.s32 %s46, 1
    %s48 = scalar_select %p45, %s46, %s47
    %p51 = pneg %p45
    %p52 = scmp.eq.s32.totalorder %s10, 3
    %p53 = por %p51, %p52
    %p54 = scmp.ne.s32.totalorder %s46, %s49
    %p55 = scmp.eq.s32.totalorder %s10, 0
    %p56 = por %p54, %p55
    %p57 = scmp.ne.s32.totalorder %s46, %s49
    %p58 = scmp.eq.s32.totalorder %s15, 3
    %p59 = por %p57, %p58
    %p60 = scmp.ne.s32.totalorder %s49, %s50
    %p61 = scmp.eq.s32.totalorder %s15, 0
    %p62 = por %p60, %p61
    %p63 = scmp.ne.s32.totalorder %s49, %s50
    %p64 = scmp.eq.s32.totalorder %s16, 3
    %p65 = por %p63, %p64
    %p67 = scmp.ne.s32.totalorder %s50, %s66
    %p68 = scmp.eq.s32.totalorder %s16, 0
    %p69 = por %p67, %p68
    %s71 = sadd.s32 %s70, 1
    %p74 = scmp.eq.s32.totalorder %s10, 3
    %p75 = scmp.ne.s32.totalorder %s70, %s72
    %p76 = scmp.eq.s32.totalorder %s10, 0
    %p77 = por %p75, %p76
    %p78 = scmp.ne.s32.totalorder %s70, %s72
    %p79 = scmp.eq.s32.totalorder %s15, 3
    %p80 = por %p78, %p79
    %p81 = scmp.ne.s32.totalorder %s72, %s73
    %p82 = scmp.eq.s32.totalorder %s15, 0
    %p83 = por %p81, %p82
    %p84 = scmp.ne.s32.totalorder %s72, %s73
    %p85 = scmp.eq.s32.totalorder %s16, 3
    %p86 = por %p84, %p85
    %p88 = scmp.ne.s32.totalorder %s73, %s87
    %p89 = scmp.eq.s32.totalorder %s16, 0
    %p90 = por %p88, %p89
    %s92 = sadd.s32 %s91, 1
    %p95 = scmp.eq.s32.totalorder %s10, 3
    %p96 = scmp.ne.s32.totalorder %s91, %s93
    %p97 = scmp.eq.s32.totalorder %s10, 0
    %p98 = por %p96, %p97
    %p99 = scmp.ne.s32.totalorder %s91, %s93
    %p100 = scmp.eq.s32.totalorder %s15, 3
    %p101 = por %p99, %p100
    %p102 = scmp.ne.s32.totalorder %s93, %s94
    %p103 = scmp.eq.s32.totalorder %s15, 0
    %p104 = por %p102, %p103
    %p105 = scmp.ne.s32.totalorder %s93, %s94
    %p106 = scmp.eq.s32.totalorder %s16, 3
    %p107 = por %p105, %p106
    %p109 = scmp.ne.s32.totalorder %s94, %s108
    %p110 = scmp.eq.s32.totalorder %s16, 0
    %p111 = por %p109, %p110
    %s113 = sadd.s32 %s112, 1
    %p116 = scmp.eq.s32.totalorder %s10, 3
    %p117 = scmp.ne.s32.totalorder %s112, %s114
    %p118 = scmp.eq.s32.totalorder %s10, 0
    %p119 = por %p117, %p118
    %p120 = scmp.ne.s32.totalorder %s112, %s114
    %p121 = scmp.eq.s32.totalorder %s15, 3
    %p122 = por %p120, %p121
    %p123 = scmp.ne.s32.totalorder %s114, %s115
    %p124 = scmp.eq.s32.totalorder %s15, 0
    %p125 = por %p123, %p124
    %p126 = scmp.ne.s32.totalorder %s114, %s115
    %p127 = scmp.eq.s32.totalorder %s16, 3
    %p128 = por %p126, %p127
    %p130 = scmp.ne.s32.totalorder %s115, %s129
    %p131 = scmp.eq.s32.totalorder %s16, 0
    %p132 = por %p130, %p131
    %p133 = scmp.le.s32.totalorder 1, %s10
    %p134 = scmp.lt.s32.totalorder %s10, 5
    %p135 = pnand %p133, %p134
    %p136 = pneg %p135
    // Predicated region
    $region9: #{baseline_model_3layer_forward.8} parent=5 // pred_check
      _
    $region10: #{baseline_model_3layer_forward.8} parent=5 // pred_check_branch
      %138 = sbr.rel (%p135) target = $region12
    $region11: #{baseline_model_3layer_forward.8} parent=5 // pred_region
      %s139 = ssub.s32 %s10, 1
      // Predicated region
      $region13: #{baseline_model_3layer_forward.8} parent=11 // pred_check
        %p140 = pneg %p83
      $region14: #{baseline_model_3layer_forward.8} parent=11 // pred_check_branch
        %142 = sbr.rel (%p140) target = $region16
      $region15: #{baseline_model_3layer_forward.8} parent=11 // pred_region
        _
      $region16: #{baseline_model_3layer_forward.8} parent=11 // pred_fallthru
        _
      // Predicated region
      $region17: #{baseline_model_3layer_forward.8} parent=11 // pred_check
        %p143 = pneg %p104
      $region18: #{baseline_model_3layer_forward.8} parent=11 // pred_check_branch
        %145 = sbr.rel (%p143) target = $region20
      $region19: #{baseline_model_3layer_forward.8} parent=11 // pred_region
        _
      $region20: #{baseline_model_3layer_forward.8} parent=11 // pred_fallthru
        _
    $region12: #{baseline_model_3layer_forward.8} parent=5 // pred_fallthru
      _
    %p146 = scmp.lt.s32.totalorder %s10, 4
    // Predicated region
    $region21: #{baseline_model_3layer_forward.8} parent=5 // pred_check
      %p147 = pneg %p146
    $region22: #{baseline_model_3layer_forward.8} parent=5 // pred_check_branch
      %149 = sbr.rel (%p147) target = $region24
    $region23: #{baseline_model_3layer_forward.8} parent=5 // pred_region
      // Predicated region
      $region25: #{baseline_model_3layer_forward.8} parent=23 // pred_check
        %p150 = pneg %p30
      $region26: #{baseline_model_3layer_forward.8} parent=23 // pred_check_branch
        %152 = sbr.rel (%p150) target = $region28
      $region27: #{baseline_model_3layer_forward.8} parent=23 // pred_region
        %s153 = smul.u32 2, %s10
        %p154 = scmp.lt.s32.totalorder %s153, 7
        %s155 = scalar_select %p154, %s153, 7
        %s156 = smul.addr %s155, 4
        %s157 = scalar_lea.vmem %s0, %s156
        %s158 = smul.u32 2, %s10
      $region28: #{baseline_model_3layer_forward.8} parent=23 // pred_fallthru
        _
      // Predicated region
      $region29: #{baseline_model_3layer_forward.8} parent=23 // pred_check
        %p159 = pneg %p56
      $region30: #{baseline_model_3layer_forward.8} parent=23 // pred_check_branch
        %161 = sbr.rel (%p159) target = $region32
      $region31: #{baseline_model_3layer_forward.8} parent=23 // pred_region
        %s162 = smul.u32 32, %s10
        %p163 = scmp.lt.s32.totalorder %s162, 127
        %s164 = scalar_select %p163, %s162, 127
        %s165 = smul.addr %s164, 4
        %s166 = scalar_lea.vmem %s1, %s165
        %s167 = smul.u32 32, %s10
      $region32: #{baseline_model_3layer_forward.8} parent=23 // pred_fallthru
        _
    $region24: #{baseline_model_3layer_forward.8} parent=5 // pred_fallthru
      _
    %p168 = scmp.le.s32.totalorder 1, %s10
    %p169 = scmp.lt.s32.totalorder %s10, 5
    %p170 = pnand %p168, %p169
    %p171 = pneg %p170
    // Predicated region
    $region33: #{baseline_model_3layer_forward.8} parent=5 // pred_check
      _
    $region34: #{baseline_model_3layer_forward.8} parent=5 // pred_check_branch
      %173 = sbr.rel (%p170) target = $region36
    $region35: #{baseline_model_3layer_forward.8} parent=5 // pred_region
      %s174 = ssub.s32 %s10, 1
      %s175 = smul.u32 2, %s15
      %p176 = scmp.lt.s32.totalorder %s175, 7
      %s177 = scalar_select %p176, %s175, 7
      %s178 = smul.addr %s177, 4
      %s179 = scalar_lea.vmem %s0, %s178
      %p180 = pneg %p36
      %p181 = pneg %p33
      %s182 = smul.u32 32, %s15
      %p183 = scmp.lt.s32.totalorder %s182, 127
      %s184 = scalar_select %p183, %s182, 127
      %s185 = smul.addr %s184, 4
      %s186 = scalar_lea.vmem %s1, %s185
      %p187 = pneg %p62
      %p188 = pneg %p59
      %p189 = pneg %p83
      %p190 = pneg %p80
      %p191 = pneg %p104
      %p192 = pneg %p101
      %p193 = pneg %p125
      %p194 = pneg %p122
      %s195 = smul.u32 2, %s15
      %p196 = scmp.lt.s32.totalorder %s195, 7
      %s197 = scalar_select %p196, %s195, 7
      %s198 = smul.addr %s197, 4
      %s199 = scalar_lea.vmem %s0, %s198
      %s200 = smul.u32 2, %s15
      %s201 = smul.u32 32, %s15
      %p202 = scmp.lt.s32.totalorder %s201, 127
      %s203 = scalar_select %p202, %s201, 127
      %s204 = smul.addr %s203, 4
      %s205 = scalar_lea.vmem %s1, %s204
      %s206 = smul.u32 32, %s15
      %p208 = scmp.eq.s32.totalorder %s15, 0
      // Predicated region
      $region37: #{baseline_model_3layer_forward.8} parent=35 // pred_check
        %p209 = pneg %p208
      $region38: #{baseline_model_3layer_forward.8} parent=35 // pred_check_branch
        %211 = sbr.rel (%p209) target = $region40
      $region39: #{baseline_model_3layer_forward.8} parent=35 // pred_region
        %212 = vst [vmem:[#allocation2] sm:$0xff] 0.0
      $region40: #{baseline_model_3layer_forward.8} parent=35 // pred_fallthru
        _
      %v213 = vld [vmem:[#allocation2] sm:$0xff]
      %v214 = vld [vmem:[%s199] sm:$0xff]
      %v215 = vld [vmem:[%s205] sm:$0xf]
      %v216 = vld [vmem:[%s205 + $0x4] sm:$0xf]
      %v217 = vld [vmem:[%s205 + $0x8] sm:$0xf]
      %v218 = vld [vmem:[%s205 + $0xc] sm:$0xf]
      %v219 = vld [vmem:[%s205 + $0x10] sm:$0xf]
      %v220 = vld [vmem:[%s205 + $0x14] sm:$0xf]
      %v221 = vld [vmem:[%s205 + $0x18] sm:$0xf]
      %v222 = vld [vmem:[%s205 + $0x1c] sm:$0xf]
      %v223 = vld [vmem:[%s205 + $0x20] sm:$0xf]
      %v224 = vld [vmem:[%s205 + $0x24] sm:$0xf]
      %v225 = vld [vmem:[%s205 + $0x28] sm:$0xf]
      %v226 = vld [vmem:[%s205 + $0x2c] sm:$0xf]
      %v227 = vld [vmem:[%s205 + $0x30] sm:$0xf]
      %v228 = vld [vmem:[%s205 + $0x34] sm:$0xf]
      %v229 = vld [vmem:[%s205 + $0x38] sm:$0xf]
      %v230 = vld [vmem:[%s205 + $0x3c] sm:$0xf]
      %v231 = vld [vmem:[%s205 + $0x40] sm:$0xf]
      %v232 = vld [vmem:[%s205 + $0x44] sm:$0xf]
      %v233 = vld [vmem:[%s205 + $0x48] sm:$0xf]
      %v234 = vld [vmem:[%s205 + $0x4c] sm:$0xf]
      %v235 = vld [vmem:[%s205 + $0x50] sm:$0xf]
      %v236 = vld [vmem:[%s205 + $0x54] sm:$0xf]
      %v237 = vld [vmem:[%s205 + $0x58] sm:$0xf]
      %v238 = vld [vmem:[%s205 + $0x5c] sm:$0xf]
      %v239 = vld [vmem:[%s205 + $0x60] sm:$0xf]
      %v240 = vld [vmem:[%s205 + $0x64] sm:$0xf]
      %v241 = vld [vmem:[%s205 + $0x68] sm:$0xf]
      %v242 = vld [vmem:[%s205 + $0x6c] sm:$0xf]
      %v243 = vld [vmem:[%s205 + $0x70] sm:$0xf]
      %v244 = vld [vmem:[%s205 + $0x74] sm:$0xf]
      %v245 = vld [vmem:[%s205 + $0x78] sm:$0xf]
      %v246 = vld [vmem:[%s205 + $0x7c] sm:$0xf]
      %v248 = vunpack.c.l.b16 %v214
      %v249 = vunpack.c.h.b16 %v214
      %v250 = vpack.c.b16 %v248, %v248
      %v251 = vpack.c.b16 %v249, %v249
      %v286 = vunpack.c.l.b16 %v215
      %v287 = vunpack.c.l.b16 %v216
      %v288 = vunpack.c.l.b16 %v217
      %v289 = vunpack.c.l.b16 %v218
      %v290 = vunpack.c.l.b16 %v219
      %v291 = vunpack.c.l.b16 %v220
      %v292 = vunpack.c.l.b16 %v221
      %v293 = vunpack.c.l.b16 %v222
      %v294 = vunpack.c.l.b16 %v223
      %v295 = vunpack.c.l.b16 %v224
      %v296 = vunpack.c.l.b16 %v225
      %v297 = vunpack.c.l.b16 %v226
      %v298 = vunpack.c.l.b16 %v227
      %v299 = vunpack.c.l.b16 %v228
      %v300 = vunpack.c.l.b16 %v229
      %v301 = vunpack.c.l.b16 %v230
      %v302 = vunpack.c.l.b16 %v231
      %v303 = vunpack.c.l.b16 %v232
      %v304 = vunpack.c.l.b16 %v233
      %v305 = vunpack.c.l.b16 %v234
      %v306 = vunpack.c.l.b16 %v235
      %v307 = vunpack.c.l.b16 %v236
      %v308 = vunpack.c.l.b16 %v237
      %v309 = vunpack.c.l.b16 %v238
      %v310 = vunpack.c.l.b16 %v239
      %v311 = vunpack.c.l.b16 %v240
      %v312 = vunpack.c.l.b16 %v241
      %v313 = vunpack.c.l.b16 %v242
      %v314 = vunpack.c.l.b16 %v243
      %v315 = vunpack.c.l.b16 %v244
      %v316 = vunpack.c.l.b16 %v245
      %v317 = vunpack.c.l.b16 %v246
      %v318 = vpack.c.b16 %v287, %v286
      %v319 = vpack.c.b16 %v289, %v288
      %v320 = vpack.c.b16 %v291, %v290
      %v321 = vpack.c.b16 %v293, %v292
      %v322 = vpack.c.b16 %v295, %v294
      %v323 = vpack.c.b16 %v297, %v296
      %v324 = vpack.c.b16 %v299, %v298
      %v325 = vpack.c.b16 %v301, %v300
      %v326 = vpack.c.b16 %v303, %v302
      %v327 = vpack.c.b16 %v305, %v304
      %v328 = vpack.c.b16 %v307, %v306
      %v329 = vpack.c.b16 %v309, %v308
      %v330 = vpack.c.b16 %v311, %v310
      %v331 = vpack.c.b16 %v313, %v312
      %v332 = vpack.c.b16 %v315, %v314
      %v333 = vpack.c.b16 %v317, %v316
      %350 = vmatprep.subr.bf16.mxu0 0
      %351 = vmatpush1.bf16.msra.mxu0 %v318
      %352 = vmatprep.subr.bf16.mxu0 0
      %353 = vmatpush1.bf16.msra.mxu0 %v319
      %354 = vmatprep.subr.bf16.mxu0 0
      %355 = vmatpush1.bf16.msra.mxu0 %v320
      %356 = vmatprep.subr.bf16.mxu0 0
      %357 = vmatpush1.bf16.msra.mxu0 %v321
      %358 = vmatprep.subr.bf16.mxu0 0
      %359 = vmatpush1.bf16.msra.mxu0 %v322
      %360 = vmatprep.subr.bf16.mxu0 0
      %361 = vmatpush1.bf16.msra.mxu0 %v323
      %362 = vmatprep.subr.bf16.mxu0 0
      %363 = vmatpush1.bf16.msra.mxu0 %v324
      %364 = vmatprep.subr.bf16.mxu0 0
      %365 = vmatpush1.bf16.msra.mxu0 %v325
      %366 = vmatprep.subr.bf16.mxu0 0
      %367 = vmatpush1.bf16.msra.mxu0 %v326
      %368 = vmatprep.subr.bf16.mxu0 0
      %369 = vmatpush1.bf16.msra.mxu0 %v327
      %370 = vmatprep.subr.bf16.mxu0 0
      %371 = vmatpush1.bf16.msra.mxu0 %v328
      %372 = vmatprep.subr.bf16.mxu0 0
      %373 = vmatpush1.bf16.msra.mxu0 %v329
      %374 = vmatprep.subr.bf16.mxu0 0
      %375 = vmatpush1.bf16.msra.mxu0 %v330
      %376 = vmatprep.subr.bf16.mxu0 0
      %377 = vmatpush1.bf16.msra.mxu0 %v331
      %378 = vmatprep.subr.bf16.mxu0 0
      %379 = vmatpush1.bf16.msra.mxu0 %v332
      %380 = vmatprep.subr.bf16.mxu0 0
      %381 = vmatpush1.bf16.msra.mxu0 %v333
      %382 = vmatprep.mubr.bf16.mxu0 %v251
      %383 = vmatmul.mubr.bf16.gmra.mrb[0].mxu0 %v250
      %v384 = vpop.f32.mrb[0].mxu0
      %v385 = vadd.f32 0.0, %v384
      %v386 = vpop.f32.mrb[0].mxu0
      %v387 = vpop.f32.mrb[0].mxu0
      %v388 = vpop.f32.mrb[0].mxu0
      %389 = vdwg.mxu0
      %v390 = vadd.f32 %v213, %v385
      %391 = vst [vmem:[#allocation2] sm:$0xff] %v390
      %p392 = scmp.eq.s32.totalorder %s15, 3
      // Predicated region
      $region41: #{baseline_model_3layer_forward.8} parent=35 // pred_check
        %p393 = pneg %p392
      $region42: #{baseline_model_3layer_forward.8} parent=35 // pred_check_branch
        %395 = sbr.rel (%p393) target = $region44
      $region43: #{baseline_model_3layer_forward.8} parent=35 // pred_region
        %v396 = vld [vmem:[#allocation2] sm:$0xff]
        %v397 = vrot.slane %v396, 4
        %v398 = vadd.f32 %v396, %v397
        %v399 = vrot.slane %v398, 2
        %v400 = vadd.f32 %v398, %v399
        %v401 = vrot.slane %v400, 1
        %v402 = vadd.f32 %v400, %v401
        %v403 = vmul.f32 %v396, %v396
        %v404 = vrot.slane %v403, 4
        %v405 = vadd.f32 %v403, %v404
        %v406 = vrot.slane %v405, 2
        %v407 = vadd.f32 %v405, %v406
        %v408 = vrot.slane %v407, 1
        %v409 = vadd.f32 %v407, %v408
        %v410 = vmul.f32 %v402, 0.125
        %v411 = vmul.f32 %v409, 0.125
        %v412 = vmul.f32 %v410, %v410
        %v413 = vsub.f32 %v411, %v412
        %v414 = vsub.f32 %v396, %v410
        %v415 = vadd.f32 %v413, 1e-05
        %v416 = vrsqrt.pop %v415
        %v417 = vld [vmem:[%s2] sm:$0x1]
        %v418 = vmul.f32 %v416, %v417
        %v419 = vlaneseq
        %v420 = vshrl.u32 %v419, 7
        %v421 = vsub.s32 0, %v420
        %v422 = vrot.slane %v418, %v421
        %v423 = vmul.f32 %v414, %v422
        %v424 = vld [vmem:[%s3] sm:$0x1]
        %v426 = vlaneseq
        %v427 = vshrl.u32 %v426, 7
        %v428 = vsub.s32 0, %v427
        %v429 = vrot.slane %v424, %v428
        %v431 = vadd.f32 %v423, %v429
        %v432 = vmax.f32 %v431, 0.0
        %v433 = vpack.c.bf16 %v432, %v432
        %434 = vst [vmem:[%s4] sm:$0xf] %v433
      $region44: #{baseline_model_3layer_forward.8} parent=35 // pred_fallthru
        _
      // Predicated region
      $region45: #{baseline_model_3layer_forward.8} parent=35 // pred_check
        %p435 = pneg %p122
      $region46: #{baseline_model_3layer_forward.8} parent=35 // pred_check_branch
        %437 = sbr.rel (%p435) target = $region48
      $region47: #{baseline_model_3layer_forward.8} parent=35 // pred_region
        _
      $region48: #{baseline_model_3layer_forward.8} parent=35 // pred_fallthru
        _
      // Predicated region
      $region49: #{baseline_model_3layer_forward.8} parent=35 // pred_check
        %p438 = pneg %p122
      $region50: #{baseline_model_3layer_forward.8} parent=35 // pred_check_branch
        %440 = sbr.rel (%p438) target = $region52
      $region51: #{baseline_model_3layer_forward.8} parent=35 // pred_region
        _
      $region52: #{baseline_model_3layer_forward.8} parent=35 // pred_fallthru
        _
    $region36: #{baseline_model_3layer_forward.8} parent=5 // pred_fallthru
      _
    %p441 = scmp.le.s32.totalorder 2, %s10
    // Predicated region
    $region53: #{baseline_model_3layer_forward.8} parent=5 // pred_check
      %p442 = pneg %p441
    $region54: #{baseline_model_3layer_forward.8} parent=5 // pred_check_branch
      %444 = sbr.rel (%p442) target = $region56
    $region55: #{baseline_model_3layer_forward.8} parent=5 // pred_region
      %s445 = ssub.s32 %s10, 2
    $region56: #{baseline_model_3layer_forward.8} parent=5 // pred_fallthru
      _
  $region6: #{baseline_model_3layer_forward.8} parent=0 // loop_footer
    %s14 = sadd.s32 1, %s10
  $region7: #{baseline_model_3layer_forward.8} parent=0 // loop_footer_branch
    %9 = sbr.rel target = $region3
  $region8: #{baseline_model_3layer_forward.8} parent=0 // loop_exit
    _

// kernel: baseline_model_3layer_forward.9
$region0: #{baseline_model_3layer_forward.9}
  #allocation0 [shape = 'u32[]', space=smem, size = 0x4, offset = 0x4, fixed_abs, tag = 'smem constant byte address 0x4 - core index']
  #allocation1 [shape = 'u32[144,128]{1,0:T(1,128)}', space=vmem, size = 0x12000, scoped, tag = 'internal scratch']
  #allocation2 [shape = 'f32[4,8,128]{2,1,0:T(8,128)}', space=vmem, size = 0x4000, scoped, tag = 'scratch operand']
  %s0 = inlined_call_operand.vmem [shape: bf16[4,8,128], index: 0, kind: input, shape index: {}]
  %s1 = inlined_call_operand.vmem [shape: bf16[4,128,128], index: 1, kind: input, shape index: {}]
  %s2 = inlined_call_operand.vmem [shape: f32[1,128], index: 2, kind: input, shape index: {}]
  %s3 = inlined_call_operand.vmem [shape: f32[1,128], index: 3, kind: input, shape index: {}]
  %s4 = inlined_call_operand.vmem [shape: bf16[4,8,128], index: 4, kind: output, shape index: {}]
  %s5 = sld [smem:[#allocation0]]
  $region34: #{baseline_model_3layer_forward.9} parent=0
    _
  %s7 = ssub.s32 1, %s5
  %s8 = scalar_select 0, %s7, %s5
  // Predicated region
  $region2: #{baseline_model_3layer_forward.9} parent=0 // pred_check
    _
  $region3: #{baseline_model_3layer_forward.9} parent=0 // pred_check_branch
    %10 = sbr.rel (0) target = $region5
  $region4: #{baseline_model_3layer_forward.9} parent=0 // pred_region
    _
  $region5: #{baseline_model_3layer_forward.9} parent=0 // pred_fallthru
    _
  // Predicated region
  $region6: #{baseline_model_3layer_forward.9} parent=0 // pred_check
    _
  $region7: #{baseline_model_3layer_forward.9} parent=0 // pred_check_branch
    %12 = sbr.rel (0) target = $region9
  $region8: #{baseline_model_3layer_forward.9} parent=0 // pred_region
    _
  $region9: #{baseline_model_3layer_forward.9} parent=0 // pred_fallthru
    _
  // Predicated region
  $region10: #{baseline_model_3layer_forward.9} parent=0 // pred_check
    _
  $region11: #{baseline_model_3layer_forward.9} parent=0 // pred_check_branch
    %14 = sbr.rel (0) target = $region13
  $region12: #{baseline_model_3layer_forward.9} parent=0 // pred_region
    _
  $region13: #{baseline_model_3layer_forward.9} parent=0 // pred_fallthru
    _
  // Predicated region
  $region14: #{baseline_model_3layer_forward.9} parent=0 // pred_check
    _
  $region15: #{baseline_model_3layer_forward.9} parent=0 // pred_check_branch
    %16 = sbr.rel (0) target = $region17
  $region16: #{baseline_model_3layer_forward.9} parent=0 // pred_region
    _
  $region17: #{baseline_model_3layer_forward.9} parent=0 // pred_fallthru
    _
  %p18 = scmp.eq.s32.totalorder 0, 0
  // Predicated region
  $region18: #{baseline_model_3layer_forward.9} parent=0 // pred_check
    %p19 = pneg %p18
  $region19: #{baseline_model_3layer_forward.9} parent=0 // pred_check_branch
    %21 = sbr.rel (%p19) target = $region21
  $region20: #{baseline_model_3layer_forward.9} parent=0 // pred_region
    %22 = vst [vmem:[#allocation2] sm:$0xff] 0.0
    %23 = vst [vmem:[#allocation2 + $0x8] sm:$0xff] 0.0
    %24 = vst [vmem:[#allocation2 + $0x10] sm:$0xff] 0.0
    %25 = vst [vmem:[#allocation2 + $0x18] sm:$0xff] 0.0
  $region21: #{baseline_model_3layer_forward.9} parent=0 // pred_fallthru
    _
  %v26 = vld [vmem:[#allocation2] sm:$0xff]
  %v27 = vld [vmem:[%s0] sm:$0xf]
  %v28 = vld [vmem:[%s1] sm:$0xf]
  %v29 = vld [vmem:[%s1 + $0x4] sm:$0xf]
  %v30 = vld [vmem:[%s1 + $0x8] sm:$0xf]
  %v31 = vld [vmem:[%s1 + $0xc] sm:$0xf]
  %v32 = vld [vmem:[%s1 + $0x10] sm:$0xf]
  %v33 = vld [vmem:[%s1 + $0x14] sm:$0xf]
  %v34 = vld [vmem:[%s1 + $0x18] sm:$0xf]
  %v35 = vld [vmem:[%s1 + $0x1c] sm:$0xf]
  %v36 = vld [vmem:[%s1 + $0x20] sm:$0xf]
  %v37 = vld [vmem:[%s1 + $0x24] sm:$0xf]
  %v38 = vld [vmem:[%s1 + $0x28] sm:$0xf]
  %v39 = vld [vmem:[%s1 + $0x2c] sm:$0xf]
  %v40 = vld [vmem:[%s1 + $0x30] sm:$0xf]
  %v41 = vld [vmem:[%s1 + $0x34] sm:$0xf]
  %v42 = vld [vmem:[%s1 + $0x38] sm:$0xf]
  %v43 = vld [vmem:[%s1 + $0x3c] sm:$0xf]
  %v60 = vunpack.c.l.b16 %v28
  %v61 = vunpack.c.l.b16 %v29
  %v62 = vunpack.c.l.b16 %v30
  %v63 = vunpack.c.l.b16 %v31
  %v64 = vunpack.c.l.b16 %v32
  %v65 = vunpack.c.l.b16 %v33
  %v66 = vunpack.c.l.b16 %v34
  %v67 = vunpack.c.l.b16 %v35
  %v68 = vunpack.c.l.b16 %v36
  %v69 = vunpack.c.l.b16 %v37
  %v70 = vunpack.c.l.b16 %v38
  %v71 = vunpack.c.l.b16 %v39
  %v72 = vunpack.c.l.b16 %v40
  %v73 = vunpack.c.l.b16 %v41
  %v74 = vunpack.c.l.b16 %v42
  %v75 = vunpack.c.l.b16 %v43
  %v76 = vpack.c.b16 %v61, %v60
  %v77 = vpack.c.b16 %v63, %v62
  %v78 = vpack.c.b16 %v65, %v64
  %v79 = vpack.c.b16 %v67, %v66
  %v80 = vpack.c.b16 %v69, %v68
  %v81 = vpack.c.b16 %v71, %v70
  %v82 = vpack.c.b16 %v73, %v72
  %v83 = vpack.c.b16 %v75, %v74
  %92 = vmatprep.subr.bf16.mxu0 0
  %93 = vmatpush1.bf16.msra.mxu0 %v76
  %94 = vmatprep.subr.bf16.mxu0 0
  %95 = vmatpush1.bf16.msra.mxu0 %v77
  %96 = vmatprep.subr.bf16.mxu0 0
  %97 = vmatpush1.bf16.msra.mxu0 %v78
  %98 = vmatprep.subr.bf16.mxu0 0
  %99 = vmatpush1.bf16.msra.mxu0 %v79
  %100 = vmatprep.subr.bf16.mxu0 0
  %101 = vmatpush1.bf16.msra.mxu0 %v80
  %102 = vmatprep.subr.bf16.mxu0 0
  %103 = vmatpush1.bf16.msra.mxu0 %v81
  %104 = vmatprep.subr.bf16.mxu0 0
  %105 = vmatpush1.bf16.msra.mxu0 %v82
  %106 = vmatprep.subr.bf16.mxu0 0
  %107 = vmatpush1.bf16.msra.mxu0 %v83
  %108 = vmatprep.subr.bf16.mxu0 0
  %109 = vmatpush1.bf16.msra.mxu0 0
  %110 = vmatprep.subr.bf16.mxu0 0
  %111 = vmatpush1.bf16.msra.mxu0 0
  %112 = vmatprep.subr.bf16.mxu0 0
  %113 = vmatpush1.bf16.msra.mxu0 0
  %114 = vmatprep.subr.bf16.mxu0 0
  %115 = vmatpush1.bf16.msra.mxu0 0
  %116 = vmatprep.subr.bf16.mxu0 0
  %117 = vmatpush1.bf16.msra.mxu0 0
  %118 = vmatprep.subr.bf16.mxu0 0
  %119 = vmatpush1.bf16.msra.mxu0 0
  %120 = vmatprep.subr.bf16.mxu0 0
  %121 = vmatpush1.bf16.msra.mxu0 0
  %122 = vmatprep.subr.bf16.mxu0 0
  %123 = vmatpush1.bf16.msra.mxu0 0
  %124 = vmatprep.mubr.bf16.mxu0 0
  %125 = vmatmul.mubr.bf16.gmra.mrb[0].mxu0 %v27
  %v126 = vpop.f32.mrb[0].mxu0
  %v127 = vadd.f32 0.0, %v126
  %v128 = vpop.f32.mrb[0].mxu0
  %v129 = vpop.f32.mrb[0].mxu0
  %v130 = vpop.f32.mrb[0].mxu0
  %131 = vdwg.mxu0
  %v132 = vadd.f32 %v26, %v127
  %133 = vst [vmem:[#allocation2] sm:$0xff] %v132
  %s134 = scalar_lea.vmem [#allocation2], 8
  %v135 = vld [vmem:[%s134] sm:$0xff]
  %s136 = scalar_lea.vmem %s0, 4
  %v137 = vld [vmem:[%s136] sm:$0xf]
  %s138 = scalar_lea.vmem %s1, 64
  %v139 = vld [vmem:[%s138] sm:$0xf]
  %v140 = vld [vmem:[%s138 + $0x4] sm:$0xf]
  %v141 = vld [vmem:[%s138 + $0x8] sm:$0xf]
  %v142 = vld [vmem:[%s138 + $0xc] sm:$0xf]
  %v143 = vld [vmem:[%s138 + $0x10] sm:$0xf]
  %v144 = vld [vmem:[%s138 + $0x14] sm:$0xf]
  %v145 = vld [vmem:[%s138 + $0x18] sm:$0xf]
  %v146 = vld [vmem:[%s138 + $0x1c] sm:$0xf]
  %v147 = vld [vmem:[%s138 + $0x20] sm:$0xf]
  %v148 = vld [vmem:[%s138 + $0x24] sm:$0xf]
  %v149 = vld [vmem:[%s138 + $0x28] sm:$0xf]
  %v150 = vld [vmem:[%s138 + $0x2c] sm:$0xf]
  %v151 = vld [vmem:[%s138 + $0x30] sm:$0xf]
  %v152 = vld [vmem:[%s138 + $0x34] sm:$0xf]
  %v153 = vld [vmem:[%s138 + $0x38] sm:$0xf]
  %v154 = vld [vmem:[%s138 + $0x3c] sm:$0xf]
  %v171 = vunpack.c.l.b16 %v139
  %v172 = vunpack.c.l.b16 %v140
  %v173 = vunpack.c.l.b16 %v141
  %v174 = vunpack.c.l.b16 %v142
  %v175 = vunpack.c.l.b16 %v143
  %v176 = vunpack.c.l.b16 %v144
  %v177 = vunpack.c.l.b16 %v145
  %v178 = vunpack.c.l.b16 %v146
  %v179 = vunpack.c.l.b16 %v147
  %v180 = vunpack.c.l.b16 %v148
  %v181 = vunpack.c.l.b16 %v149
  %v182 = vunpack.c.l.b16 %v150
  %v183 = vunpack.c.l.b16 %v151
  %v184 = vunpack.c.l.b16 %v152
  %v185 = vunpack.c.l.b16 %v153
  %v186 = vunpack.c.l.b16 %v154
  %v187 = vpack.c.b16 %v172, %v171
  %v188 = vpack.c.b16 %v174, %v173
  %v189 = vpack.c.b16 %v176, %v175
  %v190 = vpack.c.b16 %v178, %v177
  %v191 = vpack.c.b16 %v180, %v179
  %v192 = vpack.c.b16 %v182, %v181
  %v193 = vpack.c.b16 %v184, %v183
  %v194 = vpack.c.b16 %v186, %v185
  %203 = vmatprep.subr.bf16.mxu0 0
  %204 = vmatpush1.bf16.msra.mxu0 %v187
  %205 = vmatprep.subr.bf16.mxu0 0
  %206 = vmatpush1.bf16.msra.mxu0 %v188
  %207 = vmatprep.subr.bf16.mxu0 0
  %208 = vmatpush1.bf16.msra.mxu0 %v189
  %209 = vmatprep.subr.bf16.mxu0 0
  %210 = vmatpush1.bf16.msra.mxu0 %v190
  %211 = vmatprep.subr.bf16.mxu0 0
  %212 = vmatpush1.bf16.msra.mxu0 %v191
  %213 = vmatprep.subr.bf16.mxu0 0
  %214 = vmatpush1.bf16.msra.mxu0 %v192
  %215 = vmatprep.subr.bf16.mxu0 0
  %216 = vmatpush1.bf16.msra.mxu0 %v193
  %217 = vmatprep.subr.bf16.mxu0 0
  %218 = vmatpush1.bf16.msra.mxu0 %v194
  %219 = vmatprep.subr.bf16.mxu0 0
  %220 = vmatpush1.bf16.msra.mxu0 0
  %221 = vmatprep.subr.bf16.mxu0 0
  %222 = vmatpush1.bf16.msra.mxu0 0
  %223 = vmatprep.subr.bf16.mxu0 0
  %224 = vmatpush1.bf16.msra.mxu0 0
  %225 = vmatprep.subr.bf16.mxu0 0
  %226 = vmatpush1.bf16.msra.mxu0 0
  %227 = vmatprep.subr.bf16.mxu0 0
  %228 = vmatpush1.bf16.msra.mxu0 0
  %229 = vmatprep.subr.bf16.mxu0 0
  %230 = vmatpush1.bf16.msra.mxu0 0
  %231 = vmatprep.subr.bf16.mxu0 0
  %232 = vmatpush1.bf16.msra.mxu0 0
  %233 = vmatprep.subr.bf16.mxu0 0
  %234 = vmatpush1.bf16.msra.mxu0 0
  %235 = vmatprep.mubr.bf16.mxu0 0
  %236 = vmatmul.mubr.bf16.gmra.mrb[0].mxu0 %v137
  %v237 = vpop.f32.mrb[0].mxu0
  %v238 = vadd.f32 0.0, %v237
  %v239 = vpop.f32.mrb[0].mxu0
  %v240 = vpop.f32.mrb[0].mxu0
  %v241 = vpop.f32.mrb[0].mxu0
  %242 = vdwg.mxu0
  %v243 = vadd.f32 %v135, %v238
  %244 = vst [vmem:[%s134] sm:$0xff] %v243
  %s245 = scalar_lea.vmem [#allocation2], 16
  %v246 = vld [vmem:[%s245] sm:$0xff]
  %s247 = scalar_lea.vmem %s0, 8
  %v248 = vld [vmem:[%s247] sm:$0xf]
  %s249 = scalar_lea.vmem %s1, 128
  %v250 = vld [vmem:[%s249] sm:$0xf]
  %v251 = vld [vmem:[%s249 + $0x4] sm:$0xf]
  %v252 = vld [vmem:[%s249 + $0x8] sm:$0xf]
  %v253 = vld [vmem:[%s249 + $0xc] sm:$0xf]
  %v254 = vld [vmem:[%s249 + $0x10] sm:$0xf]
  %v255 = vld [vmem:[%s249 + $0x14] sm:$0xf]
  %v256 = vld [vmem:[%s249 + $0x18] sm:$0xf]
  %v257 = vld [vmem:[%s249 + $0x1c] sm:$0xf]
  %v258 = vld [vmem:[%s249 + $0x20] sm:$0xf]
  %v259 = vld [vmem:[%s249 + $0x24] sm:$0xf]
  %v260 = vld [vmem:[%s249 + $0x28] sm:$0xf]
  %v261 = vld [vmem:[%s249 + $0x2c] sm:$0xf]
  %v262 = vld [vmem:[%s249 + $0x30] sm:$0xf]
  %v263 = vld [vmem:[%s249 + $0x34] sm:$0xf]
  %v264 = vld [vmem:[%s249 + $0x38] sm:$0xf]
  %v265 = vld [vmem:[%s249 + $0x3c] sm:$0xf]
  %v282 = vunpack.c.l.b16 %v250
  %v283 = vunpack.c.l.b16 %v251
  %v284 = vunpack.c.l.b16 %v252
  %v285 = vunpack.c.l.b16 %v253
  %v286 = vunpack.c.l.b16 %v254
  %v287 = vunpack.c.l.b16 %v255
  %v288 = vunpack.c.l.b16 %v256
  %v289 = vunpack.c.l.b16 %v257
  %v290 = vunpack.c.l.b16 %v258
  %v291 = vunpack.c.l.b16 %v259
  %v292 = vunpack.c.l.b16 %v260
  %v293 = vunpack.c.l.b16 %v261
  %v294 = vunpack.c.l.b16 %v262
  %v295 = vunpack.c.l.b16 %v263
  %v296 = vunpack.c.l.b16 %v264
  %v297 = vunpack.c.l.b16 %v265
  %v298 = vpack.c.b16 %v283, %v282
  %v299 = vpack.c.b16 %v285, %v284
  %v300 = vpack.c.b16 %v287, %v286
  %v301 = vpack.c.b16 %v289, %v288
  %v302 = vpack.c.b16 %v291, %v290
  %v303 = vpack.c.b16 %v293, %v292
  %v304 = vpack.c.b16 %v295, %v294
  %v305 = vpack.c.b16 %v297, %v296
  %314 = vmatprep.subr.bf16.mxu0 0
  %315 = vmatpush1.bf16.msra.mxu0 %v298
  %316 = vmatprep.subr.bf16.mxu0 0
  %317 = vmatpush1.bf16.msra.mxu0 %v299
  %318 = vmatprep.subr.bf16.mxu0 0
  %319 = vmatpush1.bf16.msra.mxu0 %v300
  %320 = vmatprep.subr.bf16.mxu0 0
  %321 = vmatpush1.bf16.msra.mxu0 %v301
  %322 = vmatprep.subr.bf16.mxu0 0
  %323 = vmatpush1.bf16.msra.mxu0 %v302
  %324 = vmatprep.subr.bf16.mxu0 0
  %325 = vmatpush1.bf16.msra.mxu0 %v303
  %326 = vmatprep.subr.bf16.mxu0 0
  %327 = vmatpush1.bf16.msra.mxu0 %v304
  %328 = vmatprep.subr.bf16.mxu0 0
  %329 = vmatpush1.bf16.msra.mxu0 %v305
  %330 = vmatprep.subr.bf16.mxu0 0
  %331 = vmatpush1.bf16.msra.mxu0 0
  %332 = vmatprep.subr.bf16.mxu0 0
  %333 = vmatpush1.bf16.msra.mxu0 0
  %334 = vmatprep.subr.bf16.mxu0 0
  %335 = vmatpush1.bf16.msra.mxu0 0
  %336 = vmatprep.subr.bf16.mxu0 0
  %337 = vmatpush1.bf16.msra.mxu0 0
  %338 = vmatprep.subr.bf16.mxu0 0
  %339 = vmatpush1.bf16.msra.mxu0 0
  %340 = vmatprep.subr.bf16.mxu0 0
  %341 = vmatpush1.bf16.msra.mxu0 0
  %342 = vmatprep.subr.bf16.mxu0 0
  %343 = vmatpush1.bf16.msra.mxu0 0
  %344 = vmatprep.subr.bf16.mxu0 0
  %345 = vmatpush1.bf16.msra.mxu0 0
  %346 = vmatprep.mubr.bf16.mxu0 0
  %347 = vmatmul.mubr.bf16.gmra.mrb[0].mxu0 %v248
  %v348 = vpop.f32.mrb[0].mxu0
  %v349 = vadd.f32 0.0, %v348
  %v350 = vpop.f32.mrb[0].mxu0
  %v351 = vpop.f32.mrb[0].mxu0
  %v352 = vpop.f32.mrb[0].mxu0
  %353 = vdwg.mxu0
  %v354 = vadd.f32 %v246, %v349
  %355 = vst [vmem:[%s245] sm:$0xff] %v354
  %s356 = scalar_lea.vmem [#allocation2], 24
  %v357 = vld [vmem:[%s356] sm:$0xff]
  %s358 = scalar_lea.vmem %s0, 12
  %v359 = vld [vmem:[%s358] sm:$0xf]
  %s360 = scalar_lea.vmem %s1, 192
  %v361 = vld [vmem:[%s360] sm:$0xf]
  %v362 = vld [vmem:[%s360 + $0x4] sm:$0xf]
  %v363 = vld [vmem:[%s360 + $0x8] sm:$0xf]
  %v364 = vld [vmem:[%s360 + $0xc] sm:$0xf]
  %v365 = vld [vmem:[%s360 + $0x10] sm:$0xf]
  %v366 = vld [vmem:[%s360 + $0x14] sm:$0xf]
  %v367 = vld [vmem:[%s360 + $0x18] sm:$0xf]
  %v368 = vld [vmem:[%s360 + $0x1c] sm:$0xf]
  %v369 = vld [vmem:[%s360 + $0x20] sm:$0xf]
  %v370 = vld [vmem:[%s360 + $0x24] sm:$0xf]
  %v371 = vld [vmem:[%s360 + $0x28] sm:$0xf]
  %v372 = vld [vmem:[%s360 + $0x2c] sm:$0xf]
  %v373 = vld [vmem:[%s360 + $0x30] sm:$0xf]
  %v374 = vld [vmem:[%s360 + $0x34] sm:$0xf]
  %v375 = vld [vmem:[%s360 + $0x38] sm:$0xf]
  %v376 = vld [vmem:[%s360 + $0x3c] sm:$0xf]
  %v393 = vunpack.c.l.b16 %v361
  %v394 = vunpack.c.l.b16 %v362
  %v395 = vunpack.c.l.b16 %v363
  %v396 = vunpack.c.l.b16 %v364
  %v397 = vunpack.c.l.b16 %v365
  %v398 = vunpack.c.l.b16 %v366
  %v399 = vunpack.c.l.b16 %v367
  %v400 = vunpack.c.l.b16 %v368
  %v401 = vunpack.c.l.b16 %v369
  %v402 = vunpack.c.l.b16 %v370
  %v403 = vunpack.c.l.b16 %v371
  %v404 = vunpack.c.l.b16 %v372
  %v405 = vunpack.c.l.b16 %v373
  %v406 = vunpack.c.l.b16 %v374
  %v407 = vunpack.c.l.b16 %v375
  %v408 = vunpack.c.l.b16 %v376
  %v409 = vpack.c.b16 %v394, %v393
  %v410 = vpack.c.b16 %v396, %v395
  %v411 = vpack.c.b16 %v398, %v397
  %v412 = vpack.c.b16 %v400, %v399
  %v413 = vpack.c.b16 %v402, %v401
  %v414 = vpack.c.b16 %v404, %v403
  %v415 = vpack.c.b16 %v406, %v405
  %v416 = vpack.c.b16 %v408, %v407
  %425 = vmatprep.subr.bf16.mxu0 0
  %426 = vmatpush1.bf16.msra.mxu0 %v409
  %427 = vmatprep.subr.bf16.mxu0 0
  %428 = vmatpush1.bf16.msra.mxu0 %v410
  %429 = vmatprep.subr.bf16.mxu0 0
  %430 = vmatpush1.bf16.msra.mxu0 %v411
  %431 = vmatprep.subr.bf16.mxu0 0
  %432 = vmatpush1.bf16.msra.mxu0 %v412
  %433 = vmatprep.subr.bf16.mxu0 0
  %434 = vmatpush1.bf16.msra.mxu0 %v413
  %435 = vmatprep.subr.bf16.mxu0 0
  %436 = vmatpush1.bf16.msra.mxu0 %v414
  %437 = vmatprep.subr.bf16.mxu0 0
  %438 = vmatpush1.bf16.msra.mxu0 %v415
  %439 = vmatprep.subr.bf16.mxu0 0
  %440 = vmatpush1.bf16.msra.mxu0 %v416
  %441 = vmatprep.subr.bf16.mxu0 0
  %442 = vmatpush1.bf16.msra.mxu0 0
  %443 = vmatprep.subr.bf16.mxu0 0
  %444 = vmatpush1.bf16.msra.mxu0 0
  %445 = vmatprep.subr.bf16.mxu0 0
  %446 = vmatpush1.bf16.msra.mxu0 0
  %447 = vmatprep.subr.bf16.mxu0 0
  %448 = vmatpush1.bf16.msra.mxu0 0
  %449 = vmatprep.subr.bf16.mxu0 0
  %450 = vmatpush1.bf16.msra.mxu0 0
  %451 = vmatprep.subr.bf16.mxu0 0
  %452 = vmatpush1.bf16.msra.mxu0 0
  %453 = vmatprep.subr.bf16.mxu0 0
  %454 = vmatpush1.bf16.msra.mxu0 0
  %455 = vmatprep.subr.bf16.mxu0 0
  %456 = vmatpush1.bf16.msra.mxu0 0
  %457 = vmatprep.mubr.bf16.mxu0 0
  %458 = vmatmul.mubr.bf16.gmra.mrb[0].mxu0 %v359
  %v459 = vpop.f32.mrb[0].mxu0
  %v460 = vadd.f32 0.0, %v459
  %v461 = vpop.f32.mrb[0].mxu0
  %v462 = vpop.f32.mrb[0].mxu0
  %v463 = vpop.f32.mrb[0].mxu0
  %464 = vdwg.mxu0
  %v465 = vadd.f32 %v357, %v460
  %466 = vst [vmem:[%s356] sm:$0xff] %v465
  // Predicated region
  $region22: #{baseline_model_3layer_forward.9} parent=0 // pred_check
    %p467 = pneg %p18
  $region23: #{baseline_model_3layer_forward.9} parent=0 // pred_check_branch
    %469 = sbr.rel (%p467) target = $region25
  $region24: #{baseline_model_3layer_forward.9} parent=0 // pred_region
    %v470 = vld [vmem:[#allocation2] sm:$0xff]
    %v471 = vld [vmem:[#allocation2 + $0x8] sm:$0xff]
    %v472 = vld [vmem:[#allocation2 + $0x10] sm:$0xff]
    %v473 = vld [vmem:[#allocation2 + $0x18] sm:$0xff]
    %v474 = vadd.f32 %v470, %v471
    %v475 = vadd.f32 %v474, %v472
    %v476 = vadd.f32 %v475, %v473
    %v477 = vrot.slane %v476, 4
    %v478 = vadd.f32 %v476, %v477
    %v479 = vrot.slane %v478, 2
    %v480 = vadd.f32 %v478, %v479
    %v481 = vrot.slane %v480, 1
    %v482 = vadd.f32 %v480, %v481
    %v483 = vmul.f32 %v470, %v470
    %v484 = vmul.f32 %v471, %v471
    %v485 = vmul.f32 %v472, %v472
    %v486 = vmul.f32 %v473, %v473
    %v487 = vadd.f32 %v483, %v484
    %v488 = vadd.f32 %v487, %v485
    %v489 = vadd.f32 %v488, %v486
    %v490 = vrot.slane %v489, 4
    %v491 = vadd.f32 %v489, %v490
    %v492 = vrot.slane %v491, 2
    %v493 = vadd.f32 %v491, %v492
    %v494 = vrot.slane %v493, 1
    %v495 = vadd.f32 %v493, %v494
    %v496 = vmul.f32 %v482, 0.03125
    %v497 = vmul.f32 %v495, 0.03125
    %v498 = vmul.f32 %v496, %v496
    %v499 = vsub.f32 %v497, %v498
    %v500 = vsub.f32 %v470, %v496
    %v501 = vsub.f32 %v471, %v496
    %v502 = vsub.f32 %v472, %v496
    %v503 = vsub.f32 %v473, %v496
    %v504 = vadd.f32 %v499, 1e-05
    %v505 = vrsqrt.pop %v504
    %v506 = vld [vmem:[%s2] sm:$0x1]
    %v507 = vmul.f32 %v505, %v506
    %v508 = vlaneseq
    %v509 = vshrl.u32 %v508, 7
    %v510 = vsub.s32 0, %v509
    %v511 = vrot.slane %v507, %v510
    %v512 = vmul.f32 %v500, %v511
    %v513 = vmul.f32 %v501, %v511
    %v514 = vmul.f32 %v502, %v511
    %v515 = vmul.f32 %v503, %v511
    %v516 = vld [vmem:[%s3] sm:$0x1]
    %v518 = vlaneseq
    %v519 = vshrl.u32 %v518, 7
    %v520 = vsub.s32 0, %v519
    %v521 = vrot.slane %v516, %v520
    %v523 = vadd.f32 %v512, %v521
    %v524 = vadd.f32 %v513, %v521
    %v525 = vadd.f32 %v514, %v521
    %v526 = vadd.f32 %v515, %v521
    %v527 = vmax.f32 %v523, 0.0
    %v528 = vmax.f32 %v524, 0.0
    %v529 = vmax.f32 %v525, 0.0
    %v530 = vmax.f32 %v526, 0.0
    %v531 = vpack.c.bf16 %v527, %v527
    %v532 = vpack.c.bf16 %v528, %v528
    %v533 = vpack.c.bf16 %v529, %v529
    %v534 = vpack.c.bf16 %v530, %v530
    %535 = vst [vmem:[%s4] sm:$0xf] %v531
    %536 = vst [vmem:[%s4 + $0x4] sm:$0xf] %v532
    %537 = vst [vmem:[%s4 + $0x8] sm:$0xf] %v533
    %538 = vst [vmem:[%s4 + $0xc] sm:$0xf] %v534
  $region25: #{baseline_model_3layer_forward.9} parent=0 // pred_fallthru
    _
  // Predicated region
  $region26: #{baseline_model_3layer_forward.9} parent=0 // pred_check
    _
  $region27: #{baseline_model_3layer_forward.9} parent=0 // pred_check_branch
    %540 = sbr.rel (0) target = $region29
  $region28: #{baseline_model_3layer_forward.9} parent=0 // pred_region
    _
  $region29: #{baseline_model_3layer_forward.9} parent=0 // pred_fallthru
    _
  // Predicated region
  $region30: #{baseline_model_3layer_forward.9} parent=0 // pred_check
    _
  $region31: #{baseline_model_3layer_forward.9} parent=0 // pred_check_branch
    %542 = sbr.rel (0) target = $region33
  $region32: #{baseline_model_3layer_forward.9} parent=0 // pred_region
    _
  $region33: #{baseline_model_3layer_forward.9} parent=0 // pred_fallthru
    _

// kernel: baseline_model_3layer_forward.10
$region0: #{baseline_model_3layer_forward.10}
  #allocation0 [shape = 'u32[]', space=smem, size = 0x4, offset = 0x4, fixed_abs, tag = 'smem constant byte address 0x4 - core index']
  #allocation1 [shape = 'u32[144,128]{1,0:T(1,128)}', space=vmem, size = 0x12000, scoped, tag = 'internal scratch']
  #allocation2 [shape = 'f32[4,32,128]{2,1,0:T(8,128)}', space=vmem, size = 0x10000, scoped, tag = 'scratch operand']
  %s0 = inlined_call_operand.vmem [shape: bf16[4,32,128], index: 0, kind: input, shape index: {}]
  %s1 = inlined_call_operand.vmem [shape: bf16[4,128,128], index: 1, kind: input, shape index: {}]
  %s2 = inlined_call_operand.vmem [shape: f32[1,128], index: 2, kind: input, shape index: {}]
  %s3 = inlined_call_operand.vmem [shape: f32[1,128], index: 3, kind: input, shape index: {}]
  %s4 = inlined_call_operand.vmem [shape: bf16[4,32,128], index: 4, kind: output, shape index: {}]
  %s5 = sld [smem:[#allocation0]]
  $region34: #{baseline_model_3layer_forward.10} parent=0
    _
  %s7 = ssub.s32 1, %s5
  %s8 = scalar_select 0, %s7, %s5
  // Predicated region
  $region2: #{baseline_model_3layer_forward.10} parent=0 // pred_check
    _
  $region3: #{baseline_model_3layer_forward.10} parent=0 // pred_check_branch
    %10 = sbr.rel (0) target = $region5
  $region4: #{baseline_model_3layer_forward.10} parent=0 // pred_region
    _
  $region5: #{baseline_model_3layer_forward.10} parent=0 // pred_fallthru
    _
  // Predicated region
  $region6: #{baseline_model_3layer_forward.10} parent=0 // pred_check
    _
  $region7: #{baseline_model_3layer_forward.10} parent=0 // pred_check_branch
    %12 = sbr.rel (0) target = $region9
  $region8: #{baseline_model_3layer_forward.10} parent=0 // pred_region
    _
  $region9: #{baseline_model_3layer_forward.10} parent=0 // pred_fallthru
    _
  // Predicated region
  $region10: #{baseline_model_3layer_forward.10} parent=0 // pred_check
    _
  $region11: #{baseline_model_3layer_forward.10} parent=0 // pred_check_branch
    %14 = sbr.rel (0) target = $region13
  $region12: #{baseline_model_3layer_forward.10} parent=0 // pred_region
    _
  $region13: #{baseline_model_3layer_forward.10} parent=0 // pred_fallthru
    _
  // Predicated region
  $region14: #{baseline_model_3layer_forward.10} parent=0 // pred_check
    _
  $region15: #{baseline_model_3layer_forward.10} parent=0 // pred_check_branch
    %16 = sbr.rel (0) target = $region17
  $region16: #{baseline_model_3layer_forward.10} parent=0 // pred_region
    _
  $region17: #{baseline_model_3layer_forward.10} parent=0 // pred_fallthru
    _
  %p18 = scmp.eq.s32.totalorder 0, 0
  // Predicated region
  $region18: #{baseline_model_3layer_forward.10} parent=0 // pred_check
    %p19 = pneg %p18
  $region19: #{baseline_model_3layer_forward.10} parent=0 // pred_check_branch
    %21 = sbr.rel (%p19) target = $region21
  $region20: #{baseline_model_3layer_forward.10} parent=0 // pred_region
    %22 = vst [vmem:[#allocation2] sm:$0xff] 0.0
    %23 = vst [vmem:[#allocation2 + $0x8] sm:$0xff] 0.0
    %24 = vst [vmem:[#allocation2 + $0x10] sm:$0xff] 0.0
    %25 = vst [vmem:[#allocation2 + $0x18] sm:$0xff] 0.0
    %26 = vst [vmem:[#allocation2 + $0x20] sm:$0xff] 0.0
    %27 = vst [vmem:[#allocation2 + $0x28] sm:$0xff] 0.0
    %28 = vst [vmem:[#allocation2 + $0x30] sm:$0xff] 0.0
    %29 = vst [vmem:[#allocation2 + $0x38] sm:$0xff] 0.0
    %30 = vst [vmem:[#allocation2 + $0x40] sm:$0xff] 0.0
    %31 = vst [vmem:[#allocation2 + $0x48] sm:$0xff] 0.0
    %32 = vst [vmem:[#allocation2 + $0x50] sm:$0xff] 0.0
    %33 = vst [vmem:[#allocation2 + $0x58] sm:$0xff] 0.0
    %34 = vst [vmem:[#allocation2 + $0x60] sm:$0xff] 0.0
    %35 = vst [vmem:[#allocation2 + $0x68] sm:$0xff] 0.0
    %36 = vst [vmem:[#allocation2 + $0x70] sm:$0xff] 0.0
    %37 = vst [vmem:[#allocation2 + $0x78] sm:$0xff] 0.0
  $region21: #{baseline_model_3layer_forward.10} parent=0 // pred_fallthru
    _
  %v38 = vld [vmem:[#allocation2] sm:$0xff]
  %v39 = vld [vmem:[#allocation2 + $0x8] sm:$0xff]
  %v40 = vld [vmem:[#allocation2 + $0x10] sm:$0xff]
  %v41 = vld [vmem:[#allocation2 + $0x18] sm:$0xff]
  %v42 = vld [vmem:[%s0] sm:$0xf]
  %v43 = vld [vmem:[%s0 + $0x4] sm:$0xf]
  %v44 = vld [vmem:[%s0 + $0x8] sm:$0xf]
  %v45 = vld [vmem:[%s0 + $0xc] sm:$0xf]
  %v46 = vld [vmem:[%s1] sm:$0xf]
  %v47 = vld [vmem:[%s1 + $0x4] sm:$0xf]
  %v48 = vld [vmem:[%s1 + $0x8] sm:$0xf]
  %v49 = vld [vmem:[%s1 + $0xc] sm:$0xf]
  %v50 = vld [vmem:[%s1 + $0x10] sm:$0xf]
  %v51 = vld [vmem:[%s1 + $0x14] sm:$0xf]
  %v52 = vld [vmem:[%s1 + $0x18] sm:$0xf]
  %v53 = vld [vmem:[%s1 + $0x1c] sm:$0xf]
  %v54 = vld [vmem:[%s1 + $0x20] sm:$0xf]
  %v55 = vld [vmem:[%s1 + $0x24] sm:$0xf]
  %v56 = vld [vmem:[%s1 + $0x28] sm:$0xf]
  %v57 = vld [vmem:[%s1 + $0x2c] sm:$0xf]
  %v58 = vld [vmem:[%s1 + $0x30] sm:$0xf]
  %v59 = vld [vmem:[%s1 + $0x34] sm:$0xf]
  %v60 = vld [vmem:[%s1 + $0x38] sm:$0xf]
  %v61 = vld [vmem:[%s1 + $0x3c] sm:$0xf]
  %v66 = vunpack.c.l.b16 %v42
  %v67 = vunpack.c.l.b16 %v43
  %v68 = vunpack.c.l.b16 %v44
  %v69 = vunpack.c.l.b16 %v45
  %v70 = vpack.c.b16 %v67, %v66
  %v71 = vpack.c.b16 %v69, %v68
  %v90 = vunpack.c.l.b16 %v46
  %v91 = vunpack.c.l.b16 %v47
  %v92 = vunpack.c.l.b16 %v48
  %v93 = vunpack.c.l.b16 %v49
  %v94 = vunpack.c.l.b16 %v50
  %v95 = vunpack.c.l.b16 %v51
  %v96 = vunpack.c.l.b16 %v52
  %v97 = vunpack.c.l.b16 %v53
  %v98 = vunpack.c.l.b16 %v54
  %v99 = vunpack.c.l.b16 %v55
  %v100 = vunpack.c.l.b16 %v56
  %v101 = vunpack.c.l.b16 %v57
  %v102 = vunpack.c.l.b16 %v58
  %v103 = vunpack.c.l.b16 %v59
  %v104 = vunpack.c.l.b16 %v60
  %v105 = vunpack.c.l.b16 %v61
  %v106 = vpack.c.b16 %v91, %v90
  %v107 = vpack.c.b16 %v93, %v92
  %v108 = vpack.c.b16 %v95, %v94
  %v109 = vpack.c.b16 %v97, %v96
  %v110 = vpack.c.b16 %v99, %v98
  %v111 = vpack.c.b16 %v101, %v100
  %v112 = vpack.c.b16 %v103, %v102
  %v113 = vpack.c.b16 %v105, %v104
  %122 = vmatprep.subr.bf16.mxu0 0
  %123 = vmatpush1.bf16.msra.mxu0 %v106
  %124 = vmatprep.subr.bf16.mxu0 0
  %125 = vmatpush1.bf16.msra.mxu0 %v107
  %126 = vmatprep.subr.bf16.mxu0 0
  %127 = vmatpush1.bf16.msra.mxu0 %v108
  %128 = vmatprep.subr.bf16.mxu0 0
  %129 = vmatpush1.bf16.msra.mxu0 %v109
  %130 = vmatprep.subr.bf16.mxu0 0
  %131 = vmatpush1.bf16.msra.mxu0 %v110
  %132 = vmatprep.subr.bf16.mxu0 0
  %133 = vmatpush1.bf16.msra.mxu0 %v111
  %134 = vmatprep.subr.bf16.mxu0 0
  %135 = vmatpush1.bf16.msra.mxu0 %v112
  %136 = vmatprep.subr.bf16.mxu0 0
  %137 = vmatpush1.bf16.msra.mxu0 %v113
  %138 = vmatprep.subr.bf16.mxu0 0
  %139 = vmatpush1.bf16.msra.mxu0 0
  %140 = vmatprep.subr.bf16.mxu0 0
  %141 = vmatpush1.bf16.msra.mxu0 0
  %142 = vmatprep.subr.bf16.mxu0 0
  %143 = vmatpush1.bf16.msra.mxu0 0
  %144 = vmatprep.subr.bf16.mxu0 0
  %145 = vmatpush1.bf16.msra.mxu0 0
  %146 = vmatprep.subr.bf16.mxu0 0
  %147 = vmatpush1.bf16.msra.mxu0 0
  %148 = vmatprep.subr.bf16.mxu0 0
  %149 = vmatpush1.bf16.msra.mxu0 0
  %150 = vmatprep.subr.bf16.mxu0 0
  %151 = vmatpush1.bf16.msra.mxu0 0
  %152 = vmatprep.subr.bf16.mxu0 0
  %153 = vmatpush1.bf16.msra.mxu0 0
  %154 = vmatprep.mubr.bf16.mxu0 0
  %155 = vmatmul.mubr.bf16.gmra.mrb[0].mxu0 %v70
  %v156 = vpop.f32.mrb[0].mxu0
  %v157 = vadd.f32 0.0, %v156
  %v158 = vpop.f32.mrb[0].mxu0
  %v159 = vpop.f32.mrb[0].mxu0
  %v160 = vadd.f32 0.0, %v159
  %v161 = vpop.f32.mrb[0].mxu0
  %162 = vmatprep.mubr.bf16.mxu0 0
  %163 = vmatmul.mubr.bf16.gmra.mrb[0].mxu0 %v71
  %v164 = vpop.f32.mrb[0].mxu0
  %v165 = vadd.f32 0.0, %v164
  %v166 = vpop.f32.mrb[0].mxu0
  %v167 = vpop.f32.mrb[0].mxu0
  %v168 = vadd.f32 0.0, %v167
  %v169 = vpop.f32.mrb[0].mxu0
  %170 = vdwg.mxu0
  %v171 = vadd.f32 %v38, %v157
  %v172 = vadd.f32 %v39, %v160
  %v173 = vadd.f32 %v40, %v165
  %v174 = vadd.f32 %v41, %v168
  %175 = vst [vmem:[#allocation2] sm:$0xff] %v171
  %176 = vst [vmem:[#allocation2 + $0x8] sm:$0xff] %v172
  %177 = vst [vmem:[#allocation2 + $0x10] sm:$0xff] %v173
  %178 = vst [vmem:[#allocation2 + $0x18] sm:$0xff] %v174
  %s179 = scalar_lea.vmem [#allocation2], 32
  %v180 = vld [vmem:[%s179] sm:$0xff]
  %v181 = vld [vmem:[%s179 + $0x8] sm:$0xff]
  %v182 = vld [vmem:[%s179 + $0x10] sm:$0xff]
  %v183 = vld [vmem:[%s179 + $0x18] sm:$0xff]
  %s184 = scalar_lea.vmem %s0, 16
  %v185 = vld [vmem:[%s184] sm:$0xf]
  %v186 = vld [vmem:[%s184 + $0x4] sm:$0xf]
  %v187 = vld [vmem:[%s184 + $0x8] sm:$0xf]
  %v188 = vld [vmem:[%s184 + $0xc] sm:$0xf]
  %s189 = scalar_lea.vmem %s1, 64
  %v190 = vld [vmem:[%s189] sm:$0xf]
  %v191 = vld [vmem:[%s189 + $0x4] sm:$0xf]
  %v192 = vld [vmem:[%s189 + $0x8] sm:$0xf]
  %v193 = vld [vmem:[%s189 + $0xc] sm:$0xf]
  %v194 = vld [vmem:[%s189 + $0x10] sm:$0xf]
  %v195 = vld [vmem:[%s189 + $0x14] sm:$0xf]
  %v196 = vld [vmem:[%s189 + $0x18] sm:$0xf]
  %v197 = vld [vmem:[%s189 + $0x1c] sm:$0xf]
  %v198 = vld [vmem:[%s189 + $0x20] sm:$0xf]
  %v199 = vld [vmem:[%s189 + $0x24] sm:$0xf]
  %v200 = vld [vmem:[%s189 + $0x28] sm:$0xf]
  %v201 = vld [vmem:[%s189 + $0x2c] sm:$0xf]
  %v202 = vld [vmem:[%s189 + $0x30] sm:$0xf]
  %v203 = vld [vmem:[%s189 + $0x34] sm:$0xf]
  %v204 = vld [vmem:[%s189 + $0x38] sm:$0xf]
  %v205 = vld [vmem:[%s189 + $0x3c] sm:$0xf]
  %v210 = vunpack.c.l.b16 %v185
  %v211 = vunpack.c.l.b16 %v186
  %v212 = vunpack.c.l.b16 %v187
  %v213 = vunpack.c.l.b16 %v188
  %v214 = vpack.c.b16 %v211, %v210
  %v215 = vpack.c.b16 %v213, %v212
  %v234 = vunpack.c.l.b16 %v190
  %v235 = vunpack.c.l.b16 %v191
  %v236 = vunpack.c.l.b16 %v192
  %v237 = vunpack.c.l.b16 %v193
  %v238 = vunpack.c.l.b16 %v194
  %v239 = vunpack.c.l.b16 %v195
  %v240 = vunpack.c.l.b16 %v196
  %v241 = vunpack.c.l.b16 %v197
  %v242 = vunpack.c.l.b16 %v198
  %v243 = vunpack.c.l.b16 %v199
  %v244 = vunpack.c.l.b16 %v200
  %v245 = vunpack.c.l.b16 %v201
  %v246 = vunpack.c.l.b16 %v202
  %v247 = vunpack.c.l.b16 %v203
  %v248 = vunpack.c.l.b16 %v204
  %v249 = vunpack.c.l.b16 %v205
  %v250 = vpack.c.b16 %v235, %v234
  %v251 = vpack.c.b16 %v237, %v236
  %v252 = vpack.c.b16 %v239, %v238
  %v253 = vpack.c.b16 %v241, %v240
  %v254 = vpack.c.b16 %v243, %v242
  %v255 = vpack.c.b16 %v245, %v244
  %v256 = vpack.c.b16 %v247, %v246
  %v257 = vpack.c.b16 %v249, %v248
  %266 = vmatprep.subr.bf16.mxu0 0
  %267 = vmatpush1.bf16.msra.mxu0 %v250
  %268 = vmatprep.subr.bf16.mxu0 0
  %269 = vmatpush1.bf16.msra.mxu0 %v251
  %270 = vmatprep.subr.bf16.mxu0 0
  %271 = vmatpush1.bf16.msra.mxu0 %v252
  %272 = vmatprep.subr.bf16.mxu0 0
  %273 = vmatpush1.bf16.msra.mxu0 %v253
  %274 = vmatprep.subr.bf16.mxu0 0
  %275 = vmatpush1.bf16.msra.mxu0 %v254
  %276 = vmatprep.subr.bf16.mxu0 0
  %277 = vmatpush1.bf16.msra.mxu0 %v255
  %278 = vmatprep.subr.bf16.mxu0 0
  %279 = vmatpush1.bf16.msra.mxu0 %v256
  %280 = vmatprep.subr.bf16.mxu0 0
  %281 = vmatpush1.bf16.msra.mxu0 %v257
  %282 = vmatprep.subr.bf16.mxu0 0
  %283 = vmatpush1.bf16.msra.mxu0 0
  %284 = vmatprep.subr.bf16.mxu0 0
  %285 = vmatpush1.bf16.msra.mxu0 0
  %286 = vmatprep.subr.bf16.mxu0 0
  %287 = vmatpush1.bf16.msra.mxu0 0
  %288 = vmatprep.subr.bf16.mxu0 0
  %289 = vmatpush1.bf16.msra.mxu0 0
  %290 = vmatprep.subr.bf16.mxu0 0
  %291 = vmatpush1.bf16.msra.mxu0 0
  %292 = vmatprep.subr.bf16.mxu0 0
  %293 = vmatpush1.bf16.msra.mxu0 0
  %294 = vmatprep.subr.bf16.mxu0 0
  %295 = vmatpush1.bf16.msra.mxu0 0
  %296 = vmatprep.subr.bf16.mxu0 0
  %297 = vmatpush1.bf16.msra.mxu0 0
  %298 = vmatprep.mubr.bf16.mxu0 0
  %299 = vmatmul.mubr.bf16.gmra.mrb[0].mxu0 %v214
  %v300 = vpop.f32.mrb[0].mxu0
  %v301 = vadd.f32 0.0, %v300
  %v302 = vpop.f32.mrb[0].mxu0
  %v303 = vpop.f32.mrb[0].mxu0
  %v304 = vadd.f32 0.0, %v303
  %v305 = vpop.f32.mrb[0].mxu0
  %306 = vmatprep.mubr.bf16.mxu0 0
  %307 = vmatmul.mubr.bf16.gmra.mrb[0].mxu0 %v215
  %v308 = vpop.f32.mrb[0].mxu0
  %v309 = vadd.f32 0.0, %v308
  %v310 = vpop.f32.mrb[0].mxu0
  %v311 = vpop.f32.mrb[0].mxu0
  %v312 = vadd.f32 0.0, %v311
  %v313 = vpop.f32.mrb[0].mxu0
  %314 = vdwg.mxu0
  %v315 = vadd.f32 %v180, %v301
  %v316 = vadd.f32 %v181, %v304
  %v317 = vadd.f32 %v182, %v309
  %v318 = vadd.f32 %v183, %v312
  %319 = vst [vmem:[%s179] sm:$0xff] %v315
  %320 = vst [vmem:[%s179 + $0x8] sm:$0xff] %v316
  %321 = vst [vmem:[%s179 + $0x10] sm:$0xff] %v317
  %322 = vst [vmem:[%s179 + $0x18] sm:$0xff] %v318
  %s323 = scalar_lea.vmem [#allocation2], 64
  %v324 = vld [vmem:[%s323] sm:$0xff]
  %v325 = vld [vmem:[%s323 + $0x8] sm:$0xff]
  %v326 = vld [vmem:[%s323 + $0x10] sm:$0xff]
  %v327 = vld [vmem:[%s323 + $0x18] sm:$0xff]
  %s328 = scalar_lea.vmem %s0, 32
  %v329 = vld [vmem:[%s328] sm:$0xf]
  %v330 = vld [vmem:[%s328 + $0x4] sm:$0xf]
  %v331 = vld [vmem:[%s328 + $0x8] sm:$0xf]
  %v332 = vld [vmem:[%s328 + $0xc] sm:$0xf]
  %s333 = scalar_lea.vmem %s1, 128
  %v334 = vld [vmem:[%s333] sm:$0xf]
  %v335 = vld [vmem:[%s333 + $0x4] sm:$0xf]
  %v336 = vld [vmem:[%s333 + $0x8] sm:$0xf]
  %v337 = vld [vmem:[%s333 + $0xc] sm:$0xf]
  %v338 = vld [vmem:[%s333 + $0x10] sm:$0xf]
  %v339 = vld [vmem:[%s333 + $0x14] sm:$0xf]
  %v340 = vld [vmem:[%s333 + $0x18] sm:$0xf]
  %v341 = vld [vmem:[%s333 + $0x1c] sm:$0xf]
  %v342 = vld [vmem:[%s333 + $0x20] sm:$0xf]
  %v343 = vld [vmem:[%s333 + $0x24] sm:$0xf]
  %v344 = vld [vmem:[%s333 + $0x28] sm:$0xf]
  %v345 = vld [vmem:[%s333 + $0x2c] sm:$0xf]
  %v346 = vld [vmem:[%s333 + $0x30] sm:$0xf]
  %v347 = vld [vmem:[%s333 + $0x34] sm:$0xf]
  %v348 = vld [vmem:[%s333 + $0x38] sm:$0xf]
  %v349 = vld [vmem:[%s333 + $0x3c] sm:$0xf]
  %v354 = vunpack.c.l.b16 %v329
  %v355 = vunpack.c.l.b16 %v330
  %v356 = vunpack.c.l.b16 %v331
  %v357 = vunpack.c.l.b16 %v332
  %v358 = vpack.c.b16 %v355, %v354
  %v359 = vpack.c.b16 %v357, %v356
  %v378 = vunpack.c.l.b16 %v334
  %v379 = vunpack.c.l.b16 %v335
  %v380 = vunpack.c.l.b16 %v336
  %v381 = vunpack.c.l.b16 %v337
  %v382 = vunpack.c.l.b16 %v338
  %v383 = vunpack.c.l.b16 %v339
  %v384 = vunpack.c.l.b16 %v340
  %v385 = vunpack.c.l.b16 %v341
  %v386 = vunpack.c.l.b16 %v342
  %v387 = vunpack.c.l.b16 %v343
  %v388 = vunpack.c.l.b16 %v344
  %v389 = vunpack.c.l.b16 %v345
  %v390 = vunpack.c.l.b16 %v346
  %v391 = vunpack.c.l.b16 %v347
  %v392 = vunpack.c.l.b16 %v348
  %v393 = vunpack.c.l.b16 %v349
  %v394 = vpack.c.b16 %v379, %v378
  %v395 = vpack.c.b16 %v381, %v380
  %v396 = vpack.c.b16 %v383, %v382
  %v397 = vpack.c.b16 %v385, %v384
  %v398 = vpack.c.b16 %v387, %v386
  %v399 = vpack.c.b16 %v389, %v388
  %v400 = vpack.c.b16 %v391, %v390
  %v401 = vpack.c.b16 %v393, %v392
  %410 = vmatprep.subr.bf16.mxu0 0
  %411 = vmatpush1.bf16.msra.mxu0 %v394
  %412 = vmatprep.subr.bf16.mxu0 0
  %413 = vmatpush1.bf16.msra.mxu0 %v395
  %414 = vmatprep.subr.bf16.mxu0 0
  %415 = vmatpush1.bf16.msra.mxu0 %v396
  %416 = vmatprep.subr.bf16.mxu0 0
  %417 = vmatpush1.bf16.msra.mxu0 %v397
  %418 = vmatprep.subr.bf16.mxu0 0
  %419 = vmatpush1.bf16.msra.mxu0 %v398
  %420 = vmatprep.subr.bf16.mxu0 0
  %421 = vmatpush1.bf16.msra.mxu0 %v399
  %422 = vmatprep.subr.bf16.mxu0 0
  %423 = vmatpush1.bf16.msra.mxu0 %v400
  %424 = vmatprep.subr.bf16.mxu0 0
  %425 = vmatpush1.bf16.msra.mxu0 %v401
  %426 = vmatprep.subr.bf16.mxu0 0
  %427 = vmatpush1.bf16.msra.mxu0 0
  %428 = vmatprep.subr.bf16.mxu0 0
  %429 = vmatpush1.bf16.msra.mxu0 0
  %430 = vmatprep.subr.bf16.mxu0 0
  %431 = vmatpush1.bf16.msra.mxu0 0
  %432 = vmatprep.subr.bf16.mxu0 0
  %433 = vmatpush1.bf16.msra.mxu0 0
  %434 = vmatprep.subr.bf16.mxu0 0
  %435 = vmatpush1.bf16.msra.mxu0 0
  %436 = vmatprep.subr.bf16.mxu0 0
  %437 = vmatpush1.bf16.msra.mxu0 0
  %438 = vmatprep.subr.bf16.mxu0 0
  %439 = vmatpush1.bf16.msra.mxu0 0
  %440 = vmatprep.subr.bf16.mxu0 0
  %441 = vmatpush1.bf16.msra.mxu0 0
  %442 = vmatprep.mubr.bf16.mxu0 0
  %443 = vmatmul.mubr.bf16.gmra.mrb[0].mxu0 %v358
  %v444 = vpop.f32.mrb[0].mxu0
  %v445 = vadd.f32 0.0, %v444
  %v446 = vpop.f32.mrb[0].mxu0
  %v447 = vpop.f32.mrb[0].mxu0
  %v448 = vadd.f32 0.0, %v447
  %v449 = vpop.f32.mrb[0].mxu0
  %450 = vmatprep.mubr.bf16.mxu0 0
  %451 = vmatmul.mubr.bf16.gmra.mrb[0].mxu0 %v359
  %v452 = vpop.f32.mrb[0].mxu0
  %v453 = vadd.f32 0.0, %v452
  %v454 = vpop.f32.mrb[0].mxu0
  %v455 = vpop.f32.mrb[0].mxu0
  %v456 = vadd.f32 0.0, %v455
  %v457 = vpop.f32.mrb[0].mxu0
  %458 = vdwg.mxu0
  %v459 = vadd.f32 %v324, %v445
  %v460 = vadd.f32 %v325, %v448
  %v461 = vadd.f32 %v326, %v453
  %v462 = vadd.f32 %v327, %v456
  %463 = vst [vmem:[%s323] sm:$0xff] %v459
  %464 = vst [vmem:[%s323 + $0x8] sm:$0xff] %v460
  %465 = vst [vmem:[%s323 + $0x10] sm:$0xff] %v461
  %466 = vst [vmem:[%s323 + $0x18] sm:$0xff] %v462
  %s467 = scalar_lea.vmem [#allocation2], 96
  %v468 = vld [vmem:[%s467] sm:$0xff]
  %v469 = vld [vmem:[%s467 + $0x8] sm:$0xff]
  %v470 = vld [vmem:[%s467 + $0x10] sm:$0xff]
  %v471 = vld [vmem:[%s467 + $0x18] sm:$0xff]
  %s472 = scalar_lea.vmem %s0, 48
  %v473 = vld [vmem:[%s472] sm:$0xf]
  %v474 = vld [vmem:[%s472 + $0x4] sm:$0xf]
  %v475 = vld [vmem:[%s472 + $0x8] sm:$0xf]
  %v476 = vld [vmem:[%s472 + $0xc] sm:$0xf]
  %s477 = scalar_lea.vmem %s1, 192
  %v478 = vld [vmem:[%s477] sm:$0xf]
  %v479 = vld [vmem:[%s477 + $0x4] sm:$0xf]
  %v480 = vld [vmem:[%s477 + $0x8] sm:$0xf]
  %v481 = vld [vmem:[%s477 + $0xc] sm:$0xf]
  %v482 = vld [vmem:[%s477 + $0x10] sm:$0xf]
  %v483 = vld [vmem:[%s477 + $0x14] sm:$0xf]
  %v484 = vld [vmem:[%s477 + $0x18] sm:$0xf]
  %v485 = vld [vmem:[%s477 + $0x1c] sm:$0xf]
  %v486 = vld [vmem:[%s477 + $0x20] sm:$0xf]
  %v487 = vld [vmem:[%s477 + $0x24] sm:$0xf]
  %v488 = vld [vmem:[%s477 + $0x28] sm:$0xf]
  %v489 = vld [vmem:[%s477 + $0x2c] sm:$0xf]
  %v490 = vld [vmem:[%s477 + $0x30] sm:$0xf]
  %v491 = vld [vmem:[%s477 + $0x34] sm:$0xf]
  %v492 = vld [vmem:[%s477 + $0x38] sm:$0xf]
  %v493 = vld [vmem:[%s477 + $0x3c] sm:$0xf]
  %v498 = vunpack.c.l.b16 %v473
  %v499 = vunpack.c.l.b16 %v474
  %v500 = vunpack.c.l.b16 %v475
  %v501 = vunpack.c.l.b16 %v476
  %v502 = vpack.c.b16 %v499, %v498
  %v503 = vpack.c.b16 %v501, %v500
  %v522 = vunpack.c.l.b16 %v478
  %v523 = vunpack.c.l.b16 %v479
  %v524 = vunpack.c.l.b16 %v480
  %v525 = vunpack.c.l.b16 %v481
  %v526 = vunpack.c.l.b16 %v482
  %v527 = vunpack.c.l.b16 %v483
  %v528 = vunpack.c.l.b16 %v484
  %v529 = vunpack.c.l.b16 %v485
  %v530 = vunpack.c.l.b16 %v486
  %v531 = vunpack.c.l.b16 %v487
  %v532 = vunpack.c.l.b16 %v488
  %v533 = vunpack.c.l.b16 %v489
  %v534 = vunpack.c.l.b16 %v490
  %v535 = vunpack.c.l.b16 %v491
  %v536 = vunpack.c.l.b16 %v492
  %v537 = vunpack.c.l.b16 %v493
  %v538 = vpack.c.b16 %v523, %v522
  %v539 = vpack.c.b16 %v525, %v524
  %v540 = vpack.c.b16 %v527, %v526
  %v541 = vpack.c.b16 %v529, %v528
  %v542 = vpack.c.b16 %v531, %v530
  %v543 = vpack.c.b16 %v533, %v532
  %v544 = vpack.c.b16 %v535, %v534
  %v545 = vpack.c.b16 %v537, %v536
  %554 = vmatprep.subr.bf16.mxu0 0
  %555 = vmatpush1.bf16.msra.mxu0 %v538
  %556 = vmatprep.subr.bf16.mxu0 0
  %557 = vmatpush1.bf16.msra.mxu0 %v539
  %558 = vmatprep.subr.bf16.mxu0 0
  %559 = vmatpush1.bf16.msra.mxu0 %v540
  %560 = vmatprep.subr.bf16.mxu0 0
  %561 = vmatpush1.bf16.msra.mxu0 %v541
  %562 = vmatprep.subr.bf16.mxu0 0
  %563 = vmatpush1.bf16.msra.mxu0 %v542
  %564 = vmatprep.subr.bf16.mxu0 0
  %565 = vmatpush1.bf16.msra.mxu0 %v543
  %566 = vmatprep.subr.bf16.mxu0 0
  %567 = vmatpush1.bf16.msra.mxu0 %v544
  %568 = vmatprep.subr.bf16.mxu0 0
  %569 = vmatpush1.bf16.msra.mxu0 %v545
  %570 = vmatprep.subr.bf16.mxu0 0
  %571 = vmatpush1.bf16.msra.mxu0 0
  %572 = vmatprep.subr.bf16.mxu0 0
  %573 = vmatpush1.bf16.msra.mxu0 0
  %574 = vmatprep.subr.bf16.mxu0 0
  %575 = vmatpush1.bf16.msra.mxu0 0
  %576 = vmatprep.subr.bf16.mxu0 0
  %577 = vmatpush1.bf16.msra.mxu0 0
  %578 = vmatprep.subr.bf16.mxu0 0
  %579 = vmatpush1.bf16.msra.mxu0 0
  %580 = vmatprep.subr.bf16.mxu0 0
  %581 = vmatpush1.bf16.msra.mxu0 0
  %582 = vmatprep.subr.bf16.mxu0 0
  %583 = vmatpush1.bf16.msra.mxu0 0
  %584 = vmatprep.subr.bf16.mxu0 0
  %585 = vmatpush1.bf16.msra.mxu0 0
  %586 = vmatprep.mubr.bf16.mxu0 0
  %587 = vmatmul.mubr.bf16.gmra.mrb[0].mxu0 %v502
  %v588 = vpop.f32.mrb[0].mxu0
  %v589 = vadd.f32 0.0, %v588
  %v590 = vpop.f32.mrb[0].mxu0
  %v591 = vpop.f32.mrb[0].mxu0
  %v592 = vadd.f32 0.0, %v591
  %v593 = vpop.f32.mrb[0].mxu0
  %594 = vmatprep.mubr.bf16.mxu0 0
  %595 = vmatmul.mubr.bf16.gmra.mrb[0].mxu0 %v503
  %v596 = vpop.f32.mrb[0].mxu0
  %v597 = vadd.f32 0.0, %v596
  %v598 = vpop.f32.mrb[0].mxu0
  %v599 = vpop.f32.mrb[0].mxu0
  %v600 = vadd.f32 0.0, %v599
  %v601 = vpop.f32.mrb[0].mxu0
  %602 = vdwg.mxu0
  %v603 = vadd.f32 %v468, %v589
  %v604 = vadd.f32 %v469, %v592
  %v605 = vadd.f32 %v470, %v597
  %v606 = vadd.f32 %v471, %v600
  %607 = vst [vmem:[%s467] sm:$0xff] %v603
  %608 = vst [vmem:[%s467 + $0x8] sm:$0xff] %v604
  %609 = vst [vmem:[%s467 + $0x10] sm:$0xff] %v605
  %610 = vst [vmem:[%s467 + $0x18] sm:$0xff] %v606
  // Predicated region
  $region22: #{baseline_model_3layer_forward.10} parent=0 // pred_check
    %p611 = pneg %p18
  $region23: #{baseline_model_3layer_forward.10} parent=0 // pred_check_branch
    %613 = sbr.rel (%p611) target = $region25
  $region24: #{baseline_model_3layer_forward.10} parent=0 // pred_region
    %v614 = vld [vmem:[#allocation2] sm:$0xff]
    %v615 = vld [vmem:[#allocation2 + $0x8] sm:$0xff]
    %v616 = vld [vmem:[#allocation2 + $0x10] sm:$0xff]
    %v617 = vld [vmem:[#allocation2 + $0x18] sm:$0xff]
    %v618 = vld [vmem:[#allocation2 + $0x20] sm:$0xff]
    %v619 = vld [vmem:[#allocation2 + $0x28] sm:$0xff]
    %v620 = vld [vmem:[#allocation2 + $0x30] sm:$0xff]
    %v621 = vld [vmem:[#allocation2 + $0x38] sm:$0xff]
    %v622 = vld [vmem:[#allocation2 + $0x40] sm:$0xff]
    %v623 = vld [vmem:[#allocation2 + $0x48] sm:$0xff]
    %v624 = vld [vmem:[#allocation2 + $0x50] sm:$0xff]
    %v625 = vld [vmem:[#allocation2 + $0x58] sm:$0xff]
    %v626 = vld [vmem:[#allocation2 + $0x60] sm:$0xff]
    %v627 = vld [vmem:[#allocation2 + $0x68] sm:$0xff]
    %v628 = vld [vmem:[#allocation2 + $0x70] sm:$0xff]
    %v629 = vld [vmem:[#allocation2 + $0x78] sm:$0xff]
    %v630 = vadd.f32 %v614, %v615
    %v631 = vadd.f32 %v630, %v616
    %v632 = vadd.f32 %v631, %v617
    %v633 = vadd.f32 %v632, %v618
    %v634 = vadd.f32 %v633, %v619
    %v635 = vadd.f32 %v634, %v620
    %v636 = vadd.f32 %v635, %v621
    %v637 = vadd.f32 %v636, %v622
    %v638 = vadd.f32 %v637, %v623
    %v639 = vadd.f32 %v638, %v624
    %v640 = vadd.f32 %v639, %v625
    %v641 = vadd.f32 %v640, %v626
    %v642 = vadd.f32 %v641, %v627
    %v643 = vadd.f32 %v642, %v628
    %v644 = vadd.f32 %v643, %v629
    %v645 = vrot.slane %v644, 4
    %v646 = vadd.f32 %v644, %v645
    %v647 = vrot.slane %v646, 2
    %v648 = vadd.f32 %v646, %v647
    %v649 = vrot.slane %v648, 1
    %v650 = vadd.f32 %v648, %v649
    %v651 = vmul.f32 %v614, %v614
    %v652 = vmul.f32 %v615, %v615
    %v653 = vmul.f32 %v616, %v616
    %v654 = vmul.f32 %v617, %v617
    %v655 = vmul.f32 %v618, %v618
    %v656 = vmul.f32 %v619, %v619
    %v657 = vmul.f32 %v620, %v620
    %v658 = vmul.f32 %v621, %v621
    %v659 = vmul.f32 %v622, %v622
    %v660 = vmul.f32 %v623, %v623
    %v661 = vmul.f32 %v624, %v624
    %v662 = vmul.f32 %v625, %v625
    %v663 = vmul.f32 %v626, %v626
    %v664 = vmul.f32 %v627, %v627
    %v665 = vmul.f32 %v628, %v628
    %v666 = vmul.f32 %v629, %v629
    %v667 = vadd.f32 %v651, %v652
    %v668 = vadd.f32 %v667, %v653
    %v669 = vadd.f32 %v668, %v654
    %v670 = vadd.f32 %v669, %v655
    %v671 = vadd.f32 %v670, %v656
    %v672 = vadd.f32 %v671, %v657
    %v673 = vadd.f32 %v672, %v658
    %v674 = vadd.f32 %v673, %v659
    %v675 = vadd.f32 %v674, %v660
    %v676 = vadd.f32 %v675, %v661
    %v677 = vadd.f32 %v676, %v662
    %v678 = vadd.f32 %v677, %v663
    %v679 = vadd.f32 %v678, %v664
    %v680 = vadd.f32 %v679, %v665
    %v681 = vadd.f32 %v680, %v666
    %v682 = vrot.slane %v681, 4
    %v683 = vadd.f32 %v681, %v682
    %v684 = vrot.slane %v683, 2
    %v685 = vadd.f32 %v683, %v684
    %v686 = vrot.slane %v685, 1
    %v687 = vadd.f32 %v685, %v686
    %v688 = vmul.f32 %v650, 0.0078125
    %v689 = vmul.f32 %v687, 0.0078125
    %v690 = vmul.f32 %v688, %v688
    %v691 = vsub.f32 %v689, %v690
    %v692 = vsub.f32 %v614, %v688
    %v693 = vsub.f32 %v615, %v688
    %v694 = vsub.f32 %v616, %v688
    %v695 = vsub.f32 %v617, %v688
    %v696 = vsub.f32 %v618, %v688
    %v697 = vsub.f32 %v619, %v688
    %v698 = vsub.f32 %v620, %v688
    %v699 = vsub.f32 %v621, %v688
    %v700 = vsub.f32 %v622, %v688
    %v701 = vsub.f32 %v623, %v688
    %v702 = vsub.f32 %v624, %v688
    %v703 = vsub.f32 %v625, %v688
    %v704 = vsub.f32 %v626, %v688
    %v705 = vsub.f32 %v627, %v688
    %v706 = vsub.f32 %v628, %v688
    %v707 = vsub.f32 %v629, %v688
    %v708 = vadd.f32 %v691, 1e-05
    %v709 = vrsqrt.pop %v708
    %v710 = vld [vmem:[%s2] sm:$0x1]
    %v711 = vmul.f32 %v709, %v710
    %v712 = vlaneseq
    %v713 = vshrl.u32 %v712, 7
    %v714 = vsub.s32 0, %v713
    %v715 = vrot.slane %v711, %v714
    %v716 = vmul.f32 %v692, %v715
    %v717 = vmul.f32 %v693, %v715
    %v718 = vmul.f32 %v694, %v715
    %v719 = vmul.f32 %v695, %v715
    %v720 = vmul.f32 %v696, %v715
    %v721 = vmul.f32 %v697, %v715
    %v722 = vmul.f32 %v698, %v715
    %v723 = vmul.f32 %v699, %v715
    %v724 = vmul.f32 %v700, %v715
    %v725 = vmul.f32 %v701, %v715
    %v726 = vmul.f32 %v702, %v715
    %v727 = vmul.f32 %v703, %v715
    %v728 = vmul.f32 %v704, %v715
    %v729 = vmul.f32 %v705, %v715
    %v730 = vmul.f32 %v706, %v715
    %v731 = vmul.f32 %v707, %v715
    %v732 = vld [vmem:[%s3] sm:$0x1]
    %v734 = vlaneseq
    %v735 = vshrl.u32 %v734, 7
    %v736 = vsub.s32 0, %v735
    %v737 = vrot.slane %v732, %v736
    %v739 = vadd.f32 %v716, %v737
    %v740 = vadd.f32 %v717, %v737
    %v741 = vadd.f32 %v718, %v737
    %v742 = vadd.f32 %v719, %v737
    %v743 = vadd.f32 %v720, %v737
    %v744 = vadd.f32 %v721, %v737
    %v745 = vadd.f32 %v722, %v737
    %v746 = vadd.f32 %v723, %v737
    %v747 = vadd.f32 %v724, %v737
    %v748 = vadd.f32 %v725, %v737
    %v749 = vadd.f32 %v726, %v737
    %v750 = vadd.f32 %v727, %v737
    %v751 = vadd.f32 %v728, %v737
    %v752 = vadd.f32 %v729, %v737
    %v753 = vadd.f32 %v730, %v737
    %v754 = vadd.f32 %v731, %v737
    %v755 = vmax.f32 %v739, 0.0
    %v756 = vmax.f32 %v740, 0.0
    %v757 = vmax.f32 %v741, 0.0
    %v758 = vmax.f32 %v742, 0.0
    %v759 = vmax.f32 %v743, 0.0
    %v760 = vmax.f32 %v744, 0.0
    %v761 = vmax.f32 %v745, 0.0
    %v762 = vmax.f32 %v746, 0.0
    %v763 = vmax.f32 %v747, 0.0
    %v764 = vmax.f32 %v748, 0.0
    %v765 = vmax.f32 %v749, 0.0
    %v766 = vmax.f32 %v750, 0.0
    %v767 = vmax.f32 %v751, 0.0
    %v768 = vmax.f32 %v752, 0.0
    %v769 = vmax.f32 %v753, 0.0
    %v770 = vmax.f32 %v754, 0.0
    %v771 = vpack.c.bf16 %v756, %v755
    %v772 = vpack.c.bf16 %v758, %v757
    %v773 = vpack.c.bf16 %v760, %v759
    %v774 = vpack.c.bf16 %v762, %v761
    %v775 = vpack.c.bf16 %v764, %v763
    %v776 = vpack.c.bf16 %v766, %v765
    %v777 = vpack.c.bf16 %v768, %v767
    %v778 = vpack.c.bf16 %v770, %v769
    %v787 = vunpack.c.l.b16 %v771
    %v788 = vunpack.c.h.b16 %v771
    %v789 = vunpack.c.l.b16 %v772
    %v790 = vunpack.c.h.b16 %v772
    %v791 = vunpack.c.l.b16 %v773
    %v792 = vunpack.c.h.b16 %v773
    %v793 = vunpack.c.l.b16 %v774
    %v794 = vunpack.c.h.b16 %v774
    %v795 = vunpack.c.l.b16 %v775
    %v796 = vunpack.c.h.b16 %v775
    %v797 = vunpack.c.l.b16 %v776
    %v798 = vunpack.c.h.b16 %v776
    %v799 = vunpack.c.l.b16 %v777
    %v800 = vunpack.c.h.b16 %v777
    %v801 = vunpack.c.l.b16 %v778
    %v802 = vunpack.c.h.b16 %v778
    %v803 = vpack.c.b16 %v787, %v787
    %v804 = vpack.c.b16 %v788, %v788
    %v805 = vpack.c.b16 %v789, %v789
    %v806 = vpack.c.b16 %v790, %v790
    %v807 = vpack.c.b16 %v791, %v791
    %v808 = vpack.c.b16 %v792, %v792
    %v809 = vpack.c.b16 %v793, %v793
    %v810 = vpack.c.b16 %v794, %v794
    %v811 = vpack.c.b16 %v795, %v795
    %v812 = vpack.c.b16 %v796, %v796
    %v813 = vpack.c.b16 %v797, %v797
    %v814 = vpack.c.b16 %v798, %v798
    %v815 = vpack.c.b16 %v799, %v799
    %v816 = vpack.c.b16 %v800, %v800
    %v817 = vpack.c.b16 %v801, %v801
    %v818 = vpack.c.b16 %v802, %v802
    %835 = vst [vmem:[%s4] sm:$0xf] %v803
    %836 = vst [vmem:[%s4 + $0x4] sm:$0xf] %v804
    %837 = vst [vmem:[%s4 + $0x8] sm:$0xf] %v805
    %838 = vst [vmem:[%s4 + $0xc] sm:$0xf] %v806
    %839 = vst [vmem:[%s4 + $0x10] sm:$0xf] %v807
    %840 = vst [vmem:[%s4 + $0x14] sm:$0xf] %v808
    %841 = vst [vmem:[%s4 + $0x18] sm:$0xf] %v809
    %842 = vst [vmem:[%s4 + $0x1c] sm:$0xf] %v810
    %843 = vst [vmem:[%s4 + $0x20] sm:$0xf] %v811
    %844 = vst [vmem:[%s4 + $0x24] sm:$0xf] %v812
    %845 = vst [vmem:[%s4 + $0x28] sm:$0xf] %v813
    %846 = vst [vmem:[%s4 + $0x2c] sm:$0xf] %v814
    %847 = vst [vmem:[%s4 + $0x30] sm:$0xf] %v815
    %848 = vst [vmem:[%s4 + $0x34] sm:$0xf] %v816
    %849 = vst [vmem:[%s4 + $0x38] sm:$0xf] %v817
    %850 = vst [vmem:[%s4 + $0x3c] sm:$0xf] %v818
  $region25: #{baseline_model_3layer_forward.10} parent=0 // pred_fallthru
    _
  // Predicated region
  $region26: #{baseline_model_3layer_forward.10} parent=0 // pred_check
    _
  $region27: #{baseline_model_3layer_forward.10} parent=0 // pred_check_branch
    %852 = sbr.rel (0) target = $region29
  $region28: #{baseline_model_3layer_forward.10} parent=0 // pred_region
    _
  $region29: #{baseline_model_3layer_forward.10} parent=0 // pred_fallthru
    _
  // Predicated region
  $region30: #{baseline_model_3layer_forward.10} parent=0 // pred_check
    _
  $region31: #{baseline_model_3layer_forward.10} parent=0 // pred_check_branch
    %854 = sbr.rel (0) target = $region33
  $region32: #{baseline_model_3layer_forward.10} parent=0 // pred_region
    _
  $region33: #{baseline_model_3layer_forward.10} parent=0 // pred_fallthru
    _

// kernel: baseline_model_3layer_forward.11
$region0: #{baseline_model_3layer_forward.11}
  #allocation0 [shape = 'u32[]', space=smem, size = 0x4, offset = 0x4, fixed_abs, tag = 'smem constant byte address 0x4 - core index']
  #allocation1 [shape = 'u32[144,128]{1,0:T(1,128)}', space=vmem, size = 0x12000, scoped, tag = 'internal scratch']
  #allocation2 [shape = 'f32[4,128,128]{2,1,0:T(8,128)}', space=vmem, size = 0x40000, scoped, tag = 'scratch operand']
  %s0 = inlined_call_operand.vmem [shape: bf16[4,128,128], index: 0, kind: input, shape index: {}]
  %s1 = inlined_call_operand.vmem [shape: bf16[4,128,128], index: 1, kind: input, shape index: {}]
  %s2 = inlined_call_operand.vmem [shape: f32[1,128], index: 2, kind: input, shape index: {}]
  %s3 = inlined_call_operand.vmem [shape: f32[1,128], index: 3, kind: input, shape index: {}]
  %s4 = inlined_call_operand.vmem [shape: f32[4,128,128], index: 4, kind: output, shape index: {}]
  %s5 = sld [smem:[#allocation0]]
  $region34: #{baseline_model_3layer_forward.11} parent=0
    _
  %s7 = ssub.s32 1, %s5
  %s8 = scalar_select 0, %s7, %s5
  // Predicated region
  $region2: #{baseline_model_3layer_forward.11} parent=0 // pred_check
    _
  $region3: #{baseline_model_3layer_forward.11} parent=0 // pred_check_branch
    %10 = sbr.rel (0) target = $region5
  $region4: #{baseline_model_3layer_forward.11} parent=0 // pred_region
    _
  $region5: #{baseline_model_3layer_forward.11} parent=0 // pred_fallthru
    _
  // Predicated region
  $region6: #{baseline_model_3layer_forward.11} parent=0 // pred_check
    _
  $region7: #{baseline_model_3layer_forward.11} parent=0 // pred_check_branch
    %12 = sbr.rel (0) target = $region9
  $region8: #{baseline_model_3layer_forward.11} parent=0 // pred_region
    _
  $region9: #{baseline_model_3layer_forward.11} parent=0 // pred_fallthru
    _
  // Predicated region
  $region10: #{baseline_model_3layer_forward.11} parent=0 // pred_check
    _
  $region11: #{baseline_model_3layer_forward.11} parent=0 // pred_check_branch
    %14 = sbr.rel (0) target = $region13
  $region12: #{baseline_model_3layer_forward.11} parent=0 // pred_region
    _
  $region13: #{baseline_model_3layer_forward.11} parent=0 // pred_fallthru
    _
  // Predicated region
  $region14: #{baseline_model_3layer_forward.11} parent=0 // pred_check
    _
  $region15: #{baseline_model_3layer_forward.11} parent=0 // pred_check_branch
    %16 = sbr.rel (0) target = $region17
  $region16: #{baseline_model_3layer_forward.11} parent=0 // pred_region
    _
  $region17: #{baseline_model_3layer_forward.11} parent=0 // pred_fallthru
    _
  %p18 = scmp.eq.s32.totalorder 0, 0
  // Predicated region
  $region18: #{baseline_model_3layer_forward.11} parent=0 // pred_check
    %p19 = pneg %p18
  $region19: #{baseline_model_3layer_forward.11} parent=0 // pred_check_branch
    %21 = sbr.rel (%p19) target = $region21
  $region20: #{baseline_model_3layer_forward.11} parent=0 // pred_region
    %22 = vst [vmem:[#allocation2] sm:$0xff] 0.0
    %23 = vst [vmem:[#allocation2 + $0x8] sm:$0xff] 0.0
    %24 = vst [vmem:[#allocation2 + $0x10] sm:$0xff] 0.0
    %25 = vst [vmem:[#allocation2 + $0x18] sm:$0xff] 0.0
    %26 = vst [vmem:[#allocation2 + $0x20] sm:$0xff] 0.0
    %27 = vst [vmem:[#allocation2 + $0x28] sm:$0xff] 0.0
    %28 = vst [vmem:[#allocation2 + $0x30] sm:$0xff] 0.0
    %29 = vst [vmem:[#allocation2 + $0x38] sm:$0xff] 0.0
    %30 = vst [vmem:[#allocation2 + $0x40] sm:$0xff] 0.0
    %31 = vst [vmem:[#allocation2 + $0x48] sm:$0xff] 0.0
    %32 = vst [vmem:[#allocation2 + $0x50] sm:$0xff] 0.0
    %33 = vst [vmem:[#allocation2 + $0x58] sm:$0xff] 0.0
    %34 = vst [vmem:[#allocation2 + $0x60] sm:$0xff] 0.0
    %35 = vst [vmem:[#allocation2 + $0x68] sm:$0xff] 0.0
    %36 = vst [vmem:[#allocation2 + $0x70] sm:$0xff] 0.0
    %37 = vst [vmem:[#allocation2 + $0x78] sm:$0xff] 0.0
    %38 = vst [vmem:[#allocation2 + $0x80] sm:$0xff] 0.0
    %39 = vst [vmem:[#allocation2 + $0x88] sm:$0xff] 0.0
    %40 = vst [vmem:[#allocation2 + $0x90] sm:$0xff] 0.0
    %41 = vst [vmem:[#allocation2 + $0x98] sm:$0xff] 0.0
    %42 = vst [vmem:[#allocation2 + $0xa0] sm:$0xff] 0.0
    %43 = vst [vmem:[#allocation2 + $0xa8] sm:$0xff] 0.0
    %44 = vst [vmem:[#allocation2 + $0xb0] sm:$0xff] 0.0
    %45 = vst [vmem:[#allocation2 + $0xb8] sm:$0xff] 0.0
    %46 = vst [vmem:[#allocation2 + $0xc0] sm:$0xff] 0.0
    %47 = vst [vmem:[#allocation2 + $0xc8] sm:$0xff] 0.0
    %48 = vst [vmem:[#allocation2 + $0xd0] sm:$0xff] 0.0
    %49 = vst [vmem:[#allocation2 + $0xd8] sm:$0xff] 0.0
    %50 = vst [vmem:[#allocation2 + $0xe0] sm:$0xff] 0.0
    %51 = vst [vmem:[#allocation2 + $0xe8] sm:$0xff] 0.0
    %52 = vst [vmem:[#allocation2 + $0xf0] sm:$0xff] 0.0
    %53 = vst [vmem:[#allocation2 + $0xf8] sm:$0xff] 0.0
    %54 = vst [vmem:[#allocation2 + $0x100] sm:$0xff] 0.0
    %55 = vst [vmem:[#allocation2 + $0x108] sm:$0xff] 0.0
    %56 = vst [vmem:[#allocation2 + $0x110] sm:$0xff] 0.0
    %57 = vst [vmem:[#allocation2 + $0x118] sm:$0xff] 0.0
    %58 = vst [vmem:[#allocation2 + $0x120] sm:$0xff] 0.0
    %59 = vst [vmem:[#allocation2 + $0x128] sm:$0xff] 0.0
    %60 = vst [vmem:[#allocation2 + $0x130] sm:$0xff] 0.0
    %61 = vst [vmem:[#allocation2 + $0x138] sm:$0xff] 0.0
    %62 = vst [vmem:[#allocation2 + $0x140] sm:$0xff] 0.0
    %63 = vst [vmem:[#allocation2 + $0x148] sm:$0xff] 0.0
    %64 = vst [vmem:[#allocation2 + $0x150] sm:$0xff] 0.0
    %65 = vst [vmem:[#allocation2 + $0x158] sm:$0xff] 0.0
    %66 = vst [vmem:[#allocation2 + $0x160] sm:$0xff] 0.0
    %67 = vst [vmem:[#allocation2 + $0x168] sm:$0xff] 0.0
    %68 = vst [vmem:[#allocation2 + $0x170] sm:$0xff] 0.0
    %69 = vst [vmem:[#allocation2 + $0x178] sm:$0xff] 0.0
    %70 = vst [vmem:[#allocation2 + $0x180] sm:$0xff] 0.0
    %71 = vst [vmem:[#allocation2 + $0x188] sm:$0xff] 0.0
    %72 = vst [vmem:[#allocation2 + $0x190] sm:$0xff] 0.0
    %73 = vst [vmem:[#allocation2 + $0x198] sm:$0xff] 0.0
    %74 = vst [vmem:[#allocation2 + $0x1a0] sm:$0xff] 0.0
    %75 = vst [vmem:[#allocation2 + $0x1a8] sm:$0xff] 0.0
    %76 = vst [vmem:[#allocation2 + $0x1b0] sm:$0xff] 0.0
    %77 = vst [vmem:[#allocation2 + $0x1b8] sm:$0xff] 0.0
    %78 = vst [vmem:[#allocation2 + $0x1c0] sm:$0xff] 0.0
    %79 = vst [vmem:[#allocation2 + $0x1c8] sm:$0xff] 0.0
    %80 = vst [vmem:[#allocation2 + $0x1d0] sm:$0xff] 0.0
    %81 = vst [vmem:[#allocation2 + $0x1d8] sm:$0xff] 0.0
    %82 = vst [vmem:[#allocation2 + $0x1e0] sm:$0xff] 0.0
    %83 = vst [vmem:[#allocation2 + $0x1e8] sm:$0xff] 0.0
    %84 = vst [vmem:[#allocation2 + $0x1f0] sm:$0xff] 0.0
    %85 = vst [vmem:[#allocation2 + $0x1f8] sm:$0xff] 0.0
  $region21: #{baseline_model_3layer_forward.11} parent=0 // pred_fallthru
    _
  %v86 = vld [vmem:[#allocation2] sm:$0xff]
  %v87 = vld [vmem:[#allocation2 + $0x8] sm:$0xff]
  %v88 = vld [vmem:[#allocation2 + $0x10] sm:$0xff]
  %v89 = vld [vmem:[#allocation2 + $0x18] sm:$0xff]
  %v90 = vld [vmem:[#allocation2 + $0x20] sm:$0xff]
  %v91 = vld [vmem:[#allocation2 + $0x28] sm:$0xff]
  %v92 = vld [vmem:[#allocation2 + $0x30] sm:$0xff]
  %v93 = vld [vmem:[#allocation2 + $0x38] sm:$0xff]
  %v94 = vld [vmem:[#allocation2 + $0x40] sm:$0xff]
  %v95 = vld [vmem:[#allocation2 + $0x48] sm:$0xff]
  %v96 = vld [vmem:[#allocation2 + $0x50] sm:$0xff]
  %v97 = vld [vmem:[#allocation2 + $0x58] sm:$0xff]
  %v98 = vld [vmem:[#allocation2 + $0x60] sm:$0xff]
  %v99 = vld [vmem:[#allocation2 + $0x68] sm:$0xff]
  %v100 = vld [vmem:[#allocation2 + $0x70] sm:$0xff]
  %v101 = vld [vmem:[#allocation2 + $0x78] sm:$0xff]
  %v102 = vld [vmem:[%s0] sm:$0xf]
  %v103 = vld [vmem:[%s0 + $0x4] sm:$0xf]
  %v104 = vld [vmem:[%s0 + $0x8] sm:$0xf]
  %v105 = vld [vmem:[%s0 + $0xc] sm:$0xf]
  %v106 = vld [vmem:[%s0 + $0x10] sm:$0xf]
  %v107 = vld [vmem:[%s0 + $0x14] sm:$0xf]
  %v108 = vld [vmem:[%s0 + $0x18] sm:$0xf]
  %v109 = vld [vmem:[%s0 + $0x1c] sm:$0xf]
  %v110 = vld [vmem:[%s0 + $0x20] sm:$0xf]
  %v111 = vld [vmem:[%s0 + $0x24] sm:$0xf]
  %v112 = vld [vmem:[%s0 + $0x28] sm:$0xf]
  %v113 = vld [vmem:[%s0 + $0x2c] sm:$0xf]
  %v114 = vld [vmem:[%s0 + $0x30] sm:$0xf]
  %v115 = vld [vmem:[%s0 + $0x34] sm:$0xf]
  %v116 = vld [vmem:[%s0 + $0x38] sm:$0xf]
  %v117 = vld [vmem:[%s0 + $0x3c] sm:$0xf]
  %v118 = vld [vmem:[%s1] sm:$0xf]
  %v119 = vld [vmem:[%s1 + $0x4] sm:$0xf]
  %v120 = vld [vmem:[%s1 + $0x8] sm:$0xf]
  %v121 = vld [vmem:[%s1 + $0xc] sm:$0xf]
  %v122 = vld [vmem:[%s1 + $0x10] sm:$0xf]
  %v123 = vld [vmem:[%s1 + $0x14] sm:$0xf]
  %v124 = vld [vmem:[%s1 + $0x18] sm:$0xf]
  %v125 = vld [vmem:[%s1 + $0x1c] sm:$0xf]
  %v126 = vld [vmem:[%s1 + $0x20] sm:$0xf]
  %v127 = vld [vmem:[%s1 + $0x24] sm:$0xf]
  %v128 = vld [vmem:[%s1 + $0x28] sm:$0xf]
  %v129 = vld [vmem:[%s1 + $0x2c] sm:$0xf]
  %v130 = vld [vmem:[%s1 + $0x30] sm:$0xf]
  %v131 = vld [vmem:[%s1 + $0x34] sm:$0xf]
  %v132 = vld [vmem:[%s1 + $0x38] sm:$0xf]
  %v133 = vld [vmem:[%s1 + $0x3c] sm:$0xf]
  %v150 = vunpack.c.l.b16 %v102
  %v151 = vunpack.c.l.b16 %v103
  %v152 = vunpack.c.l.b16 %v104
  %v153 = vunpack.c.l.b16 %v105
  %v154 = vunpack.c.l.b16 %v106
  %v155 = vunpack.c.l.b16 %v107
  %v156 = vunpack.c.l.b16 %v108
  %v157 = vunpack.c.l.b16 %v109
  %v158 = vunpack.c.l.b16 %v110
  %v159 = vunpack.c.l.b16 %v111
  %v160 = vunpack.c.l.b16 %v112
  %v161 = vunpack.c.l.b16 %v113
  %v162 = vunpack.c.l.b16 %v114
  %v163 = vunpack.c.l.b16 %v115
  %v164 = vunpack.c.l.b16 %v116
  %v165 = vunpack.c.l.b16 %v117
  %v166 = vpack.c.b16 %v151, %v150
  %v167 = vpack.c.b16 %v153, %v152
  %v168 = vpack.c.b16 %v155, %v154
  %v169 = vpack.c.b16 %v157, %v156
  %v170 = vpack.c.b16 %v159, %v158
  %v171 = vpack.c.b16 %v161, %v160
  %v172 = vpack.c.b16 %v163, %v162
  %v173 = vpack.c.b16 %v165, %v164
  %v198 = vunpack.c.l.b16 %v118
  %v199 = vunpack.c.l.b16 %v119
  %v200 = vunpack.c.l.b16 %v120
  %v201 = vunpack.c.l.b16 %v121
  %v202 = vunpack.c.l.b16 %v122
  %v203 = vunpack.c.l.b16 %v123
  %v204 = vunpack.c.l.b16 %v124
  %v205 = vunpack.c.l.b16 %v125
  %v206 = vunpack.c.l.b16 %v126
  %v207 = vunpack.c.l.b16 %v127
  %v208 = vunpack.c.l.b16 %v128
  %v209 = vunpack.c.l.b16 %v129
  %v210 = vunpack.c.l.b16 %v130
  %v211 = vunpack.c.l.b16 %v131
  %v212 = vunpack.c.l.b16 %v132
  %v213 = vunpack.c.l.b16 %v133
  %v214 = vpack.c.b16 %v199, %v198
  %v215 = vpack.c.b16 %v201, %v200
  %v216 = vpack.c.b16 %v203, %v202
  %v217 = vpack.c.b16 %v205, %v204
  %v218 = vpack.c.b16 %v207, %v206
  %v219 = vpack.c.b16 %v209, %v208
  %v220 = vpack.c.b16 %v211, %v210
  %v221 = vpack.c.b16 %v213, %v212
  %230 = vmatprep.subr.bf16.mxu0 0
  %231 = vmatpush1.bf16.msra.mxu0 %v214
  %232 = vmatprep.subr.bf16.mxu0 0
  %233 = vmatpush1.bf16.msra.mxu0 %v215
  %234 = vmatprep.subr.bf16.mxu0 0
  %235 = vmatpush1.bf16.msra.mxu0 %v216
  %236 = vmatprep.subr.bf16.mxu0 0
  %237 = vmatpush1.bf16.msra.mxu0 %v217
  %238 = vmatprep.subr.bf16.mxu0 0
  %239 = vmatpush1.bf16.msra.mxu0 %v218
  %240 = vmatprep.subr.bf16.mxu0 0
  %241 = vmatpush1.bf16.msra.mxu0 %v219
  %242 = vmatprep.subr.bf16.mxu0 0
  %243 = vmatpush1.bf16.msra.mxu0 %v220
  %244 = vmatprep.subr.bf16.mxu0 0
  %245 = vmatpush1.bf16.msra.mxu0 %v221
  %246 = vmatprep.subr.bf16.mxu0 0
  %247 = vmatpush1.bf16.msra.mxu0 0
  %248 = vmatprep.subr.bf16.mxu0 0
  %249 = vmatpush1.bf16.msra.mxu0 0
  %250 = vmatprep.subr.bf16.mxu0 0
  %251 = vmatpush1.bf16.msra.mxu0 0
  %252 = vmatprep.subr.bf16.mxu0 0
  %253 = vmatpush1.bf16.msra.mxu0 0
  %254 = vmatprep.subr.bf16.mxu0 0
  %255 = vmatpush1.bf16.msra.mxu0 0
  %256 = vmatprep.subr.bf16.mxu0 0
  %257 = vmatpush1.bf16.msra.mxu0 0
  %258 = vmatprep.subr.bf16.mxu0 0
  %259 = vmatpush1.bf16.msra.mxu0 0
  %260 = vmatprep.subr.bf16.mxu0 0
  %261 = vmatpush1.bf16.msra.mxu0 0
  %262 = vmatprep.mubr.bf16.mxu0 0
  %263 = vmatmul.mubr.bf16.gmra.mrb[0].mxu0 %v166
  %v264 = vpop.f32.mrb[0].mxu0
  %v265 = vadd.f32 0.0, %v264
  %v266 = vpop.f32.mrb[0].mxu0
  %v267 = vpop.f32.mrb[0].mxu0
  %v268 = vadd.f32 0.0, %v267
  %v269 = vpop.f32.mrb[0].mxu0
  %270 = vmatprep.mubr.bf16.mxu0 0
  %271 = vmatmul.mubr.bf16.gmra.mrb[0].mxu0 %v167
  %v272 = vpop.f32.mrb[0].mxu0
  %v273 = vadd.f32 0.0, %v272
  %v274 = vpop.f32.mrb[0].mxu0
  %v275 = vpop.f32.mrb[0].mxu0
  %v276 = vadd.f32 0.0, %v275
  %v277 = vpop.f32.mrb[0].mxu0
  %278 = vmatprep.mubr.bf16.mxu0 0
  %279 = vmatmul.mubr.bf16.gmra.mrb[0].mxu0 %v168
  %v280 = vpop.f32.mrb[0].mxu0
  %v281 = vadd.f32 0.0, %v280
  %v282 = vpop.f32.mrb[0].mxu0
  %v283 = vpop.f32.mrb[0].mxu0
  %v284 = vadd.f32 0.0, %v283
  %v285 = vpop.f32.mrb[0].mxu0
  %286 = vmatprep.mubr.bf16.mxu0 0
  %287 = vmatmul.mubr.bf16.gmra.mrb[0].mxu0 %v169
  %v288 = vpop.f32.mrb[0].mxu0
  %v289 = vadd.f32 0.0, %v288
  %v290 = vpop.f32.mrb[0].mxu0
  %v291 = vpop.f32.mrb[0].mxu0
  %v292 = vadd.f32 0.0, %v291
  %v293 = vpop.f32.mrb[0].mxu0
  %294 = vmatprep.mubr.bf16.mxu0 0
  %295 = vmatmul.mubr.bf16.gmra.mrb[0].mxu0 %v170
  %v296 = vpop.f32.mrb[0].mxu0
  %v297 = vadd.f32 0.0, %v296
  %v298 = vpop.f32.mrb[0].mxu0
  %v299 = vpop.f32.mrb[0].mxu0
  %v300 = vadd.f32 0.0, %v299
  %v301 = vpop.f32.mrb[0].mxu0
  %302 = vmatprep.mubr.bf16.mxu0 0
  %303 = vmatmul.mubr.bf16.gmra.mrb[0].mxu0 %v171
  %v304 = vpop.f32.mrb[0].mxu0
  %v305 = vadd.f32 0.0, %v304
  %v306 = vpop.f32.mrb[0].mxu0
  %v307 = vpop.f32.mrb[0].mxu0
  %v308 = vadd.f32 0.0, %v307
  %v309 = vpop.f32.mrb[0].mxu0
  %310 = vmatprep.mubr.bf16.mxu0 0
  %311 = vmatmul.mubr.bf16.gmra.mrb[0].mxu0 %v172
  %v312 = vpop.f32.mrb[0].mxu0
  %v313 = vadd.f32 0.0, %v312
  %v314 = vpop.f32.mrb[0].mxu0
  %v315 = vpop.f32.mrb[0].mxu0
  %v316 = vadd.f32 0.0, %v315
  %v317 = vpop.f32.mrb[0].mxu0
  %318 = vmatprep.mubr.bf16.mxu0 0
  %319 = vmatmul.mubr.bf16.gmra.mrb[0].mxu0 %v173
  %v320 = vpop.f32.mrb[0].mxu0
  %v321 = vadd.f32 0.0, %v320
  %v322 = vpop.f32.mrb[0].mxu0
  %v323 = vpop.f32.mrb[0].mxu0
  %v324 = vadd.f32 0.0, %v323
  %v325 = vpop.f32.mrb[0].mxu0
  %326 = vdwg.mxu0
  %v327 = vadd.f32 %v86, %v265
  %v328 = vadd.f32 %v87, %v268
  %v329 = vadd.f32 %v88, %v273
  %v330 = vadd.f32 %v89, %v276
  %v331 = vadd.f32 %v90, %v281
  %v332 = vadd.f32 %v91, %v284
  %v333 = vadd.f32 %v92, %v289
  %v334 = vadd.f32 %v93, %v292
  %v335 = vadd.f32 %v94, %v297
  %v336 = vadd.f32 %v95, %v300
  %v337 = vadd.f32 %v96, %v305
  %v338 = vadd.f32 %v97, %v308
  %v339 = vadd.f32 %v98, %v313
  %v340 = vadd.f32 %v99, %v316
  %v341 = vadd.f32 %v100, %v321
  %v342 = vadd.f32 %v101, %v324
  %343 = vst [vmem:[#allocation2] sm:$0xff] %v327
  %344 = vst [vmem:[#allocation2 + $0x8] sm:$0xff] %v328
  %345 = vst [vmem:[#allocation2 + $0x10] sm:$0xff] %v329
  %346 = vst [vmem:[#allocation2 + $0x18] sm:$0xff] %v330
  %347 = vst [vmem:[#allocation2 + $0x20] sm:$0xff] %v331
  %348 = vst [vmem:[#allocation2 + $0x28] sm:$0xff] %v332
  %349 = vst [vmem:[#allocation2 + $0x30] sm:$0xff] %v333
  %350 = vst [vmem:[#allocation2 + $0x38] sm:$0xff] %v334
  %351 = vst [vmem:[#allocation2 + $0x40] sm:$0xff] %v335
  %352 = vst [vmem:[#allocation2 + $0x48] sm:$0xff] %v336
  %353 = vst [vmem:[#allocation2 + $0x50] sm:$0xff] %v337
  %354 = vst [vmem:[#allocation2 + $0x58] sm:$0xff] %v338
  %355 = vst [vmem:[#allocation2 + $0x60] sm:$0xff] %v339
  %356 = vst [vmem:[#allocation2 + $0x68] sm:$0xff] %v340
  %357 = vst [vmem:[#allocation2 + $0x70] sm:$0xff] %v341
  %358 = vst [vmem:[#allocation2 + $0x78] sm:$0xff] %v342
  %s359 = scalar_lea.vmem [#allocation2], 128
  %v360 = vld [vmem:[%s359] sm:$0xff]
  %v361 = vld [vmem:[%s359 + $0x8] sm:$0xff]
  %v362 = vld [vmem:[%s359 + $0x10] sm:$0xff]
  %v363 = vld [vmem:[%s359 + $0x18] sm:$0xff]
  %v364 = vld [vmem:[%s359 + $0x20] sm:$0xff]
  %v365 = vld [vmem:[%s359 + $0x28] sm:$0xff]
  %v366 = vld [vmem:[%s359 + $0x30] sm:$0xff]
  %v367 = vld [vmem:[%s359 + $0x38] sm:$0xff]
  %v368 = vld [vmem:[%s359 + $0x40] sm:$0xff]
  %v369 = vld [vmem:[%s359 + $0x48] sm:$0xff]
  %v370 = vld [vmem:[%s359 + $0x50] sm:$0xff]
  %v371 = vld [vmem:[%s359 + $0x58] sm:$0xff]
  %v372 = vld [vmem:[%s359 + $0x60] sm:$0xff]
  %v373 = vld [vmem:[%s359 + $0x68] sm:$0xff]
  %v374 = vld [vmem:[%s359 + $0x70] sm:$0xff]
  %v375 = vld [vmem:[%s359 + $0x78] sm:$0xff]
  %s376 = scalar_lea.vmem %s0, 64
  %v377 = vld [vmem:[%s376] sm:$0xf]
  %v378 = vld [vmem:[%s376 + $0x4] sm:$0xf]
  %v379 = vld [vmem:[%s376 + $0x8] sm:$0xf]
  %v380 = vld [vmem:[%s376 + $0xc] sm:$0xf]
  %v381 = vld [vmem:[%s376 + $0x10] sm:$0xf]
  %v382 = vld [vmem:[%s376 + $0x14] sm:$0xf]
  %v383 = vld [vmem:[%s376 + $0x18] sm:$0xf]
  %v384 = vld [vmem:[%s376 + $0x1c] sm:$0xf]
  %v385 = vld [vmem:[%s376 + $0x20] sm:$0xf]
  %v386 = vld [vmem:[%s376 + $0x24] sm:$0xf]
  %v387 = vld [vmem:[%s376 + $0x28] sm:$0xf]
  %v388 = vld [vmem:[%s376 + $0x2c] sm:$0xf]
  %v389 = vld [vmem:[%s376 + $0x30] sm:$0xf]
  %v390 = vld [vmem:[%s376 + $0x34] sm:$0xf]
  %v391 = vld [vmem:[%s376 + $0x38] sm:$0xf]
  %v392 = vld [vmem:[%s376 + $0x3c] sm:$0xf]
  %s393 = scalar_lea.vmem %s1, 64
  %v394 = vld [vmem:[%s393] sm:$0xf]
  %v395 = vld [vmem:[%s393 + $0x4] sm:$0xf]
  %v396 = vld [vmem:[%s393 + $0x8] sm:$0xf]
  %v397 = vld [vmem:[%s393 + $0xc] sm:$0xf]
  %v398 = vld [vmem:[%s393 + $0x10] sm:$0xf]
  %v399 = vld [vmem:[%s393 + $0x14] sm:$0xf]
  %v400 = vld [vmem:[%s393 + $0x18] sm:$0xf]
  %v401 = vld [vmem:[%s393 + $0x1c] sm:$0xf]
  %v402 = vld [vmem:[%s393 + $0x20] sm:$0xf]
  %v403 = vld [vmem:[%s393 + $0x24] sm:$0xf]
  %v404 = vld [vmem:[%s393 + $0x28] sm:$0xf]
  %v405 = vld [vmem:[%s393 + $0x2c] sm:$0xf]
  %v406 = vld [vmem:[%s393 + $0x30] sm:$0xf]
  %v407 = vld [vmem:[%s393 + $0x34] sm:$0xf]
  %v408 = vld [vmem:[%s393 + $0x38] sm:$0xf]
  %v409 = vld [vmem:[%s393 + $0x3c] sm:$0xf]
  %v426 = vunpack.c.l.b16 %v377
  %v427 = vunpack.c.l.b16 %v378
  %v428 = vunpack.c.l.b16 %v379
  %v429 = vunpack.c.l.b16 %v380
  %v430 = vunpack.c.l.b16 %v381
  %v431 = vunpack.c.l.b16 %v382
  %v432 = vunpack.c.l.b16 %v383
  %v433 = vunpack.c.l.b16 %v384
  %v434 = vunpack.c.l.b16 %v385
  %v435 = vunpack.c.l.b16 %v386
  %v436 = vunpack.c.l.b16 %v387
  %v437 = vunpack.c.l.b16 %v388
  %v438 = vunpack.c.l.b16 %v389
  %v439 = vunpack.c.l.b16 %v390
  %v440 = vunpack.c.l.b16 %v391
  %v441 = vunpack.c.l.b16 %v392
  %v442 = vpack.c.b16 %v427, %v426
  %v443 = vpack.c.b16 %v429, %v428
  %v444 = vpack.c.b16 %v431, %v430
  %v445 = vpack.c.b16 %v433, %v432
  %v446 = vpack.c.b16 %v435, %v434
  %v447 = vpack.c.b16 %v437, %v436
  %v448 = vpack.c.b16 %v439, %v438
  %v449 = vpack.c.b16 %v441, %v440
  %v474 = vunpack.c.l.b16 %v394
  %v475 = vunpack.c.l.b16 %v395
  %v476 = vunpack.c.l.b16 %v396
  %v477 = vunpack.c.l.b16 %v397
  %v478 = vunpack.c.l.b16 %v398
  %v479 = vunpack.c.l.b16 %v399
  %v480 = vunpack.c.l.b16 %v400
  %v481 = vunpack.c.l.b16 %v401
  %v482 = vunpack.c.l.b16 %v402
  %v483 = vunpack.c.l.b16 %v403
  %v484 = vunpack.c.l.b16 %v404
  %v485 = vunpack.c.l.b16 %v405
  %v486 = vunpack.c.l.b16 %v406
  %v487 = vunpack.c.l.b16 %v407
  %v488 = vunpack.c.l.b16 %v408
  %v489 = vunpack.c.l.b16 %v409
  %v490 = vpack.c.b16 %v475, %v474
  %v491 = vpack.c.b16 %v477, %v476
  %v492 = vpack.c.b16 %v479, %v478
  %v493 = vpack.c.b16 %v481, %v480
  %v494 = vpack.c.b16 %v483, %v482
  %v495 = vpack.c.b16 %v485, %v484
  %v496 = vpack.c.b16 %v487, %v486
  %v497 = vpack.c.b16 %v489, %v488
  %506 = vmatprep.subr.bf16.mxu0 0
  %507 = vmatpush1.bf16.msra.mxu0 %v490
  %508 = vmatprep.subr.bf16.mxu0 0
  %509 = vmatpush1.bf16.msra.mxu0 %v491
  %510 = vmatprep.subr.bf16.mxu0 0
  %511 = vmatpush1.bf16.msra.mxu0 %v492
  %512 = vmatprep.subr.bf16.mxu0 0
  %513 = vmatpush1.bf16.msra.mxu0 %v493
  %514 = vmatprep.subr.bf16.mxu0 0
  %515 = vmatpush1.bf16.msra.mxu0 %v494
  %516 = vmatprep.subr.bf16.mxu0 0
  %517 = vmatpush1.bf16.msra.mxu0 %v495
  %518 = vmatprep.subr.bf16.mxu0 0
  %519 = vmatpush1.bf16.msra.mxu0 %v496
  %520 = vmatprep.subr.bf16.mxu0 0
  %521 = vmatpush1.bf16.msra.mxu0 %v497
  %522 = vmatprep.subr.bf16.mxu0 0
  %523 = vmatpush1.bf16.msra.mxu0 0
  %524 = vmatprep.subr.bf16.mxu0 0
  %525 = vmatpush1.bf16.msra.mxu0 0
  %526 = vmatprep.subr.bf16.mxu0 0
  %527 = vmatpush1.bf16.msra.mxu0 0
  %528 = vmatprep.subr.bf16.mxu0 0
  %529 = vmatpush1.bf16.msra.mxu0 0
  %530 = vmatprep.subr.bf16.mxu0 0
  %531 = vmatpush1.bf16.msra.mxu0 0
  %532 = vmatprep.subr.bf16.mxu0 0
  %533 = vmatpush1.bf16.msra.mxu0 0
  %534 = vmatprep.subr.bf16.mxu0 0
  %535 = vmatpush1.bf16.msra.mxu0 0
  %536 = vmatprep.subr.bf16.mxu0 0
  %537 = vmatpush1.bf16.msra.mxu0 0
  %538 = vmatprep.mubr.bf16.mxu0 0
  %539 = vmatmul.mubr.bf16.gmra.mrb[0].mxu0 %v442
  %v540 = vpop.f32.mrb[0].mxu0
  %v541 = vadd.f32 0.0, %v540
  %v542 = vpop.f32.mrb[0].mxu0
  %v543 = vpop.f32.mrb[0].mxu0
  %v544 = vadd.f32 0.0, %v543
  %v545 = vpop.f32.mrb[0].mxu0
  %546 = vmatprep.mubr.bf16.mxu0 0
  %547 = vmatmul.mubr.bf16.gmra.mrb[0].mxu0 %v443
  %v548 = vpop.f32.mrb[0].mxu0
  %v549 = vadd.f32 0.0, %v548
  %v550 = vpop.f32.mrb[0].mxu0
  %v551 = vpop.f32.mrb[0].mxu0
  %v552 = vadd.f32 0.0, %v551
  %v553 = vpop.f32.mrb[0].mxu0
  %554 = vmatprep.mubr.bf16.mxu0 0
  %555 = vmatmul.mubr.bf16.gmra.mrb[0].mxu0 %v444
  %v556 = vpop.f32.mrb[0].mxu0
  %v557 = vadd.f32 0.0, %v556
  %v558 = vpop.f32.mrb[0].mxu0
  %v559 = vpop.f32.mrb[0].mxu0
  %v560 = vadd.f32 0.0, %v559
  %v561 = vpop.f32.mrb[0].mxu0
  %562 = vmatprep.mubr.bf16.mxu0 0
  %563 = vmatmul.mubr.bf16.gmra.mrb[0].mxu0 %v445
  %v564 = vpop.f32.mrb[0].mxu0
  %v565 = vadd.f32 0.0, %v564
  %v566 = vpop.f32.mrb[0].mxu0
  %v567 = vpop.f32.mrb[0].mxu0
  %v568 = vadd.f32 0.0, %v567
  %v569 = vpop.f32.mrb[0].mxu0
  %570 = vmatprep.mubr.bf16.mxu0 0
  %571 = vmatmul.mubr.bf16.gmra.mrb[0].mxu0 %v446
  %v572 = vpop.f32.mrb[0].mxu0
  %v573 = vadd.f32 0.0, %v572
  %v574 = vpop.f32.mrb[0].mxu0
  %v575 = vpop.f32.mrb[0].mxu0
  %v576 = vadd.f32 0.0, %v575
  %v577 = vpop.f32.mrb[0].mxu0
  %578 = vmatprep.mubr.bf16.mxu0 0
  %579 = vmatmul.mubr.bf16.gmra.mrb[0].mxu0 %v447
  %v580 = vpop.f32.mrb[0].mxu0
  %v581 = vadd.f32 0.0, %v580
  %v582 = vpop.f32.mrb[0].mxu0
  %v583 = vpop.f32.mrb[0].mxu0
  %v584 = vadd.f32 0.0, %v583
  %v585 = vpop.f32.mrb[0].mxu0
  %586 = vmatprep.mubr.bf16.mxu0 0
  %587 = vmatmul.mubr.bf16.gmra.mrb[0].mxu0 %v448
  %v588 = vpop.f32.mrb[0].mxu0
  %v589 = vadd.f32 0.0, %v588
  %v590 = vpop.f32.mrb[0].mxu0
  %v591 = vpop.f32.mrb[0].mxu0
  %v592 = vadd.f32 0.0, %v591
  %v593 = vpop.f32.mrb[0].mxu0
  %594 = vmatprep.mubr.bf16.mxu0 0
  %595 = vmatmul.mubr.bf16.gmra.mrb[0].mxu0 %v449
  %v596 = vpop.f32.mrb[0].mxu0
  %v597 = vadd.f32 0.0, %v596
  %v598 = vpop.f32.mrb[0].mxu0
  %v599 = vpop.f32.mrb[0].mxu0
  %v600 = vadd.f32 0.0, %v599
  %v601 = vpop.f32.mrb[0].mxu0
  %602 = vdwg.mxu0
  %v603 = vadd.f32 %v360, %v541
  %v604 = vadd.f32 %v361, %v544
  %v605 = vadd.f32 %v362, %v549
  %v606 = vadd.f32 %v363, %v552
  %v607 = vadd.f32 %v364, %v557
  %v608 = vadd.f32 %v365, %v560
  %v609 = vadd.f32 %v366, %v565
  %v610 = vadd.f32 %v367, %v568
  %v611 = vadd.f32 %v368, %v573
  %v612 = vadd.f32 %v369, %v576
  %v613 = vadd.f32 %v370, %v581
  %v614 = vadd.f32 %v371, %v584
  %v615 = vadd.f32 %v372, %v589
  %v616 = vadd.f32 %v373, %v592
  %v617 = vadd.f32 %v374, %v597
  %v618 = vadd.f32 %v375, %v600
  %619 = vst [vmem:[%s359] sm:$0xff] %v603
  %620 = vst [vmem:[%s359 + $0x8] sm:$0xff] %v604
  %621 = vst [vmem:[%s359 + $0x10] sm:$0xff] %v605
  %622 = vst [vmem:[%s359 + $0x18] sm:$0xff] %v606
  %623 = vst [vmem:[%s359 + $0x20] sm:$0xff] %v607
  %624 = vst [vmem:[%s359 + $0x28] sm:$0xff] %v608
  %625 = vst [vmem:[%s359 + $0x30] sm:$0xff] %v609
  %626 = vst [vmem:[%s359 + $0x38] sm:$0xff] %v610
  %627 = vst [vmem:[%s359 + $0x40] sm:$0xff] %v611
  %628 = vst [vmem:[%s359 + $0x48] sm:$0xff] %v612
  %629 = vst [vmem:[%s359 + $0x50] sm:$0xff] %v613
  %630 = vst [vmem:[%s359 + $0x58] sm:$0xff] %v614
  %631 = vst [vmem:[%s359 + $0x60] sm:$0xff] %v615
  %632 = vst [vmem:[%s359 + $0x68] sm:$0xff] %v616
  %633 = vst [vmem:[%s359 + $0x70] sm:$0xff] %v617
  %634 = vst [vmem:[%s359 + $0x78] sm:$0xff] %v618
  %s635 = scalar_lea.vmem [#allocation2], 256
  %v636 = vld [vmem:[%s635] sm:$0xff]
  %v637 = vld [vmem:[%s635 + $0x8] sm:$0xff]
  %v638 = vld [vmem:[%s635 + $0x10] sm:$0xff]
  %v639 = vld [vmem:[%s635 + $0x18] sm:$0xff]
  %v640 = vld [vmem:[%s635 + $0x20] sm:$0xff]
  %v641 = vld [vmem:[%s635 + $0x28] sm:$0xff]
  %v642 = vld [vmem:[%s635 + $0x30] sm:$0xff]
  %v643 = vld [vmem:[%s635 + $0x38] sm:$0xff]
  %v644 = vld [vmem:[%s635 + $0x40] sm:$0xff]
  %v645 = vld [vmem:[%s635 + $0x48] sm:$0xff]
  %v646 = vld [vmem:[%s635 + $0x50] sm:$0xff]
  %v647 = vld [vmem:[%s635 + $0x58] sm:$0xff]
  %v648 = vld [vmem:[%s635 + $0x60] sm:$0xff]
  %v649 = vld [vmem:[%s635 + $0x68] sm:$0xff]
  %v650 = vld [vmem:[%s635 + $0x70] sm:$0xff]
  %v651 = vld [vmem:[%s635 + $0x78] sm:$0xff]
  %s652 = scalar_lea.vmem %s0, 128
  %v653 = vld [vmem:[%s652] sm:$0xf]
  %v654 = vld [vmem:[%s652 + $0x4] sm:$0xf]
  %v655 = vld [vmem:[%s652 + $0x8] sm:$0xf]
  %v656 = vld [vmem:[%s652 + $0xc] sm:$0xf]
  %v657 = vld [vmem:[%s652 + $0x10] sm:$0xf]
  %v658 = vld [vmem:[%s652 + $0x14] sm:$0xf]
  %v659 = vld [vmem:[%s652 + $0x18] sm:$0xf]
  %v660 = vld [vmem:[%s652 + $0x1c] sm:$0xf]
  %v661 = vld [vmem:[%s652 + $0x20] sm:$0xf]
  %v662 = vld [vmem:[%s652 + $0x24] sm:$0xf]
  %v663 = vld [vmem:[%s652 + $0x28] sm:$0xf]
  %v664 = vld [vmem:[%s652 + $0x2c] sm:$0xf]
  %v665 = vld [vmem:[%s652 + $0x30] sm:$0xf]
  %v666 = vld [vmem:[%s652 + $0x34] sm:$0xf]
  %v667 = vld [vmem:[%s652 + $0x38] sm:$0xf]
  %v668 = vld [vmem:[%s652 + $0x3c] sm:$0xf]
  %s669 = scalar_lea.vmem %s1, 128
  %v670 = vld [vmem:[%s669] sm:$0xf]
  %v671 = vld [vmem:[%s669 + $0x4] sm:$0xf]
  %v672 = vld [vmem:[%s669 + $0x8] sm:$0xf]
  %v673 = vld [vmem:[%s669 + $0xc] sm:$0xf]
  %v674 = vld [vmem:[%s669 + $0x10] sm:$0xf]
  %v675 = vld [vmem:[%s669 + $0x14] sm:$0xf]
  %v676 = vld [vmem:[%s669 + $0x18] sm:$0xf]
  %v677 = vld [vmem:[%s669 + $0x1c] sm:$0xf]
  %v678 = vld [vmem:[%s669 + $0x20] sm:$0xf]
  %v679 = vld [vmem:[%s669 + $0x24] sm:$0xf]
  %v680 = vld [vmem:[%s669 + $0x28] sm:$0xf]
  %v681 = vld [vmem:[%s669 + $0x2c] sm:$0xf]
  %v682 = vld [vmem:[%s669 + $0x30] sm:$0xf]
  %v683 = vld [vmem:[%s669 + $0x34] sm:$0xf]
  %v684 = vld [vmem:[%s669 + $0x38] sm:$0xf]
  %v685 = vld [vmem:[%s669 + $0x3c] sm:$0xf]
  %v702 = vunpack.c.l.b16 %v653
  %v703 = vunpack.c.l.b16 %v654
  %v704 = vunpack.c.l.b16 %v655
  %v705 = vunpack.c.l.b16 %v656
  %v706 = vunpack.c.l.b16 %v657
  %v707 = vunpack.c.l.b16 %v658
  %v708 = vunpack.c.l.b16 %v659
  %v709 = vunpack.c.l.b16 %v660
  %v710 = vunpack.c.l.b16 %v661
  %v711 = vunpack.c.l.b16 %v662
  %v712 = vunpack.c.l.b16 %v663
  %v713 = vunpack.c.l.b16 %v664
  %v714 = vunpack.c.l.b16 %v665
  %v715 = vunpack.c.l.b16 %v666
  %v716 = vunpack.c.l.b16 %v667
  %v717 = vunpack.c.l.b16 %v668
  %v718 = vpack.c.b16 %v703, %v702
  %v719 = vpack.c.b16 %v705, %v704
  %v720 = vpack.c.b16 %v707, %v706
  %v721 = vpack.c.b16 %v709, %v708
  %v722 = vpack.c.b16 %v711, %v710
  %v723 = vpack.c.b16 %v713, %v712
  %v724 = vpack.c.b16 %v715, %v714
  %v725 = vpack.c.b16 %v717, %v716
  %v750 = vunpack.c.l.b16 %v670
  %v751 = vunpack.c.l.b16 %v671
  %v752 = vunpack.c.l.b16 %v672
  %v753 = vunpack.c.l.b16 %v673
  %v754 = vunpack.c.l.b16 %v674
  %v755 = vunpack.c.l.b16 %v675
  %v756 = vunpack.c.l.b16 %v676
  %v757 = vunpack.c.l.b16 %v677
  %v758 = vunpack.c.l.b16 %v678
  %v759 = vunpack.c.l.b16 %v679
  %v760 = vunpack.c.l.b16 %v680
  %v761 = vunpack.c.l.b16 %v681
  %v762 = vunpack.c.l.b16 %v682
  %v763 = vunpack.c.l.b16 %v683
  %v764 = vunpack.c.l.b16 %v684
  %v765 = vunpack.c.l.b16 %v685
  %v766 = vpack.c.b16 %v751, %v750
  %v767 = vpack.c.b16 %v753, %v752
  %v768 = vpack.c.b16 %v755, %v754
  %v769 = vpack.c.b16 %v757, %v756
  %v770 = vpack.c.b16 %v759, %v758
  %v771 = vpack.c.b16 %v761, %v760
  %v772 = vpack.c.b16 %v763, %v762
  %v773 = vpack.c.b16 %v765, %v764
  %782 = vmatprep.subr.bf16.mxu0 0
  %783 = vmatpush1.bf16.msra.mxu0 %v766
  %784 = vmatprep.subr.bf16.mxu0 0
  %785 = vmatpush1.bf16.msra.mxu0 %v767
  %786 = vmatprep.subr.bf16.mxu0 0
  %787 = vmatpush1.bf16.msra.mxu0 %v768
  %788 = vmatprep.subr.bf16.mxu0 0
  %789 = vmatpush1.bf16.msra.mxu0 %v769
  %790 = vmatprep.subr.bf16.mxu0 0
  %791 = vmatpush1.bf16.msra.mxu0 %v770
  %792 = vmatprep.subr.bf16.mxu0 0
  %793 = vmatpush1.bf16.msra.mxu0 %v771
  %794 = vmatprep.subr.bf16.mxu0 0
  %795 = vmatpush1.bf16.msra.mxu0 %v772
  %796 = vmatprep.subr.bf16.mxu0 0
  %797 = vmatpush1.bf16.msra.mxu0 %v773
  %798 = vmatprep.subr.bf16.mxu0 0
  %799 = vmatpush1.bf16.msra.mxu0 0
  %800 = vmatprep.subr.bf16.mxu0 0
  %801 = vmatpush1.bf16.msra.mxu0 0
  %802 = vmatprep.subr.bf16.mxu0 0
  %803 = vmatpush1.bf16.msra.mxu0 0
  %804 = vmatprep.subr.bf16.mxu0 0
  %805 = vmatpush1.bf16.msra.mxu0 0
  %806 = vmatprep.subr.bf16.mxu0 0
  %807 = vmatpush1.bf16.msra.mxu0 0
  %808 = vmatprep.subr.bf16.mxu0 0
  %809 = vmatpush1.bf16.msra.mxu0 0
  %810 = vmatprep.subr.bf16.mxu0 0
  %811 = vmatpush1.bf16.msra.mxu0 0
  %812 = vmatprep.subr.bf16.mxu0 0
  %813 = vmatpush1.bf16.msra.mxu0 0
  %814 = vmatprep.mubr.bf16.mxu0 0
  %815 = vmatmul.mubr.bf16.gmra.mrb[0].mxu0 %v718
  %v816 = vpop.f32.mrb[0].mxu0
  %v817 = vadd.f32 0.0, %v816
  %v818 = vpop.f32.mrb[0].mxu0
  %v819 = vpop.f32.mrb[0].mxu0
  %v820 = vadd.f32 0.0, %v819
  %v821 = vpop.f32.mrb[0].mxu0
  %822 = vmatprep.mubr.bf16.mxu0 0
  %823 = vmatmul.mubr.bf16.gmra.mrb[0].mxu0 %v719
  %v824 = vpop.f32.mrb[0].mxu0
  %v825 = vadd.f32 0.0, %v824
  %v826 = vpop.f32.mrb[0].mxu0
  %v827 = vpop.f32.mrb[0].mxu0
  %v828 = vadd.f32 0.0, %v827
  %v829 = vpop.f32.mrb[0].mxu0
  %830 = vmatprep.mubr.bf16.mxu0 0
  %831 = vmatmul.mubr.bf16.gmra.mrb[0].mxu0 %v720
  %v832 = vpop.f32.mrb[0].mxu0
  %v833 = vadd.f32 0.0, %v832
  %v834 = vpop.f32.mrb[0].mxu0
  %v835 = vpop.f32.mrb[0].mxu0
  %v836 = vadd.f32 0.0, %v835
  %v837 = vpop.f32.mrb[0].mxu0
  %838 = vmatprep.mubr.bf16.mxu0 0
  %839 = vmatmul.mubr.bf16.gmra.mrb[0].mxu0 %v721
  %v840 = vpop.f32.mrb[0].mxu0
  %v841 = vadd.f32 0.0, %v840
  %v842 = vpop.f32.mrb[0].mxu0
  %v843 = vpop.f32.mrb[0].mxu0
  %v844 = vadd.f32 0.0, %v843
  %v845 = vpop.f32.mrb[0].mxu0
  %846 = vmatprep.mubr.bf16.mxu0 0
  %847 = vmatmul.mubr.bf16.gmra.mrb[0].mxu0 %v722
  %v848 = vpop.f32.mrb[0].mxu0
  %v849 = vadd.f32 0.0, %v848
  %v850 = vpop.f32.mrb[0].mxu0
  %v851 = vpop.f32.mrb[0].mxu0
  %v852 = vadd.f32 0.0, %v851
  %v853 = vpop.f32.mrb[0].mxu0
  %854 = vmatprep.mubr.bf16.mxu0 0
  %855 = vmatmul.mubr.bf16.gmra.mrb[0].mxu0 %v723
  %v856 = vpop.f32.mrb[0].mxu0
  %v857 = vadd.f32 0.0, %v856
  %v858 = vpop.f32.mrb[0].mxu0
  %v859 = vpop.f32.mrb[0].mxu0
  %v860 = vadd.f32 0.0, %v859
  %v861 = vpop.f32.mrb[0].mxu0
  %862 = vmatprep.mubr.bf16.mxu0 0
  %863 = vmatmul.mubr.bf16.gmra.mrb[0].mxu0 %v724
  %v864 = vpop.f32.mrb[0].mxu0
  %v865 = vadd.f32 0.0, %v864
  %v866 = vpop.f32.mrb[0].mxu0
  %v867 = vpop.f32.mrb[0].mxu0
  %v868 = vadd.f32 0.0, %v867
  %v869 = vpop.f32.mrb[0].mxu0
  %870 = vmatprep.mubr.bf16.mxu0 0
  %871 = vmatmul.mubr.bf16.gmra.mrb[0].mxu0 %v725
  %v872 = vpop.f32.mrb[0].mxu0
  %v873 = vadd.f32 0.0, %v872
  %v874 = vpop.f32.mrb[0].mxu0
  %v875 = vpop.f32.mrb[0].mxu0
  %v876 = vadd.f32 0.0, %v875
  %v877 = vpop.f32.mrb[0].mxu0
  %878 = vdwg.mxu0
  %v879 = vadd.f32 %v636, %v817
  %v880 = vadd.f32 %v637, %v820
  %v881 = vadd.f32 %v638, %v825
  %v882 = vadd.f32 %v639, %v828
  %v883 = vadd.f32 %v640, %v833
  %v884 = vadd.f32 %v641, %v836
  %v885 = vadd.f32 %v642, %v841
  %v886 = vadd.f32 %v643, %v844
  %v887 = vadd.f32 %v644, %v849
  %v888 = vadd.f32 %v645, %v852
  %v889 = vadd.f32 %v646, %v857
  %v890 = vadd.f32 %v647, %v860
  %v891 = vadd.f32 %v648, %v865
  %v892 = vadd.f32 %v649, %v868
  %v893 = vadd.f32 %v650, %v873
  %v894 = vadd.f32 %v651, %v876
  %895 = vst [vmem:[%s635] sm:$0xff] %v879
  %896 = vst [vmem:[%s635 + $0x8] sm:$0xff] %v880
  %897 = vst [vmem:[%s635 + $0x10] sm:$0xff] %v881
  %898 = vst [vmem:[%s635 + $0x18] sm:$0xff] %v882
  %899 = vst [vmem:[%s635 + $0x20] sm:$0xff] %v883
  %900 = vst [vmem:[%s635 + $0x28] sm:$0xff] %v884
  %901 = vst [vmem:[%s635 + $0x30] sm:$0xff] %v885
  %902 = vst [vmem:[%s635 + $0x38] sm:$0xff] %v886
  %903 = vst [vmem:[%s635 + $0x40] sm:$0xff] %v887
  %904 = vst [vmem:[%s635 + $0x48] sm:$0xff] %v888
  %905 = vst [vmem:[%s635 + $0x50] sm:$0xff] %v889
  %906 = vst [vmem:[%s635 + $0x58] sm:$0xff] %v890
  %907 = vst [vmem:[%s635 + $0x60] sm:$0xff] %v891
  %908 = vst [vmem:[%s635 + $0x68] sm:$0xff] %v892
  %909 = vst [vmem:[%s635 + $0x70] sm:$0xff] %v893
  %910 = vst [vmem:[%s635 + $0x78] sm:$0xff] %v894
  %s911 = scalar_lea.vmem [#allocation2], 384
  %v912 = vld [vmem:[%s911] sm:$0xff]
  %v913 = vld [vmem:[%s911 + $0x8] sm:$0xff]
  %v914 = vld [vmem:[%s911 + $0x10] sm:$0xff]
  %v915 = vld [vmem:[%s911 + $0x18] sm:$0xff]
  %v916 = vld [vmem:[%s911 + $0x20] sm:$0xff]
  %v917 = vld [vmem:[%s911 + $0x28] sm:$0xff]
  %v918 = vld [vmem:[%s911 + $0x30] sm:$0xff]
  %v919 = vld [vmem:[%s911 + $0x38] sm:$0xff]
  %v920 = vld [vmem:[%s911 + $0x40] sm:$0xff]
  %v921 = vld [vmem:[%s911 + $0x48] sm:$0xff]
  %v922 = vld [vmem:[%s911 + $0x50] sm:$0xff]
  %v923 = vld [vmem:[%s911 + $0x58] sm:$0xff]
  %v924 = vld [vmem:[%s911 + $0x60] sm:$0xff]
  %v925 = vld [vmem:[%s911 + $0x68] sm:$0xff]
  %v926 = vld [vmem:[%s911 + $0x70] sm:$0xff]
  %v927 = vld [vmem:[%s911 + $0x78] sm:$0xff]
  %s928 = scalar_lea.vmem %s0, 192
  %v929 = vld [vmem:[%s928] sm:$0xf]
  %v930 = vld [vmem:[%s928 + $0x4] sm:$0xf]
  %v931 = vld [vmem:[%s928 + $0x8] sm:$0xf]
  %v932 = vld [vmem:[%s928 + $0xc] sm:$0xf]
  %v933 = vld [vmem:[%s928 + $0x10] sm:$0xf]
  %v934 = vld [vmem:[%s928 + $0x14] sm:$0xf]
  %v935 = vld [vmem:[%s928 + $0x18] sm:$0xf]
  %v936 = vld [vmem:[%s928 + $0x1c] sm:$0xf]
  %v937 = vld [vmem:[%s928 + $0x20] sm:$0xf]
  %v938 = vld [vmem:[%s928 + $0x24] sm:$0xf]
  %v939 = vld [vmem:[%s928 + $0x28] sm:$0xf]
  %v940 = vld [vmem:[%s928 + $0x2c] sm:$0xf]
  %v941 = vld [vmem:[%s928 + $0x30] sm:$0xf]
  %v942 = vld [vmem:[%s928 + $0x34] sm:$0xf]
  %v943 = vld [vmem:[%s928 + $0x38] sm:$0xf]
  %v944 = vld [vmem:[%s928 + $0x3c] sm:$0xf]
  %s945 = scalar_lea.vmem %s1, 192
  %v946 = vld [vmem:[%s945] sm:$0xf]
  %v947 = vld [vmem:[%s945 + $0x4] sm:$0xf]
  %v948 = vld [vmem:[%s945 + $0x8] sm:$0xf]
  %v949 = vld [vmem:[%s945 + $0xc] sm:$0xf]
  %v950 = vld [vmem:[%s945 + $0x10] sm:$0xf]
  %v951 = vld [vmem:[%s945 + $0x14] sm:$0xf]
  %v952 = vld [vmem:[%s945 + $0x18] sm:$0xf]
  %v953 = vld [vmem:[%s945 + $0x1c] sm:$0xf]
  %v954 = vld [vmem:[%s945 + $0x20] sm:$0xf]
  %v955 = vld [vmem:[%s945 + $0x24] sm:$0xf]
  %v956 = vld [vmem:[%s945 + $0x28] sm:$0xf]
  %v957 = vld [vmem:[%s945 + $0x2c] sm:$0xf]
  %v958 = vld [vmem:[%s945 + $0x30] sm:$0xf]
  %v959 = vld [vmem:[%s945 + $0x34] sm:$0xf]
  %v960 = vld [vmem:[%s945 + $0x38] sm:$0xf]
  %v961 = vld [vmem:[%s945 + $0x3c] sm:$0xf]
  %v978 = vunpack.c.l.b16 %v929
  %v979 = vunpack.c.l.b16 %v930
  %v980 = vunpack.c.l.b16 %v931
  %v981 = vunpack.c.l.b16 %v932
  %v982 = vunpack.c.l.b16 %v933
  %v983 = vunpack.c.l.b16 %v934
  %v984 = vunpack.c.l.b16 %v935
  %v985 = vunpack.c.l.b16 %v936
  %v986 = vunpack.c.l.b16 %v937
  %v987 = vunpack.c.l.b16 %v938
  %v988 = vunpack.c.l.b16 %v939
  %v989 = vunpack.c.l.b16 %v940
  %v990 = vunpack.c.l.b16 %v941
  %v991 = vunpack.c.l.b16 %v942
  %v992 = vunpack.c.l.b16 %v943
  %v993 = vunpack.c.l.b16 %v944
  %v994 = vpack.c.b16 %v979, %v978
  %v995 = vpack.c.b16 %v981, %v980
  %v996 = vpack.c.b16 %v983, %v982
  %v997 = vpack.c.b16 %v985, %v984
  %v998 = vpack.c.b16 %v987, %v986
  %v999 = vpack.c.b16 %v989, %v988
  %v1000 = vpack.c.b16 %v991, %v990
  %v1001 = vpack.c.b16 %v993, %v992
  %v1026 = vunpack.c.l.b16 %v946
  %v1027 = vunpack.c.l.b16 %v947
  %v1028 = vunpack.c.l.b16 %v948
  %v1029 = vunpack.c.l.b16 %v949
  %v1030 = vunpack.c.l.b16 %v950
  %v1031 = vunpack.c.l.b16 %v951
  %v1032 = vunpack.c.l.b16 %v952
  %v1033 = vunpack.c.l.b16 %v953
  %v1034 = vunpack.c.l.b16 %v954
  %v1035 = vunpack.c.l.b16 %v955
  %v1036 = vunpack.c.l.b16 %v956
  %v1037 = vunpack.c.l.b16 %v957
  %v1038 = vunpack.c.l.b16 %v958
  %v1039 = vunpack.c.l.b16 %v959
  %v1040 = vunpack.c.l.b16 %v960
  %v1041 = vunpack.c.l.b16 %v961
  %v1042 = vpack.c.b16 %v1027, %v1026
  %v1043 = vpack.c.b16 %v1029, %v1028
  %v1044 = vpack.c.b16 %v1031, %v1030
  %v1045 = vpack.c.b16 %v1033, %v1032
  %v1046 = vpack.c.b16 %v1035, %v1034
  %v1047 = vpack.c.b16 %v1037, %v1036
  %v1048 = vpack.c.b16 %v1039, %v1038
  %v1049 = vpack.c.b16 %v1041, %v1040
  %1058 = vmatprep.subr.bf16.mxu0 0
  %1059 = vmatpush1.bf16.msra.mxu0 %v1042
  %1060 = vmatprep.subr.bf16.mxu0 0
  %1061 = vmatpush1.bf16.msra.mxu0 %v1043
  %1062 = vmatprep.subr.bf16.mxu0 0
  %1063 = vmatpush1.bf16.msra.mxu0 %v1044
  %1064 = vmatprep.subr.bf16.mxu0 0
  %1065 = vmatpush1.bf16.msra.mxu0 %v1045
  %1066 = vmatprep.subr.bf16.mxu0 0
  %1067 = vmatpush1.bf16.msra.mxu0 %v1046
  %1068 = vmatprep.subr.bf16.mxu0 0
  %1069 = vmatpush1.bf16.msra.mxu0 %v1047
  %1070 = vmatprep.subr.bf16.mxu0 0
  %1071 = vmatpush1.bf16.msra.mxu0 %v1048
  %1072 = vmatprep.subr.bf16.mxu0 0
  %1073 = vmatpush1.bf16.msra.mxu0 %v1049
  %1074 = vmatprep.subr.bf16.mxu0 0
  %1075 = vmatpush1.bf16.msra.mxu0 0
  %1076 = vmatprep.subr.bf16.mxu0 0
  %1077 = vmatpush1.bf16.msra.mxu0 0
  %1078 = vmatprep.subr.bf16.mxu0 0
  %1079 = vmatpush1.bf16.msra.mxu0 0
  %1080 = vmatprep.subr.bf16.mxu0 0
  %1081 = vmatpush1.bf16.msra.mxu0 0
  %1082 = vmatprep.subr.bf16.mxu0 0
  %1083 = vmatpush1.bf16.msra.mxu0 0
  %1084 = vmatprep.subr.bf16.mxu0 0
  %1085 = vmatpush1.bf16.msra.mxu0 0
  %1086 = vmatprep.subr.bf16.mxu0 0
  %1087 = vmatpush1.bf16.msra.mxu0 0
  %1088 = vmatprep.subr.bf16.mxu0 0
  %1089 = vmatpush1.bf16.msra.mxu0 0
  %1090 = vmatprep.mubr.bf16.mxu0 0
  %1091 = vmatmul.mubr.bf16.gmra.mrb[0].mxu0 %v994
  %v1092 = vpop.f32.mrb[0].mxu0
  %v1093 = vadd.f32 0.0, %v1092
  %v1094 = vpop.f32.mrb[0].mxu0
  %v1095 = vpop.f32.mrb[0].mxu0
  %v1096 = vadd.f32 0.0, %v1095
  %v1097 = vpop.f32.mrb[0].mxu0
  %1098 = vmatprep.mubr.bf16.mxu0 0
  %1099 = vmatmul.mubr.bf16.gmra.mrb[0].mxu0 %v995
  %v1100 = vpop.f32.mrb[0].mxu0
  %v1101 = vadd.f32 0.0, %v1100
  %v1102 = vpop.f32.mrb[0].mxu0
  %v1103 = vpop.f32.mrb[0].mxu0
  %v1104 = vadd.f32 0.0, %v1103
  %v1105 = vpop.f32.mrb[0].mxu0
  %1106 = vmatprep.mubr.bf16.mxu0 0
  %1107 = vmatmul.mubr.bf16.gmra.mrb[0].mxu0 %v996
  %v1108 = vpop.f32.mrb[0].mxu0
  %v1109 = vadd.f32 0.0, %v1108
  %v1110 = vpop.f32.mrb[0].mxu0
  %v1111 = vpop.f32.mrb[0].mxu0
  %v1112 = vadd.f32 0.0, %v1111
  %v1113 = vpop.f32.mrb[0].mxu0
  %1114 = vmatprep.mubr.bf16.mxu0 0
  %1115 = vmatmul.mubr.bf16.gmra.mrb[0].mxu0 %v997
  %v1116 = vpop.f32.mrb[0].mxu0
  %v1117 = vadd.f32 0.0, %v1116
  %v1118 = vpop.f32.mrb[0].mxu0
  %v1119 = vpop.f32.mrb[0].mxu0
  %v1120 = vadd.f32 0.0, %v1119
  %v1121 = vpop.f32.mrb[0].mxu0
  %1122 = vmatprep.mubr.bf16.mxu0 0
  %1123 = vmatmul.mubr.bf16.gmra.mrb[0].mxu0 %v998
  %v1124 = vpop.f32.mrb[0].mxu0
  %v1125 = vadd.f32 0.0, %v1124
  %v1126 = vpop.f32.mrb[0].mxu0
  %v1127 = vpop.f32.mrb[0].mxu0
  %v1128 = vadd.f32 0.0, %v1127
  %v1129 = vpop.f32.mrb[0].mxu0
  %1130 = vmatprep.mubr.bf16.mxu0 0
  %1131 = vmatmul.mubr.bf16.gmra.mrb[0].mxu0 %v999
  %v1132 = vpop.f32.mrb[0].mxu0
  %v1133 = vadd.f32 0.0, %v1132
  %v1134 = vpop.f32.mrb[0].mxu0
  %v1135 = vpop.f32.mrb[0].mxu0
  %v1136 = vadd.f32 0.0, %v1135
  %v1137 = vpop.f32.mrb[0].mxu0
  %1138 = vmatprep.mubr.bf16.mxu0 0
  %1139 = vmatmul.mubr.bf16.gmra.mrb[0].mxu0 %v1000
  %v1140 = vpop.f32.mrb[0].mxu0
  %v1141 = vadd.f32 0.0, %v1140
  %v1142 = vpop.f32.mrb[0].mxu0
  %v1143 = vpop.f32.mrb[0].mxu0
  %v1144 = vadd.f32 0.0, %v1143
  %v1145 = vpop.f32.mrb[0].mxu0
  %1146 = vmatprep.mubr.bf16.mxu0 0
  %1147 = vmatmul.mubr.bf16.gmra.mrb[0].mxu0 %v1001
  %v1148 = vpop.f32.mrb[0].mxu0
  %v1149 = vadd.f32 0.0, %v1148
  %v1150 = vpop.f32.mrb[0].mxu0
  %v1151 = vpop.f32.mrb[0].mxu0
  %v1152 = vadd.f32 0.0, %v1151
  %v1153 = vpop.f32.mrb[0].mxu0
  %1154 = vdwg.mxu0
  %v1155 = vadd.f32 %v912, %v1093
  %v1156 = vadd.f32 %v913, %v1096
  %v1157 = vadd.f32 %v914, %v1101
  %v1158 = vadd.f32 %v915, %v1104
  %v1159 = vadd.f32 %v916, %v1109
  %v1160 = vadd.f32 %v917, %v1112
  %v1161 = vadd.f32 %v918, %v1117
  %v1162 = vadd.f32 %v919, %v1120
  %v1163 = vadd.f32 %v920, %v1125
  %v1164 = vadd.f32 %v921, %v1128
  %v1165 = vadd.f32 %v922, %v1133
  %v1166 = vadd.f32 %v923, %v1136
  %v1167 = vadd.f32 %v924, %v1141
  %v1168 = vadd.f32 %v925, %v1144
  %v1169 = vadd.f32 %v926, %v1149
  %v1170 = vadd.f32 %v927, %v1152
  %1171 = vst [vmem:[%s911] sm:$0xff] %v1155
  %1172 = vst [vmem:[%s911 + $0x8] sm:$0xff] %v1156
  %1173 = vst [vmem:[%s911 + $0x10] sm:$0xff] %v1157
  %1174 = vst [vmem:[%s911 + $0x18] sm:$0xff] %v1158
  %1175 = vst [vmem:[%s911 + $0x20] sm:$0xff] %v1159
  %1176 = vst [vmem:[%s911 + $0x28] sm:$0xff] %v1160
  %1177 = vst [vmem:[%s911 + $0x30] sm:$0xff] %v1161
  %1178 = vst [vmem:[%s911 + $0x38] sm:$0xff] %v1162
  %1179 = vst [vmem:[%s911 + $0x40] sm:$0xff] %v1163
  %1180 = vst [vmem:[%s911 + $0x48] sm:$0xff] %v1164
  %1181 = vst [vmem:[%s911 + $0x50] sm:$0xff] %v1165
  %1182 = vst [vmem:[%s911 + $0x58] sm:$0xff] %v1166
  %1183 = vst [vmem:[%s911 + $0x60] sm:$0xff] %v1167
  %1184 = vst [vmem:[%s911 + $0x68] sm:$0xff] %v1168
  %1185 = vst [vmem:[%s911 + $0x70] sm:$0xff] %v1169
  %1186 = vst [vmem:[%s911 + $0x78] sm:$0xff] %v1170
  // Predicated region
  $region22: #{baseline_model_3layer_forward.11} parent=0 // pred_check
    %p1187 = pneg %p18
  $region23: #{baseline_model_3layer_forward.11} parent=0 // pred_check_branch
    %1189 = sbr.rel (%p1187) target = $region25
  $region24: #{baseline_model_3layer_forward.11} parent=0 // pred_region
    %v1190 = vld [vmem:[#allocation2] sm:$0xff]
    %v1191 = vld [vmem:[#allocation2 + $0x8] sm:$0xff]
    %v1192 = vld [vmem:[#allocation2 + $0x10] sm:$0xff]
    %v1193 = vld [vmem:[#allocation2 + $0x18] sm:$0xff]
    %v1194 = vld [vmem:[#allocation2 + $0x20] sm:$0xff]
    %v1195 = vld [vmem:[#allocation2 + $0x28] sm:$0xff]
    %v1196 = vld [vmem:[#allocation2 + $0x30] sm:$0xff]
    %v1197 = vld [vmem:[#allocation2 + $0x38] sm:$0xff]
    %v1198 = vld [vmem:[#allocation2 + $0x40] sm:$0xff]
    %v1199 = vld [vmem:[#allocation2 + $0x48] sm:$0xff]
    %v1200 = vld [vmem:[#allocation2 + $0x50] sm:$0xff]
    %v1201 = vld [vmem:[#allocation2 + $0x58] sm:$0xff]
    %v1202 = vld [vmem:[#allocation2 + $0x60] sm:$0xff]
    %v1203 = vld [vmem:[#allocation2 + $0x68] sm:$0xff]
    %v1204 = vld [vmem:[#allocation2 + $0x70] sm:$0xff]
    %v1205 = vld [vmem:[#allocation2 + $0x78] sm:$0xff]
    %v1206 = vld [vmem:[#allocation2 + $0x80] sm:$0xff]
    %v1207 = vld [vmem:[#allocation2 + $0x88] sm:$0xff]
    %v1208 = vld [vmem:[#allocation2 + $0x90] sm:$0xff]
    %v1209 = vld [vmem:[#allocation2 + $0x98] sm:$0xff]
    %v1210 = vld [vmem:[#allocation2 + $0xa0] sm:$0xff]
    %v1211 = vld [vmem:[#allocation2 + $0xa8] sm:$0xff]
    %v1212 = vld [vmem:[#allocation2 + $0xb0] sm:$0xff]
    %v1213 = vld [vmem:[#allocation2 + $0xb8] sm:$0xff]
    %v1214 = vld [vmem:[#allocation2 + $0xc0] sm:$0xff]
    %v1215 = vld [vmem:[#allocation2 + $0xc8] sm:$0xff]
    %v1216 = vld [vmem:[#allocation2 + $0xd0] sm:$0xff]
    %v1217 = vld [vmem:[#allocation2 + $0xd8] sm:$0xff]
    %v1218 = vld [vmem:[#allocation2 + $0xe0] sm:$0xff]
    %v1219 = vld [vmem:[#allocation2 + $0xe8] sm:$0xff]
    %v1220 = vld [vmem:[#allocation2 + $0xf0] sm:$0xff]
    %v1221 = vld [vmem:[#allocation2 + $0xf8] sm:$0xff]
    %v1222 = vld [vmem:[#allocation2 + $0x100] sm:$0xff]
    %v1223 = vld [vmem:[#allocation2 + $0x108] sm:$0xff]
    %v1224 = vld [vmem:[#allocation2 + $0x110] sm:$0xff]
    %v1225 = vld [vmem:[#allocation2 + $0x118] sm:$0xff]
    %v1226 = vld [vmem:[#allocation2 + $0x120] sm:$0xff]
    %v1227 = vld [vmem:[#allocation2 + $0x128] sm:$0xff]
    %v1228 = vld [vmem:[#allocation2 + $0x130] sm:$0xff]
    %v1229 = vld [vmem:[#allocation2 + $0x138] sm:$0xff]
    %v1230 = vld [vmem:[#allocation2 + $0x140] sm:$0xff]
    %v1231 = vld [vmem:[#allocation2 + $0x148] sm:$0xff]
    %v1232 = vld [vmem:[#allocation2 + $0x150] sm:$0xff]
    %v1233 = vld [vmem:[#allocation2 + $0x158] sm:$0xff]
    %v1234 = vld [vmem:[#allocation2 + $0x160] sm:$0xff]
    %v1235 = vld [vmem:[#allocation2 + $0x168] sm:$0xff]
    %v1236 = vld [vmem:[#allocation2 + $0x170] sm:$0xff]
    %v1237 = vld [vmem:[#allocation2 + $0x178] sm:$0xff]
    %v1238 = vld [vmem:[#allocation2 + $0x180] sm:$0xff]
    %v1239 = vld [vmem:[#allocation2 + $0x188] sm:$0xff]
    %v1240 = vld [vmem:[#allocation2 + $0x190] sm:$0xff]
    %v1241 = vld [vmem:[#allocation2 + $0x198] sm:$0xff]
    %v1242 = vld [vmem:[#allocation2 + $0x1a0] sm:$0xff]
    %v1243 = vld [vmem:[#allocation2 + $0x1a8] sm:$0xff]
    %v1244 = vld [vmem:[#allocation2 + $0x1b0] sm:$0xff]
    %v1245 = vld [vmem:[#allocation2 + $0x1b8] sm:$0xff]
    %v1246 = vld [vmem:[#allocation2 + $0x1c0] sm:$0xff]
    %v1247 = vld [vmem:[#allocation2 + $0x1c8] sm:$0xff]
    %v1248 = vld [vmem:[#allocation2 + $0x1d0] sm:$0xff]
    %v1249 = vld [vmem:[#allocation2 + $0x1d8] sm:$0xff]
    %v1250 = vld [vmem:[#allocation2 + $0x1e0] sm:$0xff]
    %v1251 = vld [vmem:[#allocation2 + $0x1e8] sm:$0xff]
    %v1252 = vld [vmem:[#allocation2 + $0x1f0] sm:$0xff]
    %v1253 = vld [vmem:[#allocation2 + $0x1f8] sm:$0xff]
    %v1254 = vld [vmem:[%s3] sm:$0x1]
    %v1256 = vlaneseq
    %v1257 = vshrl.u32 %v1256, 7
    %v1258 = vsub.s32 0, %v1257
    %v1259 = vrot.slane %v1254, %v1258
    %v1261 = vadd.f32 %v1190, %v1259
    %v1262 = vadd.f32 %v1191, %v1259
    %v1263 = vadd.f32 %v1192, %v1259
    %v1264 = vadd.f32 %v1193, %v1259
    %v1265 = vadd.f32 %v1194, %v1259
    %v1266 = vadd.f32 %v1195, %v1259
    %v1267 = vadd.f32 %v1196, %v1259
    %v1268 = vadd.f32 %v1197, %v1259
    %v1269 = vadd.f32 %v1198, %v1259
    %v1270 = vadd.f32 %v1199, %v1259
    %v1271 = vadd.f32 %v1200, %v1259
    %v1272 = vadd.f32 %v1201, %v1259
    %v1273 = vadd.f32 %v1202, %v1259
    %v1274 = vadd.f32 %v1203, %v1259
    %v1275 = vadd.f32 %v1204, %v1259
    %v1276 = vadd.f32 %v1205, %v1259
    %v1277 = vadd.f32 %v1206, %v1259
    %v1278 = vadd.f32 %v1207, %v1259
    %v1279 = vadd.f32 %v1208, %v1259
    %v1280 = vadd.f32 %v1209, %v1259
    %v1281 = vadd.f32 %v1210, %v1259
    %v1282 = vadd.f32 %v1211, %v1259
    %v1283 = vadd.f32 %v1212, %v1259
    %v1284 = vadd.f32 %v1213, %v1259
    %v1285 = vadd.f32 %v1214, %v1259
    %v1286 = vadd.f32 %v1215, %v1259
    %v1287 = vadd.f32 %v1216, %v1259
    %v1288 = vadd.f32 %v1217, %v1259
    %v1289 = vadd.f32 %v1218, %v1259
    %v1290 = vadd.f32 %v1219, %v1259
    %v1291 = vadd.f32 %v1220, %v1259
    %v1292 = vadd.f32 %v1221, %v1259
    %v1293 = vadd.f32 %v1222, %v1259
    %v1294 = vadd.f32 %v1223, %v1259
    %v1295 = vadd.f32 %v1224, %v1259
    %v1296 = vadd.f32 %v1225, %v1259
    %v1297 = vadd.f32 %v1226, %v1259
    %v1298 = vadd.f32 %v1227, %v1259
    %v1299 = vadd.f32 %v1228, %v1259
    %v1300 = vadd.f32 %v1229, %v1259
    %v1301 = vadd.f32 %v1230, %v1259
    %v1302 = vadd.f32 %v1231, %v1259
    %v1303 = vadd.f32 %v1232, %v1259
    %v1304 = vadd.f32 %v1233, %v1259
    %v1305 = vadd.f32 %v1234, %v1259
    %v1306 = vadd.f32 %v1235, %v1259
    %v1307 = vadd.f32 %v1236, %v1259
    %v1308 = vadd.f32 %v1237, %v1259
    %v1309 = vadd.f32 %v1238, %v1259
    %v1310 = vadd.f32 %v1239, %v1259
    %v1311 = vadd.f32 %v1240, %v1259
    %v1312 = vadd.f32 %v1241, %v1259
    %v1313 = vadd.f32 %v1242, %v1259
    %v1314 = vadd.f32 %v1243, %v1259
    %v1315 = vadd.f32 %v1244, %v1259
    %v1316 = vadd.f32 %v1245, %v1259
    %v1317 = vadd.f32 %v1246, %v1259
    %v1318 = vadd.f32 %v1247, %v1259
    %v1319 = vadd.f32 %v1248, %v1259
    %v1320 = vadd.f32 %v1249, %v1259
    %v1321 = vadd.f32 %v1250, %v1259
    %v1322 = vadd.f32 %v1251, %v1259
    %v1323 = vadd.f32 %v1252, %v1259
    %v1324 = vadd.f32 %v1253, %v1259
    %1325 = vst [vmem:[%s4] sm:$0xff] %v1261
    %1326 = vst [vmem:[%s4 + $0x8] sm:$0xff] %v1262
    %1327 = vst [vmem:[%s4 + $0x10] sm:$0xff] %v1263
    %1328 = vst [vmem:[%s4 + $0x18] sm:$0xff] %v1264
    %1329 = vst [vmem:[%s4 + $0x20] sm:$0xff] %v1265
    %1330 = vst [vmem:[%s4 + $0x28] sm:$0xff] %v1266
    %1331 = vst [vmem:[%s4 + $0x30] sm:$0xff] %v1267
    %1332 = vst [vmem:[%s4 + $0x38] sm:$0xff] %v1268
    %1333 = vst [vmem:[%s4 + $0x40] sm:$0xff] %v1269
    %1334 = vst [vmem:[%s4 + $0x48] sm:$0xff] %v1270
    %1335 = vst [vmem:[%s4 + $0x50] sm:$0xff] %v1271
    %1336 = vst [vmem:[%s4 + $0x58] sm:$0xff] %v1272
    %1337 = vst [vmem:[%s4 + $0x60] sm:$0xff] %v1273
    %1338 = vst [vmem:[%s4 + $0x68] sm:$0xff] %v1274
    %1339 = vst [vmem:[%s4 + $0x70] sm:$0xff] %v1275
    %1340 = vst [vmem:[%s4 + $0x78] sm:$0xff] %v1276
    %1341 = vst [vmem:[%s4 + $0x80] sm:$0xff] %v1277
    %1342 = vst [vmem:[%s4 + $0x88] sm:$0xff] %v1278
    %1343 = vst [vmem:[%s4 + $0x90] sm:$0xff] %v1279
    %1344 = vst [vmem:[%s4 + $0x98] sm:$0xff] %v1280
    %1345 = vst [vmem:[%s4 + $0xa0] sm:$0xff] %v1281
    %1346 = vst [vmem:[%s4 + $0xa8] sm:$0xff] %v1282
    %1347 = vst [vmem:[%s4 + $0xb0] sm:$0xff] %v1283
    %1348 = vst [vmem:[%s4 + $0xb8] sm:$0xff] %v1284
    %1349 = vst [vmem:[%s4 + $0xc0] sm:$0xff] %v1285
    %1350 = vst [vmem:[%s4 + $0xc8] sm:$0xff] %v1286
    %1351 = vst [vmem:[%s4 + $0xd0] sm:$0xff] %v1287
    %1352 = vst [vmem:[%s4 + $0xd8] sm:$0xff] %v1288
    %1353 = vst [vmem:[%s4 + $0xe0] sm:$0xff] %v1289
    %1354 = vst [vmem:[%s4 + $0xe8] sm:$0xff] %v1290
    %1355 = vst [vmem:[%s4 + $0xf0] sm:$0xff] %v1291
    %1356 = vst [vmem:[%s4 + $0xf8] sm:$0xff] %v1292
    %1357 = vst [vmem:[%s4 + $0x100] sm:$0xff] %v1293
    %1358 = vst [vmem:[%s4 + $0x108] sm:$0xff] %v1294
    %1359 = vst [vmem:[%s4 + $0x110] sm:$0xff] %v1295
    %1360 = vst [vmem:[%s4 + $0x118] sm:$0xff] %v1296
    %1361 = vst [vmem:[%s4 + $0x120] sm:$0xff] %v1297
    %1362 = vst [vmem:[%s4 + $0x128] sm:$0xff] %v1298
    %1363 = vst [vmem:[%s4 + $0x130] sm:$0xff] %v1299
    %1364 = vst [vmem:[%s4 + $0x138] sm:$0xff] %v1300
    %1365 = vst [vmem:[%s4 + $0x140] sm:$0xff] %v1301
    %1366 = vst [vmem:[%s4 + $0x148] sm:$0xff] %v1302
    %1367 = vst [vmem:[%s4 + $0x150] sm:$0xff] %v1303
    %1368 = vst [vmem:[%s4 + $0x158] sm:$0xff] %v1304
    %1369 = vst [vmem:[%s4 + $0x160] sm:$0xff] %v1305
    %1370 = vst [vmem:[%s4 + $0x168] sm:$0xff] %v1306
    %1371 = vst [vmem:[%s4 + $0x170] sm:$0xff] %v1307
    %1372 = vst [vmem:[%s4 + $0x178] sm:$0xff] %v1308
    %1373 = vst [vmem:[%s4 + $0x180] sm:$0xff] %v1309
    %1374 = vst [vmem:[%s4 + $0x188] sm:$0xff] %v1310
    %1375 = vst [vmem:[%s4 + $0x190] sm:$0xff] %v1311
    %1376 = vst [vmem:[%s4 + $0x198] sm:$0xff] %v1312
    %1377 = vst [vmem:[%s4 + $0x1a0] sm:$0xff] %v1313
    %1378 = vst [vmem:[%s4 + $0x1a8] sm:$0xff] %v1314
    %1379 = vst [vmem:[%s4 + $0x1b0] sm:$0xff] %v1315
    %1380 = vst [vmem:[%s4 + $0x1b8] sm:$0xff] %v1316
    %1381 = vst [vmem:[%s4 + $0x1c0] sm:$0xff] %v1317
    %1382 = vst [vmem:[%s4 + $0x1c8] sm:$0xff] %v1318
    %1383 = vst [vmem:[%s4 + $0x1d0] sm:$0xff] %v1319
    %1384 = vst [vmem:[%s4 + $0x1d8] sm:$0xff] %v1320
    %1385 = vst [vmem:[%s4 + $0x1e0] sm:$0xff] %v1321
    %1386 = vst [vmem:[%s4 + $0x1e8] sm:$0xff] %v1322
    %1387 = vst [vmem:[%s4 + $0x1f0] sm:$0xff] %v1323
    %1388 = vst [vmem:[%s4 + $0x1f8] sm:$0xff] %v1324
  $region25: #{baseline_model_3layer_forward.11} parent=0 // pred_fallthru
    _
  // Predicated region
  $region26: #{baseline_model_3layer_forward.11} parent=0 // pred_check
    _
  $region27: #{baseline_model_3layer_forward.11} parent=0 // pred_check_branch
    %1390 = sbr.rel (0) target = $region29
  $region28: #{baseline_model_3layer_forward.11} parent=0 // pred_region
    _
  $region29: #{baseline_model_3layer_forward.11} parent=0 // pred_fallthru
    _
  // Predicated region
  $region30: #{baseline_model_3layer_forward.11} parent=0 // pred_check
    _
  $region31: #{baseline_model_3layer_forward.11} parent=0 // pred_check_branch
    %1392 = sbr.rel (0) target = $region33
  $region32: #{baseline_model_3layer_forward.11} parent=0 // pred_region
    _
  $region33: #{baseline_model_3layer_forward.11} parent=0 // pred_fallthru
    _

</llo_original>
